<compile_context>
chip_gen: v6e
topology: v6e:2x2x1
jax: 0.10.0
libtpu: 0.0.40
codegen_flags: <defaults>
</compile_context>

<pallas_src>
import functools

import jax
import jax.numpy as jnp
import numpy as np
from jax.experimental import pallas as pl
from jax.experimental.pallas import tpu as pltpu

EPS = 1e-5  # nn.InstanceNorm2d default eps


def _round_up(x, m):
    return (x + m - 1) // m * m


def _phase_geometry(H, W, KH, KW, s):
    """Static geometry of the s^2 subpixel decomposition."""
    H_out = (H - 1) * s + KH
    W_out = (W - 1) * s + KW
    Hv = [len(range(ph, H_out, s)) for ph in range(s)]   # valid rows per h-phase
    Wv = [len(range(pw, W_out, s)) for pw in range(s)]   # valid cols per w-phase
    phases = []
    for ph in range(s):
        for pw in range(s):
            if Hv[ph] == 0 or Wv[pw] == 0:
                continue
            # kernel taps (kh, kw) contributing to this output phase
            taps = [(kh * KW + kw, kh // s, kw // s)
                    for kh in range(KH) for kw in range(KW)
                    if kh % s == ph and kw % s == pw]
            phases.append(dict(ph=ph, pw=pw, hv=Hv[ph], wv=Wv[pw],
                               lp=Hv[ph] * Wv[pw], taps=taps))
    return H_out, W_out, phases


def _make_kernel(C_out, H, W, phases, LP, hwo_valid):
    inv_n = 1.0 / float(hwo_valid)

    def kernel(x_ref, w_ref, b_ref, o_ref, *acc_refs):
        # x_ref : (1, C_in_pad, H*W)  bf16     w_ref : (K*K*C_out, C_in_pad) bf16
        # b_ref : (C_out, 1) f32               o_ref : (1, n_phases, C_out, LP)
        # acc_refs[p] : VMEM (C_out, LP) f32 scratch, one per output phase.

        # One MXU GEMM gives every kernel-tap product (f32 accumulation):
        #   P[t*C_out + co, ih*W + iw] = sum_ci weight[ci, co, kh, kw] * x[ci, ih, iw]
        P = jnp.dot(w_ref[...], x_ref[0], preferred_element_type=jnp.float32)
        b = b_ref[...]                                           # (C_out, 1) f32

        # col2im: accumulate taps into per-phase slabs (static slice adds only,
        # no zero-FLOPs, no lane-strided scatter).
        for p, info in enumerate(phases):
            acc = acc_refs[p]
            acc[...] = jnp.zeros_like(acc)
            wv = info["wv"]
            for (t, dh, dw) in info["taps"]:
                r0 = t * C_out
                if dw == 0 and wv == W:
                    # whole tap lands contiguously in the flattened slab
                    acc[:, pl.ds(dh * wv, H * W)] += P[r0:r0 + C_out, :]
                else:
                    for ih in range(H):
                        off = (dh + ih) * wv + dw
                        acc[:, pl.ds(off, W)] += P[r0:r0 + C_out,
                                                   ih * W:(ih + 1) * W]

        # Bias + single-pass InstanceNorm statistics (sum and sum-of-squares,
        # only over the valid lanes of each phase slab).
        ssum = jnp.zeros((C_out, 1), jnp.float32)
        ssq = jnp.zeros((C_out, 1), jnp.float32)
        yb_list = []
        for p, info in enumerate(phases):
            yb = acc_refs[p][...] + b                            # (C_out, LP)
            yb_list.append(yb)
            ybv = yb[:, :info["lp"]]                             # valid lanes
            ssum = ssum + jnp.sum(ybv, axis=1, keepdims=True)
            ssq = ssq + jnp.sum(ybv * ybv, axis=1, keepdims=True)
        mean = ssum * inv_n
        var = jnp.maximum(ssq * inv_n - mean * mean, 0.0)        # biased variance
        scale = jax.lax.rsqrt(var + EPS)

        # Normalize + ReLU, full-width lane-dense stores (pad lanes are sliced
        # off by the wrapper, their values are irrelevant).
        for p in range(len(phases)):
            yn = jnp.maximum((yb_list[p] - mean) * scale, 0.0)
            o_ref[0, p] = yn.astype(o_ref.dtype)

    return kernel


@functools.partial(jax.jit, static_argnums=(3,))
def conv_transpose_layer(x, weight, bias, stride):
    """x: (N, C_in, H, W); weight: (C_in, C_out, K, K) [PyTorch ConvTranspose2d];
    bias: (C_out,). Returns ReLU(InstanceNorm2d(ConvTranspose2d(x)))."""
    N, C_in, H, W = x.shape
    _, C_out, KH, KW = weight.shape
    s = stride
    H_out, W_out, phases = _phase_geometry(H, W, KH, KW, s)
    n_ph = len(phases)
    LP = _round_up(max(info["lp"] for info in phases), 128)       # lane-dense slabs
    C_inp = _round_up(C_in, 8)                                    # aligned contraction
    HW = H * W

    # ---- layout-only glue (no FLOPs, no expanded arrays in HBM) ----
    x2 = x.reshape(N, C_in, HW)
    if C_inp != C_in:
        x2 = jnp.pad(x2, ((0, 0), (0, C_inp - C_in), (0, 0)))
    x2 = x2.astype(jnp.bfloat16)                                  # bf16 MXU feed
    # Direct scatter form of ConvTranspose2d uses the *unflipped* taps:
    # weight (C_in, C_out, K, K) -> (K*K*C_out, C_in_pad)
    w_mat = jnp.transpose(weight, (2, 3, 1, 0)).reshape(KH * KW * C_out, C_in)
    if C_inp != C_in:
        w_mat = jnp.pad(w_mat, ((0, 0), (0, C_inp - C_in)))
    w_mat = w_mat.astype(jnp.bfloat16)
    b_mat = bias.reshape(C_out, 1).astype(jnp.float32)

    kernel = _make_kernel(C_out, H, W, phases, LP, H_out * W_out)

    out_ph = pl.pallas_call(
        kernel,
        out_shape=jax.ShapeDtypeStruct((N, n_ph, C_out, LP), x.dtype),
        grid=(N,),
        in_specs=[
            pl.BlockSpec((1, C_inp, HW), lambda n: (n, 0, 0)),
            pl.BlockSpec((KH * KW * C_out, C_inp), lambda n: (0, 0)),
            pl.BlockSpec((C_out, 1), lambda n: (0, 0)),
        ],
        out_specs=pl.BlockSpec((1, n_ph, C_out, LP), lambda n: (n, 0, 0, 0)),
        scratch_shapes=[pltpu.VMEM((C_out, LP), jnp.float32) for _ in phases],
        compiler_params=pltpu.CompilerParams(
            dimension_semantics=("parallel",)),
    )(x2, w_mat, b_mat)

    # Phase -> NCHW interleave: pure layout plumbing on the (small) output.
    out = jnp.zeros((N, C_out, H_out, W_out), x.dtype)
    for p, info in enumerate(phases):
        hv, wv = info["hv"], info["wv"]
        slab = out_ph[:, p, :, :hv * wv].reshape(N, C_out, hv, wv)
        out = out.at[:, :, info["ph"]::s, info["pw"]::s].set(slab)
    return out


def _numpy_reference(x, weight, bias, stride):
    """Direct scatter-style ConvTranspose2d + InstanceNorm2d + ReLU reference."""
    N, C_in, H, W = x.shape
    _, C_out, KH, KW = weight.shape
    s = stride
    H_out = (H - 1) * s + KH
    W_out = (W - 1) * s + KW
    y = np.zeros((N, C_out, H_out, W_out), np.float32)
    for ih in range(H):
        for iw in range(W):
            y[:, :, ih * s:ih * s + KH, iw * s:iw * s + KW] += np.einsum(
                "ni,iokl->nokl", x[:, :, ih, iw], weight)
    y += bias[None, :, None, None]
    mean = y.mean(axis=(2, 3), keepdims=True)
    var = y.var(axis=(2, 3), keepdims=True)  # biased variance, like InstanceNorm2d
    y = (y - mean) / np.sqrt(var + EPS)
    return np.maximum(y, 0.0)


if __name__ == "__main__":
    # Small shapes consistent with the module's forward.
    N, C_in, C_out, K, S, H, W = 2, 4, 8, 3, 2, 16, 16

    key = jax.random.PRNGKey(0)
    kx, kw, kb = jax.random.split(key, 3)
    x = jax.random.normal(kx, (N, C_in, H, W), jnp.float32)

    # Deterministic parameter init (shapes match nn.ConvTranspose2d(C_in, C_out, K, S)).
    bound = 1.0 / np.sqrt(C_out * K * K)
    weight = jax.random.uniform(kw, (C_in, C_out, K, K), jnp.float32, -bound, bound)
    bias = jax.random.uniform(kb, (C_out,), jnp.float32, -bound, bound)

    out = conv_transpose_layer(x, weight, bias, S)
    out = jax.block_until_ready(out)

    ref = _numpy_reference(np.asarray(x), np.asarray(weight), np.asarray(bias), S)
    assert out.shape == ref.shape, (out.shape, ref.shape)
    np.testing.assert_allclose(np.asarray(out), ref, rtol=2e-2, atol=2e-2)

    print("KERNEL_OK")
</pallas_src>

<mosaic_0001>
module attributes {stable_mosaic.version = 11 : i64} {
  func.func @kernel(%arg0: i32, %arg1: memref<1x8x256xbf16, #tpu.memory_space<vmem>>, %arg2: memref<72x8xbf16, #tpu.memory_space<vmem>>, %arg3: memref<8x1xf32, #tpu.memory_space<vmem>>, %arg4: memref<1x4x8x384xf32, #tpu.memory_space<vmem>>, %arg5: memref<8x384xf32, #tpu.memory_space<vmem>>, %arg6: memref<8x384xf32, #tpu.memory_space<vmem>>, %arg7: memref<8x384xf32, #tpu.memory_space<vmem>>, %arg8: memref<8x384xf32, #tpu.memory_space<vmem>>) attributes {dimension_semantics = [#tpu.dimension_semantics<parallel>], iteration_bounds = array<i64: 2>, scalar_prefetch = 0 : i64, scratch_operands = 4 : i64, tpu.core_type = #tpu.core_type<tc>, window_params = [{transform_indices = @transform_0, window_bounds = array<i64: 1, 8, 256>}, {pipeline_mode = #tpu.pipeline_mode<synchronous>, transform_indices = @transform_1, window_bounds = array<i64: 72, 8>}, {pipeline_mode = #tpu.pipeline_mode<synchronous>, transform_indices = @transform_2, window_bounds = array<i64: 8, 1>}, {transform_indices = @transform_3, window_bounds = array<i64: 1, 4, 8, 384>}]} {
    %c0 = arith.constant 0 : index
    %c0_0 = arith.constant 0 : index
    %0 = vector.load %arg2[%c0, %c0_0] : memref<72x8xbf16, #tpu.memory_space<vmem>>, vector<72x8xbf16>
    %c0_1 = arith.constant 0 : index
    %c0_2 = arith.constant 0 : index
    %c0_3 = arith.constant 0 : index
    %1 = vector.load %arg1[%c0_1, %c0_2, %c0_3] : memref<1x8x256xbf16, #tpu.memory_space<vmem>>, vector<1x8x256xbf16>
    %2 = vector.shape_cast %1 : vector<1x8x256xbf16> to vector<8x256xbf16>
    %cst = arith.constant dense<0.000000e+00> : vector<72x256xf32>
    %3 = tpu.matmul %0, %2, %cst {dimension_numbers = #tpu.dot_dimension_numbers<[1], [0], [0], [1], [0, 0, 1, 1], [], []>} : vector<72x8xbf16>, vector<8x256xbf16>, vector<72x256xf32> -> vector<72x256xf32>
    %c0_4 = arith.constant 0 : index
    %c0_5 = arith.constant 0 : index
    %4 = vector.load %arg3[%c0_4, %c0_5] : memref<8x1xf32, #tpu.memory_space<vmem>>, vector<8x1xf32>
    %cst_6 = arith.constant 0.000000e+00 : f32
    %5 = vector.broadcast %cst_6 : f32 to vector<8x384xf32>
    %c0_7 = arith.constant 0 : index
    %c0_8 = arith.constant 0 : index
    %6 = vector.load %arg5[%c0_7, %c0_8] : memref<8x384xf32, #tpu.memory_space<vmem>>, vector<8x384xf32>
    tpu.vector_store %arg5[%c0_7, %c0_8], %5 {strides = array<i32>} : memref<8x384xf32, #tpu.memory_space<vmem>>, vector<8x384xf32>,
    %c0_9 = arith.constant 0 : index
    %c0_10 = arith.constant 0 : index
    %7 = vector.load %arg5[%c0_9, %c0_10] : memref<8x384xf32, #tpu.memory_space<vmem>>, vector<8x16xf32>
    %8 = vector.extract_strided_slice %3 {offsets = [0, 0], sizes = [8, 16], strides = [1, 1]} : vector<72x256xf32> to vector<8x16xf32>
    %9 = arith.addf %7, %8 : vector<8x16xf32>
    %c0_11 = arith.constant 0 : index
    %c0_12 = arith.constant 0 : index
    %10 = vector.load %arg5[%c0_11, %c0_12] : memref<8x384xf32, #tpu.memory_space<vmem>>, vector<8x16xf32>
    tpu.vector_store %arg5[%c0_11, %c0_12], %9 {strides = array<i32>} : memref<8x384xf32, #tpu.memory_space<vmem>>, vector<8x16xf32>,
    %c0_13 = arith.constant 0 : index
    %c17 = arith.constant 17 : index
    %11 = vector.load %arg5[%c0_13, %c17] : memref<8x384xf32, #tpu.memory_space<vmem>>, vector<8x16xf32>
    %12 = vector.extract_strided_slice %3 {offsets = [0, 16], sizes = [8, 16], strides = [1, 1]} : vector<72x256xf32> to vector<8x16xf32>
    %13 = arith.addf %11, %12 : vector<8x16xf32>
    %c0_14 = arith.constant 0 : index
    %c17_15 = arith.constant 17 : index
    %14 = vector.load %arg5[%c0_14, %c17_15] : memref<8x384xf32, #tpu.memory_space<vmem>>, vector<8x16xf32>
    tpu.vector_store %arg5[%c0_14, %c17_15], %13 {strides = array<i32>} : memref<8x384xf32, #tpu.memory_space<vmem>>, vector<8x16xf32>,
    %c0_16 = arith.constant 0 : index
    %c34 = arith.constant 34 : index
    %15 = vector.load %arg5[%c0_16, %c34] : memref<8x384xf32, #tpu.memory_space<vmem>>, vector<8x16xf32>
    %16 = vector.extract_strided_slice %3 {offsets = [0, 32], sizes = [8, 16], strides = [1, 1]} : vector<72x256xf32> to vector<8x16xf32>
    %17 = arith.addf %15, %16 : vector<8x16xf32>
    %c0_17 = arith.constant 0 : index
    %c34_18 = arith.constant 34 : index
    %18 = vector.load %arg5[%c0_17, %c34_18] : memref<8x384xf32, #tpu.memory_space<vmem>>, vector<8x16xf32>
    tpu.vector_store %arg5[%c0_17, %c34_18], %17 {strides = array<i32>} : memref<8x384xf32, #tpu.memory_space<vmem>>, vector<8x16xf32>,
    %c0_19 = arith.constant 0 : index
    %c51 = arith.constant 51 : index
    %19 = vector.load %arg5[%c0_19, %c51] : memref<8x384xf32, #tpu.memory_space<vmem>>, vector<8x16xf32>
    %20 = vector.extract_strided_slice %3 {offsets = [0, 48], sizes = [8, 16], strides = [1, 1]} : vector<72x256xf32> to vector<8x16xf32>
    %21 = arith.addf %19, %20 : vector<8x16xf32>
    %c0_20 = arith.constant 0 : index
    %c51_21 = arith.constant 51 : index
    %22 = vector.load %arg5[%c0_20, %c51_21] : memref<8x384xf32, #tpu.memory_space<vmem>>, vector<8x16xf32>
    tpu.vector_store %arg5[%c0_20, %c51_21], %21 {strides = array<i32>} : memref<8x384xf32, #tpu.memory_space<vmem>>, vector<8x16xf32>,
    %c0_22 = arith.constant 0 : index
    %c68 = arith.constant 68 : index
    %23 = vector.load %arg5[%c0_22, %c68] : memref<8x384xf32, #tpu.memory_space<vmem>>, vector<8x16xf32>
    %24 = vector.extract_strided_slice %3 {offsets = [0, 64], sizes = [8, 16], strides = [1, 1]} : vector<72x256xf32> to vector<8x16xf32>
    %25 = arith.addf %23, %24 : vector<8x16xf32>
    %c0_23 = arith.constant 0 : index
    %c68_24 = arith.constant 68 : index
    %26 = vector.load %arg5[%c0_23, %c68_24] : memref<8x384xf32, #tpu.memory_space<vmem>>, vector<8x16xf32>
    tpu.vector_store %arg5[%c0_23, %c68_24], %25 {strides = array<i32>} : memref<8x384xf32, #tpu.memory_space<vmem>>, vector<8x16xf32>,
    %c0_25 = arith.constant 0 : index
    %c85 = arith.constant 85 : index
    %27 = vector.load %arg5[%c0_25, %c85] : memref<8x384xf32, #tpu.memory_space<vmem>>, vector<8x16xf32>
    %28 = vector.extract_strided_slice %3 {offsets = [0, 80], sizes = [8, 16], strides = [1, 1]} : vector<72x256xf32> to vector<8x16xf32>
    %29 = arith.addf %27, %28 : vector<8x16xf32>
    %c0_26 = arith.constant 0 : index
    %c85_27 = arith.constant 85 : index
    %30 = vector.load %arg5[%c0_26, %c85_27] : memref<8x384xf32, #tpu.memory_space<vmem>>, vector<8x16xf32>
    tpu.vector_store %arg5[%c0_26, %c85_27], %29 {strides = array<i32>} : memref<8x384xf32, #tpu.memory_space<vmem>>, vector<8x16xf32>,
    %c0_28 = arith.constant 0 : index
    %c102 = arith.constant 102 : index
    %31 = vector.load %arg5[%c0_28, %c102] : memref<8x384xf32, #tpu.memory_space<vmem>>, vector<8x16xf32>
    %32 = vector.extract_strided_slice %3 {offsets = [0, 96], sizes = [8, 16], strides = [1, 1]} : vector<72x256xf32> to vector<8x16xf32>
    %33 = arith.addf %31, %32 : vector<8x16xf32>
    %c0_29 = arith.constant 0 : index
    %c102_30 = arith.constant 102 : index
    %34 = vector.load %arg5[%c0_29, %c102_30] : memref<8x384xf32, #tpu.memory_space<vmem>>, vector<8x16xf32>
    tpu.vector_store %arg5[%c0_29, %c102_30], %33 {strides = array<i32>} : memref<8x384xf32, #tpu.memory_space<vmem>>, vector<8x16xf32>,
    %c0_31 = arith.constant 0 : index
    %c119 = arith.constant 119 : index
    %35 = vector.load %arg5[%c0_31, %c119] : memref<8x384xf32, #tpu.memory_space<vmem>>, vector<8x16xf32>
    %36 = vector.extract_strided_slice %3 {offsets = [0, 112], sizes = [8, 16], strides = [1, 1]} : vector<72x256xf32> to vector<8x16xf32>
    %37 = arith.addf %35, %36 : vector<8x16xf32>
    %c0_32 = arith.constant 0 : index
    %c119_33 = arith.constant 119 : index
    %38 = vector.load %arg5[%c0_32, %c119_33] : memref<8x384xf32, #tpu.memory_space<vmem>>, vector<8x16xf32>
    tpu.vector_store %arg5[%c0_32, %c119_33], %37 {strides = array<i32>} : memref<8x384xf32, #tpu.memory_space<vmem>>, vector<8x16xf32>,
    %c0_34 = arith.constant 0 : index
    %c136 = arith.constant 136 : index
    %39 = vector.load %arg5[%c0_34, %c136] : memref<8x384xf32, #tpu.memory_space<vmem>>, vector<8x16xf32>
    %40 = vector.extract_strided_slice %3 {offsets = [0, 128], sizes = [8, 16], strides = [1, 1]} : vector<72x256xf32> to vector<8x16xf32>
    %41 = arith.addf %39, %40 : vector<8x16xf32>
    %c0_35 = arith.constant 0 : index
    %c136_36 = arith.constant 136 : index
    %42 = vector.load %arg5[%c0_35, %c136_36] : memref<8x384xf32, #tpu.memory_space<vmem>>, vector<8x16xf32>
    tpu.vector_store %arg5[%c0_35, %c136_36], %41 {strides = array<i32>} : memref<8x384xf32, #tpu.memory_space<vmem>>, vector<8x16xf32>,
    %c0_37 = arith.constant 0 : index
    %c153 = arith.constant 153 : index
    %43 = vector.load %arg5[%c0_37, %c153] : memref<8x384xf32, #tpu.memory_space<vmem>>, vector<8x16xf32>
    %44 = vector.extract_strided_slice %3 {offsets = [0, 144], sizes = [8, 16], strides = [1, 1]} : vector<72x256xf32> to vector<8x16xf32>
    %45 = arith.addf %43, %44 : vector<8x16xf32>
    %c0_38 = arith.constant 0 : index
    %c153_39 = arith.constant 153 : index
    %46 = vector.load %arg5[%c0_38, %c153_39] : memref<8x384xf32, #tpu.memory_space<vmem>>, vector<8x16xf32>
    tpu.vector_store %arg5[%c0_38, %c153_39], %45 {strides = array<i32>} : memref<8x384xf32, #tpu.memory_space<vmem>>, vector<8x16xf32>,
    %c0_40 = arith.constant 0 : index
    %c170 = arith.constant 170 : index
    %47 = vector.load %arg5[%c0_40, %c170] : memref<8x384xf32, #tpu.memory_space<vmem>>, vector<8x16xf32>
    %48 = vector.extract_strided_slice %3 {offsets = [0, 160], sizes = [8, 16], strides = [1, 1]} : vector<72x256xf32> to vector<8x16xf32>
    %49 = arith.addf %47, %48 : vector<8x16xf32>
    %c0_41 = arith.constant 0 : index
    %c170_42 = arith.constant 170 : index
    %50 = vector.load %arg5[%c0_41, %c170_42] : memref<8x384xf32, #tpu.memory_space<vmem>>, vector<8x16xf32>
    tpu.vector_store %arg5[%c0_41, %c170_42], %49 {strides = array<i32>} : memref<8x384xf32, #tpu.memory_space<vmem>>, vector<8x16xf32>,
    %c0_43 = arith.constant 0 : index
    %c187 = arith.constant 187 : index
    %51 = vector.load %arg5[%c0_43, %c187] : memref<8x384xf32, #tpu.memory_space<vmem>>, vector<8x16xf32>
    %52 = vector.extract_strided_slice %3 {offsets = [0, 176], sizes = [8, 16], strides = [1, 1]} : vector<72x256xf32> to vector<8x16xf32>
    %53 = arith.addf %51, %52 : vector<8x16xf32>
    %c0_44 = arith.constant 0 : index
    %c187_45 = arith.constant 187 : index
    %54 = vector.load %arg5[%c0_44, %c187_45] : memref<8x384xf32, #tpu.memory_space<vmem>>, vector<8x16xf32>
    tpu.vector_store %arg5[%c0_44, %c187_45], %53 {strides = array<i32>} : memref<8x384xf32, #tpu.memory_space<vmem>>, vector<8x16xf32>,
    %c0_46 = arith.constant 0 : index
    %c204 = arith.constant 204 : index
    %55 = vector.load %arg5[%c0_46, %c204] : memref<8x384xf32, #tpu.memory_space<vmem>>, vector<8x16xf32>
    %56 = vector.extract_strided_slice %3 {offsets = [0, 192], sizes = [8, 16], strides = [1, 1]} : vector<72x256xf32> to vector<8x16xf32>
    %57 = arith.addf %55, %56 : vector<8x16xf32>
    %c0_47 = arith.constant 0 : index
    %c204_48 = arith.constant 204 : index
    %58 = vector.load %arg5[%c0_47, %c204_48] : memref<8x384xf32, #tpu.memory_space<vmem>>, vector<8x16xf32>
    tpu.vector_store %arg5[%c0_47, %c204_48], %57 {strides = array<i32>} : memref<8x384xf32, #tpu.memory_space<vmem>>, vector<8x16xf32>,
    %c0_49 = arith.constant 0 : index
    %c221 = arith.constant 221 : index
    %59 = vector.load %arg5[%c0_49, %c221] : memref<8x384xf32, #tpu.memory_space<vmem>>, vector<8x16xf32>
    %60 = vector.extract_strided_slice %3 {offsets = [0, 208], sizes = [8, 16], strides = [1, 1]} : vector<72x256xf32> to vector<8x16xf32>
    %61 = arith.addf %59, %60 : vector<8x16xf32>
    %c0_50 = arith.constant 0 : index
    %c221_51 = arith.constant 221 : index
    %62 = vector.load %arg5[%c0_50, %c221_51] : memref<8x384xf32, #tpu.memory_space<vmem>>, vector<8x16xf32>
    tpu.vector_store %arg5[%c0_50, %c221_51], %61 {strides = array<i32>} : memref<8x384xf32, #tpu.memory_space<vmem>>, vector<8x16xf32>,
    %c0_52 = arith.constant 0 : index
    %c238 = arith.constant 238 : index
    %63 = vector.load %arg5[%c0_52, %c238] : memref<8x384xf32, #tpu.memory_space<vmem>>, vector<8x16xf32>
    %64 = vector.extract_strided_slice %3 {offsets = [0, 224], sizes = [8, 16], strides = [1, 1]} : vector<72x256xf32> to vector<8x16xf32>
    %65 = arith.addf %63, %64 : vector<8x16xf32>
    %c0_53 = arith.constant 0 : index
    %c238_54 = arith.constant 238 : index
    %66 = vector.load %arg5[%c0_53, %c238_54] : memref<8x384xf32, #tpu.memory_space<vmem>>, vector<8x16xf32>
    tpu.vector_store %arg5[%c0_53, %c238_54], %65 {strides = array<i32>} : memref<8x384xf32, #tpu.memory_space<vmem>>, vector<8x16xf32>,
    %c0_55 = arith.constant 0 : index
    %c255 = arith.constant 255 : index
    %67 = vector.load %arg5[%c0_55, %c255] : memref<8x384xf32, #tpu.memory_space<vmem>>, vector<8x16xf32>
    %68 = vector.extract_strided_slice %3 {offsets = [0, 240], sizes = [8, 16], strides = [1, 1]} : vector<72x256xf32> to vector<8x16xf32>
    %69 = arith.addf %67, %68 : vector<8x16xf32>
    %c0_56 = arith.constant 0 : index
    %c255_57 = arith.constant 255 : index
    %70 = vector.load %arg5[%c0_56, %c255_57] : memref<8x384xf32, #tpu.memory_space<vmem>>, vector<8x16xf32>
    tpu.vector_store %arg5[%c0_56, %c255_57], %69 {strides = array<i32>} : memref<8x384xf32, #tpu.memory_space<vmem>>, vector<8x16xf32>,
    %c0_58 = arith.constant 0 : index
    %c1 = arith.constant 1 : index
    %71 = vector.load %arg5[%c0_58, %c1] : memref<8x384xf32, #tpu.memory_space<vmem>>, vector<8x16xf32>
    %72 = vector.extract_strided_slice %3 {offsets = [16, 0], sizes = [8, 16], strides = [1, 1]} : vector<72x256xf32> to vector<8x16xf32>
    %73 = arith.addf %71, %72 : vector<8x16xf32>
    %c0_59 = arith.constant 0 : index
    %c1_60 = arith.constant 1 : index
    %74 = vector.load %arg5[%c0_59, %c1_60] : memref<8x384xf32, #tpu.memory_space<vmem>>, vector<8x16xf32>
    tpu.vector_store %arg5[%c0_59, %c1_60], %73 {strides = array<i32>} : memref<8x384xf32, #tpu.memory_space<vmem>>, vector<8x16xf32>,
    %c0_61 = arith.constant 0 : index
    %c18 = arith.constant 18 : index
    %75 = vector.load %arg5[%c0_61, %c18] : memref<8x384xf32, #tpu.memory_space<vmem>>, vector<8x16xf32>
    %76 = vector.extract_strided_slice %3 {offsets = [16, 16], sizes = [8, 16], strides = [1, 1]} : vector<72x256xf32> to vector<8x16xf32>
    %77 = arith.addf %75, %76 : vector<8x16xf32>
    %c0_62 = arith.constant 0 : index
    %c18_63 = arith.constant 18 : index
    %78 = vector.load %arg5[%c0_62, %c18_63] : memref<8x384xf32, #tpu.memory_space<vmem>>, vector<8x16xf32>
    tpu.vector_store %arg5[%c0_62, %c18_63], %77 {strides = array<i32>} : memref<8x384xf32, #tpu.memory_space<vmem>>, vector<8x16xf32>,
    %c0_64 = arith.constant 0 : index
    %c35 = arith.constant 35 : index
    %79 = vector.load %arg5[%c0_64, %c35] : memref<8x384xf32, #tpu.memory_space<vmem>>, vector<8x16xf32>
    %80 = vector.extract_strided_slice %3 {offsets = [16, 32], sizes = [8, 16], strides = [1, 1]} : vector<72x256xf32> to vector<8x16xf32>
    %81 = arith.addf %79, %80 : vector<8x16xf32>
    %c0_65 = arith.constant 0 : index
    %c35_66 = arith.constant 35 : index
    %82 = vector.load %arg5[%c0_65, %c35_66] : memref<8x384xf32, #tpu.memory_space<vmem>>, vector<8x16xf32>
    tpu.vector_store %arg5[%c0_65, %c35_66], %81 {strides = array<i32>} : memref<8x384xf32, #tpu.memory_space<vmem>>, vector<8x16xf32>,
    %c0_67 = arith.constant 0 : index
    %c52 = arith.constant 52 : index
    %83 = vector.load %arg5[%c0_67, %c52] : memref<8x384xf32, #tpu.memory_space<vmem>>, vector<8x16xf32>
    %84 = vector.extract_strided_slice %3 {offsets = [16, 48], sizes = [8, 16], strides = [1, 1]} : vector<72x256xf32> to vector<8x16xf32>
    %85 = arith.addf %83, %84 : vector<8x16xf32>
    %c0_68 = arith.constant 0 : index
    %c52_69 = arith.constant 52 : index
    %86 = vector.load %arg5[%c0_68, %c52_69] : memref<8x384xf32, #tpu.memory_space<vmem>>, vector<8x16xf32>
    tpu.vector_store %arg5[%c0_68, %c52_69], %85 {strides = array<i32>} : memref<8x384xf32, #tpu.memory_space<vmem>>, vector<8x16xf32>,
    %c0_70 = arith.constant 0 : index
    %c69 = arith.constant 69 : index
    %87 = vector.load %arg5[%c0_70, %c69] : memref<8x384xf32, #tpu.memory_space<vmem>>, vector<8x16xf32>
    %88 = vector.extract_strided_slice %3 {offsets = [16, 64], sizes = [8, 16], strides = [1, 1]} : vector<72x256xf32> to vector<8x16xf32>
    %89 = arith.addf %87, %88 : vector<8x16xf32>
    %c0_71 = arith.constant 0 : index
    %c69_72 = arith.constant 69 : index
    %90 = vector.load %arg5[%c0_71, %c69_72] : memref<8x384xf32, #tpu.memory_space<vmem>>, vector<8x16xf32>
    tpu.vector_store %arg5[%c0_71, %c69_72], %89 {strides = array<i32>} : memref<8x384xf32, #tpu.memory_space<vmem>>, vector<8x16xf32>,
    %c0_73 = arith.constant 0 : index
    %c86 = arith.constant 86 : index
    %91 = vector.load %arg5[%c0_73, %c86] : memref<8x384xf32, #tpu.memory_space<vmem>>, vector<8x16xf32>
    %92 = vector.extract_strided_slice %3 {offsets = [16, 80], sizes = [8, 16], strides = [1, 1]} : vector<72x256xf32> to vector<8x16xf32>
    %93 = arith.addf %91, %92 : vector<8x16xf32>
    %c0_74 = arith.constant 0 : index
    %c86_75 = arith.constant 86 : index
    %94 = vector.load %arg5[%c0_74, %c86_75] : memref<8x384xf32, #tpu.memory_space<vmem>>, vector<8x16xf32>
    tpu.vector_store %arg5[%c0_74, %c86_75], %93 {strides = array<i32>} : memref<8x384xf32, #tpu.memory_space<vmem>>, vector<8x16xf32>,
    %c0_76 = arith.constant 0 : index
    %c103 = arith.constant 103 : index
    %95 = vector.load %arg5[%c0_76, %c103] : memref<8x384xf32, #tpu.memory_space<vmem>>, vector<8x16xf32>
    %96 = vector.extract_strided_slice %3 {offsets = [16, 96], sizes = [8, 16], strides = [1, 1]} : vector<72x256xf32> to vector<8x16xf32>
    %97 = arith.addf %95, %96 : vector<8x16xf32>
    %c0_77 = arith.constant 0 : index
    %c103_78 = arith.constant 103 : index
    %98 = vector.load %arg5[%c0_77, %c103_78] : memref<8x384xf32, #tpu.memory_space<vmem>>, vector<8x16xf32>
    tpu.vector_store %arg5[%c0_77, %c103_78], %97 {strides = array<i32>} : memref<8x384xf32, #tpu.memory_space<vmem>>, vector<8x16xf32>,
    %c0_79 = arith.constant 0 : index
    %c120 = arith.constant 120 : index
    %99 = vector.load %arg5[%c0_79, %c120] : memref<8x384xf32, #tpu.memory_space<vmem>>, vector<8x16xf32>
    %100 = vector.extract_strided_slice %3 {offsets = [16, 112], sizes = [8, 16], strides = [1, 1]} : vector<72x256xf32> to vector<8x16xf32>
    %101 = arith.addf %99, %100 : vector<8x16xf32>
    %c0_80 = arith.constant 0 : index
    %c120_81 = arith.constant 120 : index
    %102 = vector.load %arg5[%c0_80, %c120_81] : memref<8x384xf32, #tpu.memory_space<vmem>>, vector<8x16xf32>
    tpu.vector_store %arg5[%c0_80, %c120_81], %101 {strides = array<i32>} : memref<8x384xf32, #tpu.memory_space<vmem>>, vector<8x16xf32>,
    %c0_82 = arith.constant 0 : index
    %c137 = arith.constant 137 : index
    %103 = vector.load %arg5[%c0_82, %c137] : memref<8x384xf32, #tpu.memory_space<vmem>>, vector<8x16xf32>
    %104 = vector.extract_strided_slice %3 {offsets = [16, 128], sizes = [8, 16], strides = [1, 1]} : vector<72x256xf32> to vector<8x16xf32>
    %105 = arith.addf %103, %104 : vector<8x16xf32>
    %c0_83 = arith.constant 0 : index
    %c137_84 = arith.constant 137 : index
    %106 = vector.load %arg5[%c0_83, %c137_84] : memref<8x384xf32, #tpu.memory_space<vmem>>, vector<8x16xf32>
    tpu.vector_store %arg5[%c0_83, %c137_84], %105 {strides = array<i32>} : memref<8x384xf32, #tpu.memory_space<vmem>>, vector<8x16xf32>,
    %c0_85 = arith.constant 0 : index
    %c154 = arith.constant 154 : index
    %107 = vector.load %arg5[%c0_85, %c154] : memref<8x384xf32, #tpu.memory_space<vmem>>, vector<8x16xf32>
    %108 = vector.extract_strided_slice %3 {offsets = [16, 144], sizes = [8, 16], strides = [1, 1]} : vector<72x256xf32> to vector<8x16xf32>
    %109 = arith.addf %107, %108 : vector<8x16xf32>
    %c0_86 = arith.constant 0 : index
    %c154_87 = arith.constant 154 : index
    %110 = vector.load %arg5[%c0_86, %c154_87] : memref<8x384xf32, #tpu.memory_space<vmem>>, vector<8x16xf32>
    tpu.vector_store %arg5[%c0_86, %c154_87], %109 {strides = array<i32>} : memref<8x384xf32, #tpu.memory_space<vmem>>, vector<8x16xf32>,
    %c0_88 = arith.constant 0 : index
    %c171 = arith.constant 171 : index
    %111 = vector.load %arg5[%c0_88, %c171] : memref<8x384xf32, #tpu.memory_space<vmem>>, vector<8x16xf32>
    %112 = vector.extract_strided_slice %3 {offsets = [16, 160], sizes = [8, 16], strides = [1, 1]} : vector<72x256xf32> to vector<8x16xf32>
    %113 = arith.addf %111, %112 : vector<8x16xf32>
    %c0_89 = arith.constant 0 : index
    %c171_90 = arith.constant 171 : index
    %114 = vector.load %arg5[%c0_89, %c171_90] : memref<8x384xf32, #tpu.memory_space<vmem>>, vector<8x16xf32>
    tpu.vector_store %arg5[%c0_89, %c171_90], %113 {strides = array<i32>} : memref<8x384xf32, #tpu.memory_space<vmem>>, vector<8x16xf32>,
    %c0_91 = arith.constant 0 : index
    %c188 = arith.constant 188 : index
    %115 = vector.load %arg5[%c0_91, %c188] : memref<8x384xf32, #tpu.memory_space<vmem>>, vector<8x16xf32>
    %116 = vector.extract_strided_slice %3 {offsets = [16, 176], sizes = [8, 16], strides = [1, 1]} : vector<72x256xf32> to vector<8x16xf32>
    %117 = arith.addf %115, %116 : vector<8x16xf32>
    %c0_92 = arith.constant 0 : index
    %c188_93 = arith.constant 188 : index
    %118 = vector.load %arg5[%c0_92, %c188_93] : memref<8x384xf32, #tpu.memory_space<vmem>>, vector<8x16xf32>
    tpu.vector_store %arg5[%c0_92, %c188_93], %117 {strides = array<i32>} : memref<8x384xf32, #tpu.memory_space<vmem>>, vector<8x16xf32>,
    %c0_94 = arith.constant 0 : index
    %c205 = arith.constant 205 : index
    %119 = vector.load %arg5[%c0_94, %c205] : memref<8x384xf32, #tpu.memory_space<vmem>>, vector<8x16xf32>
    %120 = vector.extract_strided_slice %3 {offsets = [16, 192], sizes = [8, 16], strides = [1, 1]} : vector<72x256xf32> to vector<8x16xf32>
    %121 = arith.addf %119, %120 : vector<8x16xf32>
    %c0_95 = arith.constant 0 : index
    %c205_96 = arith.constant 205 : index
    %122 = vector.load %arg5[%c0_95, %c205_96] : memref<8x384xf32, #tpu.memory_space<vmem>>, vector<8x16xf32>
    tpu.vector_store %arg5[%c0_95, %c205_96], %121 {strides = array<i32>} : memref<8x384xf32, #tpu.memory_space<vmem>>, vector<8x16xf32>,
    %c0_97 = arith.constant 0 : index
    %c222 = arith.constant 222 : index
    %123 = vector.load %arg5[%c0_97, %c222] : memref<8x384xf32, #tpu.memory_space<vmem>>, vector<8x16xf32>
    %124 = vector.extract_strided_slice %3 {offsets = [16, 208], sizes = [8, 16], strides = [1, 1]} : vector<72x256xf32> to vector<8x16xf32>
    %125 = arith.addf %123, %124 : vector<8x16xf32>
    %c0_98 = arith.constant 0 : index
    %c222_99 = arith.constant 222 : index
    %126 = vector.load %arg5[%c0_98, %c222_99] : memref<8x384xf32, #tpu.memory_space<vmem>>, vector<8x16xf32>
    tpu.vector_store %arg5[%c0_98, %c222_99], %125 {strides = array<i32>} : memref<8x384xf32, #tpu.memory_space<vmem>>, vector<8x16xf32>,
    %c0_100 = arith.constant 0 : index
    %c239 = arith.constant 239 : index
    %127 = vector.load %arg5[%c0_100, %c239] : memref<8x384xf32, #tpu.memory_space<vmem>>, vector<8x16xf32>
    %128 = vector.extract_strided_slice %3 {offsets = [16, 224], sizes = [8, 16], strides = [1, 1]} : vector<72x256xf32> to vector<8x16xf32>
    %129 = arith.addf %127, %128 : vector<8x16xf32>
    %c0_101 = arith.constant 0 : index
    %c239_102 = arith.constant 239 : index
    %130 = vector.load %arg5[%c0_101, %c239_102] : memref<8x384xf32, #tpu.memory_space<vmem>>, vector<8x16xf32>
    tpu.vector_store %arg5[%c0_101, %c239_102], %129 {strides = array<i32>} : memref<8x384xf32, #tpu.memory_space<vmem>>, vector<8x16xf32>,
    %c0_103 = arith.constant 0 : index
    %c256 = arith.constant 256 : index
    %131 = vector.load %arg5[%c0_103, %c256] : memref<8x384xf32, #tpu.memory_space<vmem>>, vector<8x16xf32>
    %132 = vector.extract_strided_slice %3 {offsets = [16, 240], sizes = [8, 16], strides = [1, 1]} : vector<72x256xf32> to vector<8x16xf32>
    %133 = arith.addf %131, %132 : vector<8x16xf32>
    %c0_104 = arith.constant 0 : index
    %c256_105 = arith.constant 256 : index
    %134 = vector.load %arg5[%c0_104, %c256_105] : memref<8x384xf32, #tpu.memory_space<vmem>>, vector<8x16xf32>
    tpu.vector_store %arg5[%c0_104, %c256_105], %133 {strides = array<i32>} : memref<8x384xf32, #tpu.memory_space<vmem>>, vector<8x16xf32>,
    %c0_106 = arith.constant 0 : index
    %c17_107 = arith.constant 17 : index
    %135 = vector.load %arg5[%c0_106, %c17_107] : memref<8x384xf32, #tpu.memory_space<vmem>>, vector<8x16xf32>
    %136 = vector.extract_strided_slice %3 {offsets = [48, 0], sizes = [8, 16], strides = [1, 1]} : vector<72x256xf32> to vector<8x16xf32>
    %137 = arith.addf %135, %136 : vector<8x16xf32>
    %c0_108 = arith.constant 0 : index
    %c17_109 = arith.constant 17 : index
    %138 = vector.load %arg5[%c0_108, %c17_109] : memref<8x384xf32, #tpu.memory_space<vmem>>, vector<8x16xf32>
    tpu.vector_store %arg5[%c0_108, %c17_109], %137 {strides = array<i32>} : memref<8x384xf32, #tpu.memory_space<vmem>>, vector<8x16xf32>,
    %c0_110 = arith.constant 0 : index
    %c34_111 = arith.constant 34 : index
    %139 = vector.load %arg5[%c0_110, %c34_111] : memref<8x384xf32, #tpu.memory_space<vmem>>, vector<8x16xf32>
    %140 = vector.extract_strided_slice %3 {offsets = [48, 16], sizes = [8, 16], strides = [1, 1]} : vector<72x256xf32> to vector<8x16xf32>
    %141 = arith.addf %139, %140 : vector<8x16xf32>
    %c0_112 = arith.constant 0 : index
    %c34_113 = arith.constant 34 : index
    %142 = vector.load %arg5[%c0_112, %c34_113] : memref<8x384xf32, #tpu.memory_space<vmem>>, vector<8x16xf32>
    tpu.vector_store %arg5[%c0_112, %c34_113], %141 {strides = array<i32>} : memref<8x384xf32, #tpu.memory_space<vmem>>, vector<8x16xf32>,
    %c0_114 = arith.constant 0 : index
    %c51_115 = arith.constant 51 : index
    %143 = vector.load %arg5[%c0_114, %c51_115] : memref<8x384xf32, #tpu.memory_space<vmem>>, vector<8x16xf32>
    %144 = vector.extract_strided_slice %3 {offsets = [48, 32], sizes = [8, 16], strides = [1, 1]} : vector<72x256xf32> to vector<8x16xf32>
    %145 = arith.addf %143, %144 : vector<8x16xf32>
    %c0_116 = arith.constant 0 : index
    %c51_117 = arith.constant 51 : index
    %146 = vector.load %arg5[%c0_116, %c51_117] : memref<8x384xf32, #tpu.memory_space<vmem>>, vector<8x16xf32>
    tpu.vector_store %arg5[%c0_116, %c51_117], %145 {strides = array<i32>} : memref<8x384xf32, #tpu.memory_space<vmem>>, vector<8x16xf32>,
    %c0_118 = arith.constant 0 : index
    %c68_119 = arith.constant 68 : index
    %147 = vector.load %arg5[%c0_118, %c68_119] : memref<8x384xf32, #tpu.memory_space<vmem>>, vector<8x16xf32>
    %148 = vector.extract_strided_slice %3 {offsets = [48, 48], sizes = [8, 16], strides = [1, 1]} : vector<72x256xf32> to vector<8x16xf32>
    %149 = arith.addf %147, %148 : vector<8x16xf32>
    %c0_120 = arith.constant 0 : index
    %c68_121 = arith.constant 68 : index
    %150 = vector.load %arg5[%c0_120, %c68_121] : memref<8x384xf32, #tpu.memory_space<vmem>>, vector<8x16xf32>
    tpu.vector_store %arg5[%c0_120, %c68_121], %149 {strides = array<i32>} : memref<8x384xf32, #tpu.memory_space<vmem>>, vector<8x16xf32>,
    %c0_122 = arith.constant 0 : index
    %c85_123 = arith.constant 85 : index
    %151 = vector.load %arg5[%c0_122, %c85_123] : memref<8x384xf32, #tpu.memory_space<vmem>>, vector<8x16xf32>
    %152 = vector.extract_strided_slice %3 {offsets = [48, 64], sizes = [8, 16], strides = [1, 1]} : vector<72x256xf32> to vector<8x16xf32>
    %153 = arith.addf %151, %152 : vector<8x16xf32>
    %c0_124 = arith.constant 0 : index
    %c85_125 = arith.constant 85 : index
    %154 = vector.load %arg5[%c0_124, %c85_125] : memref<8x384xf32, #tpu.memory_space<vmem>>, vector<8x16xf32>
    tpu.vector_store %arg5[%c0_124, %c85_125], %153 {strides = array<i32>} : memref<8x384xf32, #tpu.memory_space<vmem>>, vector<8x16xf32>,
    %c0_126 = arith.constant 0 : index
    %c102_127 = arith.constant 102 : index
    %155 = vector.load %arg5[%c0_126, %c102_127] : memref<8x384xf32, #tpu.memory_space<vmem>>, vector<8x16xf32>
    %156 = vector.extract_strided_slice %3 {offsets = [48, 80], sizes = [8, 16], strides = [1, 1]} : vector<72x256xf32> to vector<8x16xf32>
    %157 = arith.addf %155, %156 : vector<8x16xf32>
    %c0_128 = arith.constant 0 : index
    %c102_129 = arith.constant 102 : index
    %158 = vector.load %arg5[%c0_128, %c102_129] : memref<8x384xf32, #tpu.memory_space<vmem>>, vector<8x16xf32>
    tpu.vector_store %arg5[%c0_128, %c102_129], %157 {strides = array<i32>} : memref<8x384xf32, #tpu.memory_space<vmem>>, vector<8x16xf32>,
    %c0_130 = arith.constant 0 : index
    %c119_131 = arith.constant 119 : index
    %159 = vector.load %arg5[%c0_130, %c119_131] : memref<8x384xf32, #tpu.memory_space<vmem>>, vector<8x16xf32>
    %160 = vector.extract_strided_slice %3 {offsets = [48, 96], sizes = [8, 16], strides = [1, 1]} : vector<72x256xf32> to vector<8x16xf32>
    %161 = arith.addf %159, %160 : vector<8x16xf32>
    %c0_132 = arith.constant 0 : index
    %c119_133 = arith.constant 119 : index
    %162 = vector.load %arg5[%c0_132, %c119_133] : memref<8x384xf32, #tpu.memory_space<vmem>>, vector<8x16xf32>
    tpu.vector_store %arg5[%c0_132, %c119_133], %161 {strides = array<i32>} : memref<8x384xf32, #tpu.memory_space<vmem>>, vector<8x16xf32>,
    %c0_134 = arith.constant 0 : index
    %c136_135 = arith.constant 136 : index
    %163 = vector.load %arg5[%c0_134, %c136_135] : memref<8x384xf32, #tpu.memory_space<vmem>>, vector<8x16xf32>
    %164 = vector.extract_strided_slice %3 {offsets = [48, 112], sizes = [8, 16], strides = [1, 1]} : vector<72x256xf32> to vector<8x16xf32>
    %165 = arith.addf %163, %164 : vector<8x16xf32>
    %c0_136 = arith.constant 0 : index
    %c136_137 = arith.constant 136 : index
    %166 = vector.load %arg5[%c0_136, %c136_137] : memref<8x384xf32, #tpu.memory_space<vmem>>, vector<8x16xf32>
    tpu.vector_store %arg5[%c0_136, %c136_137], %165 {strides = array<i32>} : memref<8x384xf32, #tpu.memory_space<vmem>>, vector<8x16xf32>,
    %c0_138 = arith.constant 0 : index
    %c153_139 = arith.constant 153 : index
    %167 = vector.load %arg5[%c0_138, %c153_139] : memref<8x384xf32, #tpu.memory_space<vmem>>, vector<8x16xf32>
    %168 = vector.extract_strided_slice %3 {offsets = [48, 128], sizes = [8, 16], strides = [1, 1]} : vector<72x256xf32> to vector<8x16xf32>
    %169 = arith.addf %167, %168 : vector<8x16xf32>
    %c0_140 = arith.constant 0 : index
    %c153_141 = arith.constant 153 : index
    %170 = vector.load %arg5[%c0_140, %c153_141] : memref<8x384xf32, #tpu.memory_space<vmem>>, vector<8x16xf32>
    tpu.vector_store %arg5[%c0_140, %c153_141], %169 {strides = array<i32>} : memref<8x384xf32, #tpu.memory_space<vmem>>, vector<8x16xf32>,
    %c0_142 = arith.constant 0 : index
    %c170_143 = arith.constant 170 : index
    %171 = vector.load %arg5[%c0_142, %c170_143] : memref<8x384xf32, #tpu.memory_space<vmem>>, vector<8x16xf32>
    %172 = vector.extract_strided_slice %3 {offsets = [48, 144], sizes = [8, 16], strides = [1, 1]} : vector<72x256xf32> to vector<8x16xf32>
    %173 = arith.addf %171, %172 : vector<8x16xf32>
    %c0_144 = arith.constant 0 : index
    %c170_145 = arith.constant 170 : index
    %174 = vector.load %arg5[%c0_144, %c170_145] : memref<8x384xf32, #tpu.memory_space<vmem>>, vector<8x16xf32>
    tpu.vector_store %arg5[%c0_144, %c170_145], %173 {strides = array<i32>} : memref<8x384xf32, #tpu.memory_space<vmem>>, vector<8x16xf32>,
    %c0_146 = arith.constant 0 : index
    %c187_147 = arith.constant 187 : index
    %175 = vector.load %arg5[%c0_146, %c187_147] : memref<8x384xf32, #tpu.memory_space<vmem>>, vector<8x16xf32>
    %176 = vector.extract_strided_slice %3 {offsets = [48, 160], sizes = [8, 16], strides = [1, 1]} : vector<72x256xf32> to vector<8x16xf32>
    %177 = arith.addf %175, %176 : vector<8x16xf32>
    %c0_148 = arith.constant 0 : index
    %c187_149 = arith.constant 187 : index
    %178 = vector.load %arg5[%c0_148, %c187_149] : memref<8x384xf32, #tpu.memory_space<vmem>>, vector<8x16xf32>
    tpu.vector_store %arg5[%c0_148, %c187_149], %177 {strides = array<i32>} : memref<8x384xf32, #tpu.memory_space<vmem>>, vector<8x16xf32>,
    %c0_150 = arith.constant 0 : index
    %c204_151 = arith.constant 204 : index
    %179 = vector.load %arg5[%c0_150, %c204_151] : memref<8x384xf32, #tpu.memory_space<vmem>>, vector<8x16xf32>
    %180 = vector.extract_strided_slice %3 {offsets = [48, 176], sizes = [8, 16], strides = [1, 1]} : vector<72x256xf32> to vector<8x16xf32>
    %181 = arith.addf %179, %180 : vector<8x16xf32>
    %c0_152 = arith.constant 0 : index
    %c204_153 = arith.constant 204 : index
    %182 = vector.load %arg5[%c0_152, %c204_153] : memref<8x384xf32, #tpu.memory_space<vmem>>, vector<8x16xf32>
    tpu.vector_store %arg5[%c0_152, %c204_153], %181 {strides = array<i32>} : memref<8x384xf32, #tpu.memory_space<vmem>>, vector<8x16xf32>,
    %c0_154 = arith.constant 0 : index
    %c221_155 = arith.constant 221 : index
    %183 = vector.load %arg5[%c0_154, %c221_155] : memref<8x384xf32, #tpu.memory_space<vmem>>, vector<8x16xf32>
    %184 = vector.extract_strided_slice %3 {offsets = [48, 192], sizes = [8, 16], strides = [1, 1]} : vector<72x256xf32> to vector<8x16xf32>
    %185 = arith.addf %183, %184 : vector<8x16xf32>
    %c0_156 = arith.constant 0 : index
    %c221_157 = arith.constant 221 : index
    %186 = vector.load %arg5[%c0_156, %c221_157] : memref<8x384xf32, #tpu.memory_space<vmem>>, vector<8x16xf32>
    tpu.vector_store %arg5[%c0_156, %c221_157], %185 {strides = array<i32>} : memref<8x384xf32, #tpu.memory_space<vmem>>, vector<8x16xf32>,
    %c0_158 = arith.constant 0 : index
    %c238_159 = arith.constant 238 : index
    %187 = vector.load %arg5[%c0_158, %c238_159] : memref<8x384xf32, #tpu.memory_space<vmem>>, vector<8x16xf32>
    %188 = vector.extract_strided_slice %3 {offsets = [48, 208], sizes = [8, 16], strides = [1, 1]} : vector<72x256xf32> to vector<8x16xf32>
    %189 = arith.addf %187, %188 : vector<8x16xf32>
    %c0_160 = arith.constant 0 : index
    %c238_161 = arith.constant 238 : index
    %190 = vector.load %arg5[%c0_160, %c238_161] : memref<8x384xf32, #tpu.memory_space<vmem>>, vector<8x16xf32>
    tpu.vector_store %arg5[%c0_160, %c238_161], %189 {strides = array<i32>} : memref<8x384xf32, #tpu.memory_space<vmem>>, vector<8x16xf32>,
    %c0_162 = arith.constant 0 : index
    %c255_163 = arith.constant 255 : index
    %191 = vector.load %arg5[%c0_162, %c255_163] : memref<8x384xf32, #tpu.memory_space<vmem>>, vector<8x16xf32>
    %192 = vector.extract_strided_slice %3 {offsets = [48, 224], sizes = [8, 16], strides = [1, 1]} : vector<72x256xf32> to vector<8x16xf32>
    %193 = arith.addf %191, %192 : vector<8x16xf32>
    %c0_164 = arith.constant 0 : index
    %c255_165 = arith.constant 255 : index
    %194 = vector.load %arg5[%c0_164, %c255_165] : memref<8x384xf32, #tpu.memory_space<vmem>>, vector<8x16xf32>
    tpu.vector_store %arg5[%c0_164, %c255_165], %193 {strides = array<i32>} : memref<8x384xf32, #tpu.memory_space<vmem>>, vector<8x16xf32>,
    %c0_166 = arith.constant 0 : index
    %c272 = arith.constant 272 : index
    %195 = vector.load %arg5[%c0_166, %c272] : memref<8x384xf32, #tpu.memory_space<vmem>>, vector<8x16xf32>
    %196 = vector.extract_strided_slice %3 {offsets = [48, 240], sizes = [8, 16], strides = [1, 1]} : vector<72x256xf32> to vector<8x16xf32>
    %197 = arith.addf %195, %196 : vector<8x16xf32>
    %c0_167 = arith.constant 0 : index
    %c272_168 = arith.constant 272 : index
    %198 = vector.load %arg5[%c0_167, %c272_168] : memref<8x384xf32, #tpu.memory_space<vmem>>, vector<8x16xf32>
    tpu.vector_store %arg5[%c0_167, %c272_168], %197 {strides = array<i32>} : memref<8x384xf32, #tpu.memory_space<vmem>>, vector<8x16xf32>,
    %c0_169 = arith.constant 0 : index
    %c18_170 = arith.constant 18 : index
    %199 = vector.load %arg5[%c0_169, %c18_170] : memref<8x384xf32, #tpu.memory_space<vmem>>, vector<8x16xf32>
    %200 = vector.extract_strided_slice %3 {offsets = [64, 0], sizes = [8, 16], strides = [1, 1]} : vector<72x256xf32> to vector<8x16xf32>
    %201 = arith.addf %199, %200 : vector<8x16xf32>
    %c0_171 = arith.constant 0 : index
    %c18_172 = arith.constant 18 : index
    %202 = vector.load %arg5[%c0_171, %c18_172] : memref<8x384xf32, #tpu.memory_space<vmem>>, vector<8x16xf32>
    tpu.vector_store %arg5[%c0_171, %c18_172], %201 {strides = array<i32>} : memref<8x384xf32, #tpu.memory_space<vmem>>, vector<8x16xf32>,
    %c0_173 = arith.constant 0 : index
    %c35_174 = arith.constant 35 : index
    %203 = vector.load %arg5[%c0_173, %c35_174] : memref<8x384xf32, #tpu.memory_space<vmem>>, vector<8x16xf32>
    %204 = vector.extract_strided_slice %3 {offsets = [64, 16], sizes = [8, 16], strides = [1, 1]} : vector<72x256xf32> to vector<8x16xf32>
    %205 = arith.addf %203, %204 : vector<8x16xf32>
    %c0_175 = arith.constant 0 : index
    %c35_176 = arith.constant 35 : index
    %206 = vector.load %arg5[%c0_175, %c35_176] : memref<8x384xf32, #tpu.memory_space<vmem>>, vector<8x16xf32>
    tpu.vector_store %arg5[%c0_175, %c35_176], %205 {strides = array<i32>} : memref<8x384xf32, #tpu.memory_space<vmem>>, vector<8x16xf32>,
    %c0_177 = arith.constant 0 : index
    %c52_178 = arith.constant 52 : index
    %207 = vector.load %arg5[%c0_177, %c52_178] : memref<8x384xf32, #tpu.memory_space<vmem>>, vector<8x16xf32>
    %208 = vector.extract_strided_slice %3 {offsets = [64, 32], sizes = [8, 16], strides = [1, 1]} : vector<72x256xf32> to vector<8x16xf32>
    %209 = arith.addf %207, %208 : vector<8x16xf32>
    %c0_179 = arith.constant 0 : index
    %c52_180 = arith.constant 52 : index
    %210 = vector.load %arg5[%c0_179, %c52_180] : memref<8x384xf32, #tpu.memory_space<vmem>>, vector<8x16xf32>
    tpu.vector_store %arg5[%c0_179, %c52_180], %209 {strides = array<i32>} : memref<8x384xf32, #tpu.memory_space<vmem>>, vector<8x16xf32>,
    %c0_181 = arith.constant 0 : index
    %c69_182 = arith.constant 69 : index
    %211 = vector.load %arg5[%c0_181, %c69_182] : memref<8x384xf32, #tpu.memory_space<vmem>>, vector<8x16xf32>
    %212 = vector.extract_strided_slice %3 {offsets = [64, 48], sizes = [8, 16], strides = [1, 1]} : vector<72x256xf32> to vector<8x16xf32>
    %213 = arith.addf %211, %212 : vector<8x16xf32>
    %c0_183 = arith.constant 0 : index
    %c69_184 = arith.constant 69 : index
    %214 = vector.load %arg5[%c0_183, %c69_184] : memref<8x384xf32, #tpu.memory_space<vmem>>, vector<8x16xf32>
    tpu.vector_store %arg5[%c0_183, %c69_184], %213 {strides = array<i32>} : memref<8x384xf32, #tpu.memory_space<vmem>>, vector<8x16xf32>,
    %c0_185 = arith.constant 0 : index
    %c86_186 = arith.constant 86 : index
    %215 = vector.load %arg5[%c0_185, %c86_186] : memref<8x384xf32, #tpu.memory_space<vmem>>, vector<8x16xf32>
    %216 = vector.extract_strided_slice %3 {offsets = [64, 64], sizes = [8, 16], strides = [1, 1]} : vector<72x256xf32> to vector<8x16xf32>
    %217 = arith.addf %215, %216 : vector<8x16xf32>
    %c0_187 = arith.constant 0 : index
    %c86_188 = arith.constant 86 : index
    %218 = vector.load %arg5[%c0_187, %c86_188] : memref<8x384xf32, #tpu.memory_space<vmem>>, vector<8x16xf32>
    tpu.vector_store %arg5[%c0_187, %c86_188], %217 {strides = array<i32>} : memref<8x384xf32, #tpu.memory_space<vmem>>, vector<8x16xf32>,
    %c0_189 = arith.constant 0 : index
    %c103_190 = arith.constant 103 : index
    %219 = vector.load %arg5[%c0_189, %c103_190] : memref<8x384xf32, #tpu.memory_space<vmem>>, vector<8x16xf32>
    %220 = vector.extract_strided_slice %3 {offsets = [64, 80], sizes = [8, 16], strides = [1, 1]} : vector<72x256xf32> to vector<8x16xf32>
    %221 = arith.addf %219, %220 : vector<8x16xf32>
    %c0_191 = arith.constant 0 : index
    %c103_192 = arith.constant 103 : index
    %222 = vector.load %arg5[%c0_191, %c103_192] : memref<8x384xf32, #tpu.memory_space<vmem>>, vector<8x16xf32>
    tpu.vector_store %arg5[%c0_191, %c103_192], %221 {strides = array<i32>} : memref<8x384xf32, #tpu.memory_space<vmem>>, vector<8x16xf32>,
    %c0_193 = arith.constant 0 : index
    %c120_194 = arith.constant 120 : index
    %223 = vector.load %arg5[%c0_193, %c120_194] : memref<8x384xf32, #tpu.memory_space<vmem>>, vector<8x16xf32>
    %224 = vector.extract_strided_slice %3 {offsets = [64, 96], sizes = [8, 16], strides = [1, 1]} : vector<72x256xf32> to vector<8x16xf32>
    %225 = arith.addf %223, %224 : vector<8x16xf32>
    %c0_195 = arith.constant 0 : index
    %c120_196 = arith.constant 120 : index
    %226 = vector.load %arg5[%c0_195, %c120_196] : memref<8x384xf32, #tpu.memory_space<vmem>>, vector<8x16xf32>
    tpu.vector_store %arg5[%c0_195, %c120_196], %225 {strides = array<i32>} : memref<8x384xf32, #tpu.memory_space<vmem>>, vector<8x16xf32>,
    %c0_197 = arith.constant 0 : index
    %c137_198 = arith.constant 137 : index
    %227 = vector.load %arg5[%c0_197, %c137_198] : memref<8x384xf32, #tpu.memory_space<vmem>>, vector<8x16xf32>
    %228 = vector.extract_strided_slice %3 {offsets = [64, 112], sizes = [8, 16], strides = [1, 1]} : vector<72x256xf32> to vector<8x16xf32>
    %229 = arith.addf %227, %228 : vector<8x16xf32>
    %c0_199 = arith.constant 0 : index
    %c137_200 = arith.constant 137 : index
    %230 = vector.load %arg5[%c0_199, %c137_200] : memref<8x384xf32, #tpu.memory_space<vmem>>, vector<8x16xf32>
    tpu.vector_store %arg5[%c0_199, %c137_200], %229 {strides = array<i32>} : memref<8x384xf32, #tpu.memory_space<vmem>>, vector<8x16xf32>,
    %c0_201 = arith.constant 0 : index
    %c154_202 = arith.constant 154 : index
    %231 = vector.load %arg5[%c0_201, %c154_202] : memref<8x384xf32, #tpu.memory_space<vmem>>, vector<8x16xf32>
    %232 = vector.extract_strided_slice %3 {offsets = [64, 128], sizes = [8, 16], strides = [1, 1]} : vector<72x256xf32> to vector<8x16xf32>
    %233 = arith.addf %231, %232 : vector<8x16xf32>
    %c0_203 = arith.constant 0 : index
    %c154_204 = arith.constant 154 : index
    %234 = vector.load %arg5[%c0_203, %c154_204] : memref<8x384xf32, #tpu.memory_space<vmem>>, vector<8x16xf32>
    tpu.vector_store %arg5[%c0_203, %c154_204], %233 {strides = array<i32>} : memref<8x384xf32, #tpu.memory_space<vmem>>, vector<8x16xf32>,
    %c0_205 = arith.constant 0 : index
    %c171_206 = arith.constant 171 : index
    %235 = vector.load %arg5[%c0_205, %c171_206] : memref<8x384xf32, #tpu.memory_space<vmem>>, vector<8x16xf32>
    %236 = vector.extract_strided_slice %3 {offsets = [64, 144], sizes = [8, 16], strides = [1, 1]} : vector<72x256xf32> to vector<8x16xf32>
    %237 = arith.addf %235, %236 : vector<8x16xf32>
    %c0_207 = arith.constant 0 : index
    %c171_208 = arith.constant 171 : index
    %238 = vector.load %arg5[%c0_207, %c171_208] : memref<8x384xf32, #tpu.memory_space<vmem>>, vector<8x16xf32>
    tpu.vector_store %arg5[%c0_207, %c171_208], %237 {strides = array<i32>} : memref<8x384xf32, #tpu.memory_space<vmem>>, vector<8x16xf32>,
    %c0_209 = arith.constant 0 : index
    %c188_210 = arith.constant 188 : index
    %239 = vector.load %arg5[%c0_209, %c188_210] : memref<8x384xf32, #tpu.memory_space<vmem>>, vector<8x16xf32>
    %240 = vector.extract_strided_slice %3 {offsets = [64, 160], sizes = [8, 16], strides = [1, 1]} : vector<72x256xf32> to vector<8x16xf32>
    %241 = arith.addf %239, %240 : vector<8x16xf32>
    %c0_211 = arith.constant 0 : index
    %c188_212 = arith.constant 188 : index
    %242 = vector.load %arg5[%c0_211, %c188_212] : memref<8x384xf32, #tpu.memory_space<vmem>>, vector<8x16xf32>
    tpu.vector_store %arg5[%c0_211, %c188_212], %241 {strides = array<i32>} : memref<8x384xf32, #tpu.memory_space<vmem>>, vector<8x16xf32>,
    %c0_213 = arith.constant 0 : index
    %c205_214 = arith.constant 205 : index
    %243 = vector.load %arg5[%c0_213, %c205_214] : memref<8x384xf32, #tpu.memory_space<vmem>>, vector<8x16xf32>
    %244 = vector.extract_strided_slice %3 {offsets = [64, 176], sizes = [8, 16], strides = [1, 1]} : vector<72x256xf32> to vector<8x16xf32>
    %245 = arith.addf %243, %244 : vector<8x16xf32>
    %c0_215 = arith.constant 0 : index
    %c205_216 = arith.constant 205 : index
    %246 = vector.load %arg5[%c0_215, %c205_216] : memref<8x384xf32, #tpu.memory_space<vmem>>, vector<8x16xf32>
    tpu.vector_store %arg5[%c0_215, %c205_216], %245 {strides = array<i32>} : memref<8x384xf32, #tpu.memory_space<vmem>>, vector<8x16xf32>,
    %c0_217 = arith.constant 0 : index
    %c222_218 = arith.constant 222 : index
    %247 = vector.load %arg5[%c0_217, %c222_218] : memref<8x384xf32, #tpu.memory_space<vmem>>, vector<8x16xf32>
    %248 = vector.extract_strided_slice %3 {offsets = [64, 192], sizes = [8, 16], strides = [1, 1]} : vector<72x256xf32> to vector<8x16xf32>
    %249 = arith.addf %247, %248 : vector<8x16xf32>
    %c0_219 = arith.constant 0 : index
    %c222_220 = arith.constant 222 : index
    %250 = vector.load %arg5[%c0_219, %c222_220] : memref<8x384xf32, #tpu.memory_space<vmem>>, vector<8x16xf32>
    tpu.vector_store %arg5[%c0_219, %c222_220], %249 {strides = array<i32>} : memref<8x384xf32, #tpu.memory_space<vmem>>, vector<8x16xf32>,
    %c0_221 = arith.constant 0 : index
    %c239_222 = arith.constant 239 : index
    %251 = vector.load %arg5[%c0_221, %c239_222] : memref<8x384xf32, #tpu.memory_space<vmem>>, vector<8x16xf32>
    %252 = vector.extract_strided_slice %3 {offsets = [64, 208], sizes = [8, 16], strides = [1, 1]} : vector<72x256xf32> to vector<8x16xf32>
    %253 = arith.addf %251, %252 : vector<8x16xf32>
    %c0_223 = arith.constant 0 : index
    %c239_224 = arith.constant 239 : index
    %254 = vector.load %arg5[%c0_223, %c239_224] : memref<8x384xf32, #tpu.memory_space<vmem>>, vector<8x16xf32>
    tpu.vector_store %arg5[%c0_223, %c239_224], %253 {strides = array<i32>} : memref<8x384xf32, #tpu.memory_space<vmem>>, vector<8x16xf32>,
    %c0_225 = arith.constant 0 : index
    %c256_226 = arith.constant 256 : index
    %255 = vector.load %arg5[%c0_225, %c256_226] : memref<8x384xf32, #tpu.memory_space<vmem>>, vector<8x16xf32>
    %256 = vector.extract_strided_slice %3 {offsets = [64, 224], sizes = [8, 16], strides = [1, 1]} : vector<72x256xf32> to vector<8x16xf32>
    %257 = arith.addf %255, %256 : vector<8x16xf32>
    %c0_227 = arith.constant 0 : index
    %c256_228 = arith.constant 256 : index
    %258 = vector.load %arg5[%c0_227, %c256_228] : memref<8x384xf32, #tpu.memory_space<vmem>>, vector<8x16xf32>
    tpu.vector_store %arg5[%c0_227, %c256_228], %257 {strides = array<i32>} : memref<8x384xf32, #tpu.memory_space<vmem>>, vector<8x16xf32>,
    %c0_229 = arith.constant 0 : index
    %c273 = arith.constant 273 : index
    %259 = vector.load %arg5[%c0_229, %c273] : memref<8x384xf32, #tpu.memory_space<vmem>>, vector<8x16xf32>
    %260 = vector.extract_strided_slice %3 {offsets = [64, 240], sizes = [8, 16], strides = [1, 1]} : vector<72x256xf32> to vector<8x16xf32>
    %261 = arith.addf %259, %260 : vector<8x16xf32>
    %c0_230 = arith.constant 0 : index
    %c273_231 = arith.constant 273 : index
    %262 = vector.load %arg5[%c0_230, %c273_231] : memref<8x384xf32, #tpu.memory_space<vmem>>, vector<8x16xf32>
    tpu.vector_store %arg5[%c0_230, %c273_231], %261 {strides = array<i32>} : memref<8x384xf32, #tpu.memory_space<vmem>>, vector<8x16xf32>,
    %cst_232 = arith.constant 0.000000e+00 : f32
    %263 = vector.broadcast %cst_232 : f32 to vector<8x384xf32>
    %c0_233 = arith.constant 0 : index
    %c0_234 = arith.constant 0 : index
    %264 = vector.load %arg6[%c0_233, %c0_234] : memref<8x384xf32, #tpu.memory_space<vmem>>, vector<8x384xf32>
    tpu.vector_store %arg6[%c0_233, %c0_234], %263 {strides = array<i32>} : memref<8x384xf32, #tpu.memory_space<vmem>>, vector<8x384xf32>,
    %c0_235 = arith.constant 0 : index
    %c0_236 = arith.constant 0 : index
    %265 = vector.load %arg6[%c0_235, %c0_236] : memref<8x384xf32, #tpu.memory_space<vmem>>, vector<8x256xf32>
    %266 = vector.extract_strided_slice %3 {offsets = [8, 0], sizes = [8, 256], strides = [1, 1]} : vector<72x256xf32> to vector<8x256xf32>
    %267 = arith.addf %265, %266 : vector<8x256xf32>
    %c0_237 = arith.constant 0 : index
    %c0_238 = arith.constant 0 : index
    %268 = vector.load %arg6[%c0_237, %c0_238] : memref<8x384xf32, #tpu.memory_space<vmem>>, vector<8x256xf32>
    tpu.vector_store %arg6[%c0_237, %c0_238], %267 {strides = array<i32>} : memref<8x384xf32, #tpu.memory_space<vmem>>, vector<8x256xf32>,
    %c0_239 = arith.constant 0 : index
    %c16 = arith.constant 16 : index
    %269 = vector.load %arg6[%c0_239, %c16] : memref<8x384xf32, #tpu.memory_space<vmem>>, vector<8x256xf32>
    %270 = vector.extract_strided_slice %3 {offsets = [56, 0], sizes = [8, 256], strides = [1, 1]} : vector<72x256xf32> to vector<8x256xf32>
    %271 = arith.addf %269, %270 : vector<8x256xf32>
    %c0_240 = arith.constant 0 : index
    %c16_241 = arith.constant 16 : index
    %272 = vector.load %arg6[%c0_240, %c16_241] : memref<8x384xf32, #tpu.memory_space<vmem>>, vector<8x256xf32>
    tpu.vector_store %arg6[%c0_240, %c16_241], %271 {strides = array<i32>} : memref<8x384xf32, #tpu.memory_space<vmem>>, vector<8x256xf32>,
    %cst_242 = arith.constant 0.000000e+00 : f32
    %273 = vector.broadcast %cst_242 : f32 to vector<8x384xf32>
    %c0_243 = arith.constant 0 : index
    %c0_244 = arith.constant 0 : index
    %274 = vector.load %arg7[%c0_243, %c0_244] : memref<8x384xf32, #tpu.memory_space<vmem>>, vector<8x384xf32>
    tpu.vector_store %arg7[%c0_243, %c0_244], %273 {strides = array<i32>} : memref<8x384xf32, #tpu.memory_space<vmem>>, vector<8x384xf32>,
    %c0_245 = arith.constant 0 : index
    %c0_246 = arith.constant 0 : index
    %275 = vector.load %arg7[%c0_245, %c0_246] : memref<8x384xf32, #tpu.memory_space<vmem>>, vector<8x16xf32>
    %276 = vector.extract_strided_slice %3 {offsets = [24, 0], sizes = [8, 16], strides = [1, 1]} : vector<72x256xf32> to vector<8x16xf32>
    %277 = arith.addf %275, %276 : vector<8x16xf32>
    %c0_247 = arith.constant 0 : index
    %c0_248 = arith.constant 0 : index
    %278 = vector.load %arg7[%c0_247, %c0_248] : memref<8x384xf32, #tpu.memory_space<vmem>>, vector<8x16xf32>
    tpu.vector_store %arg7[%c0_247, %c0_248], %277 {strides = array<i32>} : memref<8x384xf32, #tpu.memory_space<vmem>>, vector<8x16xf32>,
    %c0_249 = arith.constant 0 : index
    %c17_250 = arith.constant 17 : index
    %279 = vector.load %arg7[%c0_249, %c17_250] : memref<8x384xf32, #tpu.memory_space<vmem>>, vector<8x16xf32>
    %280 = vector.extract_strided_slice %3 {offsets = [24, 16], sizes = [8, 16], strides = [1, 1]} : vector<72x256xf32> to vector<8x16xf32>
    %281 = arith.addf %279, %280 : vector<8x16xf32>
    %c0_251 = arith.constant 0 : index
    %c17_252 = arith.constant 17 : index
    %282 = vector.load %arg7[%c0_251, %c17_252] : memref<8x384xf32, #tpu.memory_space<vmem>>, vector<8x16xf32>
    tpu.vector_store %arg7[%c0_251, %c17_252], %281 {strides = array<i32>} : memref<8x384xf32, #tpu.memory_space<vmem>>, vector<8x16xf32>,
    %c0_253 = arith.constant 0 : index
    %c34_254 = arith.constant 34 : index
    %283 = vector.load %arg7[%c0_253, %c34_254] : memref<8x384xf32, #tpu.memory_space<vmem>>, vector<8x16xf32>
    %284 = vector.extract_strided_slice %3 {offsets = [24, 32], sizes = [8, 16], strides = [1, 1]} : vector<72x256xf32> to vector<8x16xf32>
    %285 = arith.addf %283, %284 : vector<8x16xf32>
    %c0_255 = arith.constant 0 : index
    %c34_256 = arith.constant 34 : index
    %286 = vector.load %arg7[%c0_255, %c34_256] : memref<8x384xf32, #tpu.memory_space<vmem>>, vector<8x16xf32>
    tpu.vector_store %arg7[%c0_255, %c34_256], %285 {strides = array<i32>} : memref<8x384xf32, #tpu.memory_space<vmem>>, vector<8x16xf32>,
    %c0_257 = arith.constant 0 : index
    %c51_258 = arith.constant 51 : index
    %287 = vector.load %arg7[%c0_257, %c51_258] : memref<8x384xf32, #tpu.memory_space<vmem>>, vector<8x16xf32>
    %288 = vector.extract_strided_slice %3 {offsets = [24, 48], sizes = [8, 16], strides = [1, 1]} : vector<72x256xf32> to vector<8x16xf32>
    %289 = arith.addf %287, %288 : vector<8x16xf32>
    %c0_259 = arith.constant 0 : index
    %c51_260 = arith.constant 51 : index
    %290 = vector.load %arg7[%c0_259, %c51_260] : memref<8x384xf32, #tpu.memory_space<vmem>>, vector<8x16xf32>
    tpu.vector_store %arg7[%c0_259, %c51_260], %289 {strides = array<i32>} : memref<8x384xf32, #tpu.memory_space<vmem>>, vector<8x16xf32>,
    %c0_261 = arith.constant 0 : index
    %c68_262 = arith.constant 68 : index
    %291 = vector.load %arg7[%c0_261, %c68_262] : memref<8x384xf32, #tpu.memory_space<vmem>>, vector<8x16xf32>
    %292 = vector.extract_strided_slice %3 {offsets = [24, 64], sizes = [8, 16], strides = [1, 1]} : vector<72x256xf32> to vector<8x16xf32>
    %293 = arith.addf %291, %292 : vector<8x16xf32>
    %c0_263 = arith.constant 0 : index
    %c68_264 = arith.constant 68 : index
    %294 = vector.load %arg7[%c0_263, %c68_264] : memref<8x384xf32, #tpu.memory_space<vmem>>, vector<8x16xf32>
    tpu.vector_store %arg7[%c0_263, %c68_264], %293 {strides = array<i32>} : memref<8x384xf32, #tpu.memory_space<vmem>>, vector<8x16xf32>,
    %c0_265 = arith.constant 0 : index
    %c85_266 = arith.constant 85 : index
    %295 = vector.load %arg7[%c0_265, %c85_266] : memref<8x384xf32, #tpu.memory_space<vmem>>, vector<8x16xf32>
    %296 = vector.extract_strided_slice %3 {offsets = [24, 80], sizes = [8, 16], strides = [1, 1]} : vector<72x256xf32> to vector<8x16xf32>
    %297 = arith.addf %295, %296 : vector<8x16xf32>
    %c0_267 = arith.constant 0 : index
    %c85_268 = arith.constant 85 : index
    %298 = vector.load %arg7[%c0_267, %c85_268] : memref<8x384xf32, #tpu.memory_space<vmem>>, vector<8x16xf32>
    tpu.vector_store %arg7[%c0_267, %c85_268], %297 {strides = array<i32>} : memref<8x384xf32, #tpu.memory_space<vmem>>, vector<8x16xf32>,
    %c0_269 = arith.constant 0 : index
    %c102_270 = arith.constant 102 : index
    %299 = vector.load %arg7[%c0_269, %c102_270] : memref<8x384xf32, #tpu.memory_space<vmem>>, vector<8x16xf32>
    %300 = vector.extract_strided_slice %3 {offsets = [24, 96], sizes = [8, 16], strides = [1, 1]} : vector<72x256xf32> to vector<8x16xf32>
    %301 = arith.addf %299, %300 : vector<8x16xf32>
    %c0_271 = arith.constant 0 : index
    %c102_272 = arith.constant 102 : index
    %302 = vector.load %arg7[%c0_271, %c102_272] : memref<8x384xf32, #tpu.memory_space<vmem>>, vector<8x16xf32>
    tpu.vector_store %arg7[%c0_271, %c102_272], %301 {strides = array<i32>} : memref<8x384xf32, #tpu.memory_space<vmem>>, vector<8x16xf32>,
    %c0_273 = arith.constant 0 : index
    %c119_274 = arith.constant 119 : index
    %303 = vector.load %arg7[%c0_273, %c119_274] : memref<8x384xf32, #tpu.memory_space<vmem>>, vector<8x16xf32>
    %304 = vector.extract_strided_slice %3 {offsets = [24, 112], sizes = [8, 16], strides = [1, 1]} : vector<72x256xf32> to vector<8x16xf32>
    %305 = arith.addf %303, %304 : vector<8x16xf32>
    %c0_275 = arith.constant 0 : index
    %c119_276 = arith.constant 119 : index
    %306 = vector.load %arg7[%c0_275, %c119_276] : memref<8x384xf32, #tpu.memory_space<vmem>>, vector<8x16xf32>
    tpu.vector_store %arg7[%c0_275, %c119_276], %305 {strides = array<i32>} : memref<8x384xf32, #tpu.memory_space<vmem>>, vector<8x16xf32>,
    %c0_277 = arith.constant 0 : index
    %c136_278 = arith.constant 136 : index
    %307 = vector.load %arg7[%c0_277, %c136_278] : memref<8x384xf32, #tpu.memory_space<vmem>>, vector<8x16xf32>
    %308 = vector.extract_strided_slice %3 {offsets = [24, 128], sizes = [8, 16], strides = [1, 1]} : vector<72x256xf32> to vector<8x16xf32>
    %309 = arith.addf %307, %308 : vector<8x16xf32>
    %c0_279 = arith.constant 0 : index
    %c136_280 = arith.constant 136 : index
    %310 = vector.load %arg7[%c0_279, %c136_280] : memref<8x384xf32, #tpu.memory_space<vmem>>, vector<8x16xf32>
    tpu.vector_store %arg7[%c0_279, %c136_280], %309 {strides = array<i32>} : memref<8x384xf32, #tpu.memory_space<vmem>>, vector<8x16xf32>,
    %c0_281 = arith.constant 0 : index
    %c153_282 = arith.constant 153 : index
    %311 = vector.load %arg7[%c0_281, %c153_282] : memref<8x384xf32, #tpu.memory_space<vmem>>, vector<8x16xf32>
    %312 = vector.extract_strided_slice %3 {offsets = [24, 144], sizes = [8, 16], strides = [1, 1]} : vector<72x256xf32> to vector<8x16xf32>
    %313 = arith.addf %311, %312 : vector<8x16xf32>
    %c0_283 = arith.constant 0 : index
    %c153_284 = arith.constant 153 : index
    %314 = vector.load %arg7[%c0_283, %c153_284] : memref<8x384xf32, #tpu.memory_space<vmem>>, vector<8x16xf32>
    tpu.vector_store %arg7[%c0_283, %c153_284], %313 {strides = array<i32>} : memref<8x384xf32, #tpu.memory_space<vmem>>, vector<8x16xf32>,
    %c0_285 = arith.constant 0 : index
    %c170_286 = arith.constant 170 : index
    %315 = vector.load %arg7[%c0_285, %c170_286] : memref<8x384xf32, #tpu.memory_space<vmem>>, vector<8x16xf32>
    %316 = vector.extract_strided_slice %3 {offsets = [24, 160], sizes = [8, 16], strides = [1, 1]} : vector<72x256xf32> to vector<8x16xf32>
    %317 = arith.addf %315, %316 : vector<8x16xf32>
    %c0_287 = arith.constant 0 : index
    %c170_288 = arith.constant 170 : index
    %318 = vector.load %arg7[%c0_287, %c170_288] : memref<8x384xf32, #tpu.memory_space<vmem>>, vector<8x16xf32>
    tpu.vector_store %arg7[%c0_287, %c170_288], %317 {strides = array<i32>} : memref<8x384xf32, #tpu.memory_space<vmem>>, vector<8x16xf32>,
    %c0_289 = arith.constant 0 : index
    %c187_290 = arith.constant 187 : index
    %319 = vector.load %arg7[%c0_289, %c187_290] : memref<8x384xf32, #tpu.memory_space<vmem>>, vector<8x16xf32>
    %320 = vector.extract_strided_slice %3 {offsets = [24, 176], sizes = [8, 16], strides = [1, 1]} : vector<72x256xf32> to vector<8x16xf32>
    %321 = arith.addf %319, %320 : vector<8x16xf32>
    %c0_291 = arith.constant 0 : index
    %c187_292 = arith.constant 187 : index
    %322 = vector.load %arg7[%c0_291, %c187_292] : memref<8x384xf32, #tpu.memory_space<vmem>>, vector<8x16xf32>
    tpu.vector_store %arg7[%c0_291, %c187_292], %321 {strides = array<i32>} : memref<8x384xf32, #tpu.memory_space<vmem>>, vector<8x16xf32>,
    %c0_293 = arith.constant 0 : index
    %c204_294 = arith.constant 204 : index
    %323 = vector.load %arg7[%c0_293, %c204_294] : memref<8x384xf32, #tpu.memory_space<vmem>>, vector<8x16xf32>
    %324 = vector.extract_strided_slice %3 {offsets = [24, 192], sizes = [8, 16], strides = [1, 1]} : vector<72x256xf32> to vector<8x16xf32>
    %325 = arith.addf %323, %324 : vector<8x16xf32>
    %c0_295 = arith.constant 0 : index
    %c204_296 = arith.constant 204 : index
    %326 = vector.load %arg7[%c0_295, %c204_296] : memref<8x384xf32, #tpu.memory_space<vmem>>, vector<8x16xf32>
    tpu.vector_store %arg7[%c0_295, %c204_296], %325 {strides = array<i32>} : memref<8x384xf32, #tpu.memory_space<vmem>>, vector<8x16xf32>,
    %c0_297 = arith.constant 0 : index
    %c221_298 = arith.constant 221 : index
    %327 = vector.load %arg7[%c0_297, %c221_298] : memref<8x384xf32, #tpu.memory_space<vmem>>, vector<8x16xf32>
    %328 = vector.extract_strided_slice %3 {offsets = [24, 208], sizes = [8, 16], strides = [1, 1]} : vector<72x256xf32> to vector<8x16xf32>
    %329 = arith.addf %327, %328 : vector<8x16xf32>
    %c0_299 = arith.constant 0 : index
    %c221_300 = arith.constant 221 : index
    %330 = vector.load %arg7[%c0_299, %c221_300] : memref<8x384xf32, #tpu.memory_space<vmem>>, vector<8x16xf32>
    tpu.vector_store %arg7[%c0_299, %c221_300], %329 {strides = array<i32>} : memref<8x384xf32, #tpu.memory_space<vmem>>, vector<8x16xf32>,
    %c0_301 = arith.constant 0 : index
    %c238_302 = arith.constant 238 : index
    %331 = vector.load %arg7[%c0_301, %c238_302] : memref<8x384xf32, #tpu.memory_space<vmem>>, vector<8x16xf32>
    %332 = vector.extract_strided_slice %3 {offsets = [24, 224], sizes = [8, 16], strides = [1, 1]} : vector<72x256xf32> to vector<8x16xf32>
    %333 = arith.addf %331, %332 : vector<8x16xf32>
    %c0_303 = arith.constant 0 : index
    %c238_304 = arith.constant 238 : index
    %334 = vector.load %arg7[%c0_303, %c238_304] : memref<8x384xf32, #tpu.memory_space<vmem>>, vector<8x16xf32>
    tpu.vector_store %arg7[%c0_303, %c238_304], %333 {strides = array<i32>} : memref<8x384xf32, #tpu.memory_space<vmem>>, vector<8x16xf32>,
    %c0_305 = arith.constant 0 : index
    %c255_306 = arith.constant 255 : index
    %335 = vector.load %arg7[%c0_305, %c255_306] : memref<8x384xf32, #tpu.memory_space<vmem>>, vector<8x16xf32>
    %336 = vector.extract_strided_slice %3 {offsets = [24, 240], sizes = [8, 16], strides = [1, 1]} : vector<72x256xf32> to vector<8x16xf32>
    %337 = arith.addf %335, %336 : vector<8x16xf32>
    %c0_307 = arith.constant 0 : index
    %c255_308 = arith.constant 255 : index
    %338 = vector.load %arg7[%c0_307, %c255_308] : memref<8x384xf32, #tpu.memory_space<vmem>>, vector<8x16xf32>
    tpu.vector_store %arg7[%c0_307, %c255_308], %337 {strides = array<i32>} : memref<8x384xf32, #tpu.memory_space<vmem>>, vector<8x16xf32>,
    %c0_309 = arith.constant 0 : index
    %c1_310 = arith.constant 1 : index
    %339 = vector.load %arg7[%c0_309, %c1_310] : memref<8x384xf32, #tpu.memory_space<vmem>>, vector<8x16xf32>
    %340 = vector.extract_strided_slice %3 {offsets = [40, 0], sizes = [8, 16], strides = [1, 1]} : vector<72x256xf32> to vector<8x16xf32>
    %341 = arith.addf %339, %340 : vector<8x16xf32>
    %c0_311 = arith.constant 0 : index
    %c1_312 = arith.constant 1 : index
    %342 = vector.load %arg7[%c0_311, %c1_312] : memref<8x384xf32, #tpu.memory_space<vmem>>, vector<8x16xf32>
    tpu.vector_store %arg7[%c0_311, %c1_312], %341 {strides = array<i32>} : memref<8x384xf32, #tpu.memory_space<vmem>>, vector<8x16xf32>,
    %c0_313 = arith.constant 0 : index
    %c18_314 = arith.constant 18 : index
    %343 = vector.load %arg7[%c0_313, %c18_314] : memref<8x384xf32, #tpu.memory_space<vmem>>, vector<8x16xf32>
    %344 = vector.extract_strided_slice %3 {offsets = [40, 16], sizes = [8, 16], strides = [1, 1]} : vector<72x256xf32> to vector<8x16xf32>
    %345 = arith.addf %343, %344 : vector<8x16xf32>
    %c0_315 = arith.constant 0 : index
    %c18_316 = arith.constant 18 : index
    %346 = vector.load %arg7[%c0_315, %c18_316] : memref<8x384xf32, #tpu.memory_space<vmem>>, vector<8x16xf32>
    tpu.vector_store %arg7[%c0_315, %c18_316], %345 {strides = array<i32>} : memref<8x384xf32, #tpu.memory_space<vmem>>, vector<8x16xf32>,
    %c0_317 = arith.constant 0 : index
    %c35_318 = arith.constant 35 : index
    %347 = vector.load %arg7[%c0_317, %c35_318] : memref<8x384xf32, #tpu.memory_space<vmem>>, vector<8x16xf32>
    %348 = vector.extract_strided_slice %3 {offsets = [40, 32], sizes = [8, 16], strides = [1, 1]} : vector<72x256xf32> to vector<8x16xf32>
    %349 = arith.addf %347, %348 : vector<8x16xf32>
    %c0_319 = arith.constant 0 : index
    %c35_320 = arith.constant 35 : index
    %350 = vector.load %arg7[%c0_319, %c35_320] : memref<8x384xf32, #tpu.memory_space<vmem>>, vector<8x16xf32>
    tpu.vector_store %arg7[%c0_319, %c35_320], %349 {strides = array<i32>} : memref<8x384xf32, #tpu.memory_space<vmem>>, vector<8x16xf32>,
    %c0_321 = arith.constant 0 : index
    %c52_322 = arith.constant 52 : index
    %351 = vector.load %arg7[%c0_321, %c52_322] : memref<8x384xf32, #tpu.memory_space<vmem>>, vector<8x16xf32>
    %352 = vector.extract_strided_slice %3 {offsets = [40, 48], sizes = [8, 16], strides = [1, 1]} : vector<72x256xf32> to vector<8x16xf32>
    %353 = arith.addf %351, %352 : vector<8x16xf32>
    %c0_323 = arith.constant 0 : index
    %c52_324 = arith.constant 52 : index
    %354 = vector.load %arg7[%c0_323, %c52_324] : memref<8x384xf32, #tpu.memory_space<vmem>>, vector<8x16xf32>
    tpu.vector_store %arg7[%c0_323, %c52_324], %353 {strides = array<i32>} : memref<8x384xf32, #tpu.memory_space<vmem>>, vector<8x16xf32>,
    %c0_325 = arith.constant 0 : index
    %c69_326 = arith.constant 69 : index
    %355 = vector.load %arg7[%c0_325, %c69_326] : memref<8x384xf32, #tpu.memory_space<vmem>>, vector<8x16xf32>
    %356 = vector.extract_strided_slice %3 {offsets = [40, 64], sizes = [8, 16], strides = [1, 1]} : vector<72x256xf32> to vector<8x16xf32>
    %357 = arith.addf %355, %356 : vector<8x16xf32>
    %c0_327 = arith.constant 0 : index
    %c69_328 = arith.constant 69 : index
    %358 = vector.load %arg7[%c0_327, %c69_328] : memref<8x384xf32, #tpu.memory_space<vmem>>, vector<8x16xf32>
    tpu.vector_store %arg7[%c0_327, %c69_328], %357 {strides = array<i32>} : memref<8x384xf32, #tpu.memory_space<vmem>>, vector<8x16xf32>,
    %c0_329 = arith.constant 0 : index
    %c86_330 = arith.constant 86 : index
    %359 = vector.load %arg7[%c0_329, %c86_330] : memref<8x384xf32, #tpu.memory_space<vmem>>, vector<8x16xf32>
    %360 = vector.extract_strided_slice %3 {offsets = [40, 80], sizes = [8, 16], strides = [1, 1]} : vector<72x256xf32> to vector<8x16xf32>
    %361 = arith.addf %359, %360 : vector<8x16xf32>
    %c0_331 = arith.constant 0 : index
    %c86_332 = arith.constant 86 : index
    %362 = vector.load %arg7[%c0_331, %c86_332] : memref<8x384xf32, #tpu.memory_space<vmem>>, vector<8x16xf32>
    tpu.vector_store %arg7[%c0_331, %c86_332], %361 {strides = array<i32>} : memref<8x384xf32, #tpu.memory_space<vmem>>, vector<8x16xf32>,
    %c0_333 = arith.constant 0 : index
    %c103_334 = arith.constant 103 : index
    %363 = vector.load %arg7[%c0_333, %c103_334] : memref<8x384xf32, #tpu.memory_space<vmem>>, vector<8x16xf32>
    %364 = vector.extract_strided_slice %3 {offsets = [40, 96], sizes = [8, 16], strides = [1, 1]} : vector<72x256xf32> to vector<8x16xf32>
    %365 = arith.addf %363, %364 : vector<8x16xf32>
    %c0_335 = arith.constant 0 : index
    %c103_336 = arith.constant 103 : index
    %366 = vector.load %arg7[%c0_335, %c103_336] : memref<8x384xf32, #tpu.memory_space<vmem>>, vector<8x16xf32>
    tpu.vector_store %arg7[%c0_335, %c103_336], %365 {strides = array<i32>} : memref<8x384xf32, #tpu.memory_space<vmem>>, vector<8x16xf32>,
    %c0_337 = arith.constant 0 : index
    %c120_338 = arith.constant 120 : index
    %367 = vector.load %arg7[%c0_337, %c120_338] : memref<8x384xf32, #tpu.memory_space<vmem>>, vector<8x16xf32>
    %368 = vector.extract_strided_slice %3 {offsets = [40, 112], sizes = [8, 16], strides = [1, 1]} : vector<72x256xf32> to vector<8x16xf32>
    %369 = arith.addf %367, %368 : vector<8x16xf32>
    %c0_339 = arith.constant 0 : index
    %c120_340 = arith.constant 120 : index
    %370 = vector.load %arg7[%c0_339, %c120_340] : memref<8x384xf32, #tpu.memory_space<vmem>>, vector<8x16xf32>
    tpu.vector_store %arg7[%c0_339, %c120_340], %369 {strides = array<i32>} : memref<8x384xf32, #tpu.memory_space<vmem>>, vector<8x16xf32>,
    %c0_341 = arith.constant 0 : index
    %c137_342 = arith.constant 137 : index
    %371 = vector.load %arg7[%c0_341, %c137_342] : memref<8x384xf32, #tpu.memory_space<vmem>>, vector<8x16xf32>
    %372 = vector.extract_strided_slice %3 {offsets = [40, 128], sizes = [8, 16], strides = [1, 1]} : vector<72x256xf32> to vector<8x16xf32>
    %373 = arith.addf %371, %372 : vector<8x16xf32>
    %c0_343 = arith.constant 0 : index
    %c137_344 = arith.constant 137 : index
    %374 = vector.load %arg7[%c0_343, %c137_344] : memref<8x384xf32, #tpu.memory_space<vmem>>, vector<8x16xf32>
    tpu.vector_store %arg7[%c0_343, %c137_344], %373 {strides = array<i32>} : memref<8x384xf32, #tpu.memory_space<vmem>>, vector<8x16xf32>,
    %c0_345 = arith.constant 0 : index
    %c154_346 = arith.constant 154 : index
    %375 = vector.load %arg7[%c0_345, %c154_346] : memref<8x384xf32, #tpu.memory_space<vmem>>, vector<8x16xf32>
    %376 = vector.extract_strided_slice %3 {offsets = [40, 144], sizes = [8, 16], strides = [1, 1]} : vector<72x256xf32> to vector<8x16xf32>
    %377 = arith.addf %375, %376 : vector<8x16xf32>
    %c0_347 = arith.constant 0 : index
    %c154_348 = arith.constant 154 : index
    %378 = vector.load %arg7[%c0_347, %c154_348] : memref<8x384xf32, #tpu.memory_space<vmem>>, vector<8x16xf32>
    tpu.vector_store %arg7[%c0_347, %c154_348], %377 {strides = array<i32>} : memref<8x384xf32, #tpu.memory_space<vmem>>, vector<8x16xf32>,
    %c0_349 = arith.constant 0 : index
    %c171_350 = arith.constant 171 : index
    %379 = vector.load %arg7[%c0_349, %c171_350] : memref<8x384xf32, #tpu.memory_space<vmem>>, vector<8x16xf32>
    %380 = vector.extract_strided_slice %3 {offsets = [40, 160], sizes = [8, 16], strides = [1, 1]} : vector<72x256xf32> to vector<8x16xf32>
    %381 = arith.addf %379, %380 : vector<8x16xf32>
    %c0_351 = arith.constant 0 : index
    %c171_352 = arith.constant 171 : index
    %382 = vector.load %arg7[%c0_351, %c171_352] : memref<8x384xf32, #tpu.memory_space<vmem>>, vector<8x16xf32>
    tpu.vector_store %arg7[%c0_351, %c171_352], %381 {strides = array<i32>} : memref<8x384xf32, #tpu.memory_space<vmem>>, vector<8x16xf32>,
    %c0_353 = arith.constant 0 : index
    %c188_354 = arith.constant 188 : index
    %383 = vector.load %arg7[%c0_353, %c188_354] : memref<8x384xf32, #tpu.memory_space<vmem>>, vector<8x16xf32>
    %384 = vector.extract_strided_slice %3 {offsets = [40, 176], sizes = [8, 16], strides = [1, 1]} : vector<72x256xf32> to vector<8x16xf32>
    %385 = arith.addf %383, %384 : vector<8x16xf32>
    %c0_355 = arith.constant 0 : index
    %c188_356 = arith.constant 188 : index
    %386 = vector.load %arg7[%c0_355, %c188_356] : memref<8x384xf32, #tpu.memory_space<vmem>>, vector<8x16xf32>
    tpu.vector_store %arg7[%c0_355, %c188_356], %385 {strides = array<i32>} : memref<8x384xf32, #tpu.memory_space<vmem>>, vector<8x16xf32>,
    %c0_357 = arith.constant 0 : index
    %c205_358 = arith.constant 205 : index
    %387 = vector.load %arg7[%c0_357, %c205_358] : memref<8x384xf32, #tpu.memory_space<vmem>>, vector<8x16xf32>
    %388 = vector.extract_strided_slice %3 {offsets = [40, 192], sizes = [8, 16], strides = [1, 1]} : vector<72x256xf32> to vector<8x16xf32>
    %389 = arith.addf %387, %388 : vector<8x16xf32>
    %c0_359 = arith.constant 0 : index
    %c205_360 = arith.constant 205 : index
    %390 = vector.load %arg7[%c0_359, %c205_360] : memref<8x384xf32, #tpu.memory_space<vmem>>, vector<8x16xf32>
    tpu.vector_store %arg7[%c0_359, %c205_360], %389 {strides = array<i32>} : memref<8x384xf32, #tpu.memory_space<vmem>>, vector<8x16xf32>,
    %c0_361 = arith.constant 0 : index
    %c222_362 = arith.constant 222 : index
    %391 = vector.load %arg7[%c0_361, %c222_362] : memref<8x384xf32, #tpu.memory_space<vmem>>, vector<8x16xf32>
    %392 = vector.extract_strided_slice %3 {offsets = [40, 208], sizes = [8, 16], strides = [1, 1]} : vector<72x256xf32> to vector<8x16xf32>
    %393 = arith.addf %391, %392 : vector<8x16xf32>
    %c0_363 = arith.constant 0 : index
    %c222_364 = arith.constant 222 : index
    %394 = vector.load %arg7[%c0_363, %c222_364] : memref<8x384xf32, #tpu.memory_space<vmem>>, vector<8x16xf32>
    tpu.vector_store %arg7[%c0_363, %c222_364], %393 {strides = array<i32>} : memref<8x384xf32, #tpu.memory_space<vmem>>, vector<8x16xf32>,
    %c0_365 = arith.constant 0 : index
    %c239_366 = arith.constant 239 : index
    %395 = vector.load %arg7[%c0_365, %c239_366] : memref<8x384xf32, #tpu.memory_space<vmem>>, vector<8x16xf32>
    %396 = vector.extract_strided_slice %3 {offsets = [40, 224], sizes = [8, 16], strides = [1, 1]} : vector<72x256xf32> to vector<8x16xf32>
    %397 = arith.addf %395, %396 : vector<8x16xf32>
    %c0_367 = arith.constant 0 : index
    %c239_368 = arith.constant 239 : index
    %398 = vector.load %arg7[%c0_367, %c239_368] : memref<8x384xf32, #tpu.memory_space<vmem>>, vector<8x16xf32>
    tpu.vector_store %arg7[%c0_367, %c239_368], %397 {strides = array<i32>} : memref<8x384xf32, #tpu.memory_space<vmem>>, vector<8x16xf32>,
    %c0_369 = arith.constant 0 : index
    %c256_370 = arith.constant 256 : index
    %399 = vector.load %arg7[%c0_369, %c256_370] : memref<8x384xf32, #tpu.memory_space<vmem>>, vector<8x16xf32>
    %400 = vector.extract_strided_slice %3 {offsets = [40, 240], sizes = [8, 16], strides = [1, 1]} : vector<72x256xf32> to vector<8x16xf32>
    %401 = arith.addf %399, %400 : vector<8x16xf32>
    %c0_371 = arith.constant 0 : index
    %c256_372 = arith.constant 256 : index
    %402 = vector.load %arg7[%c0_371, %c256_372] : memref<8x384xf32, #tpu.memory_space<vmem>>, vector<8x16xf32>
    tpu.vector_store %arg7[%c0_371, %c256_372], %401 {strides = array<i32>} : memref<8x384xf32, #tpu.memory_space<vmem>>, vector<8x16xf32>,
    %cst_373 = arith.constant 0.000000e+00 : f32
    %403 = vector.broadcast %cst_373 : f32 to vector<8x384xf32>
    %c0_374 = arith.constant 0 : index
    %c0_375 = arith.constant 0 : index
    %404 = vector.load %arg8[%c0_374, %c0_375] : memref<8x384xf32, #tpu.memory_space<vmem>>, vector<8x384xf32>
    tpu.vector_store %arg8[%c0_374, %c0_375], %403 {strides = array<i32>} : memref<8x384xf32, #tpu.memory_space<vmem>>, vector<8x384xf32>,
    %c0_376 = arith.constant 0 : index
    %c0_377 = arith.constant 0 : index
    %405 = vector.load %arg8[%c0_376, %c0_377] : memref<8x384xf32, #tpu.memory_space<vmem>>, vector<8x256xf32>
    %406 = vector.extract_strided_slice %3 {offsets = [32, 0], sizes = [8, 256], strides = [1, 1]} : vector<72x256xf32> to vector<8x256xf32>
    %407 = arith.addf %405, %406 : vector<8x256xf32>
    %c0_378 = arith.constant 0 : index
    %c0_379 = arith.constant 0 : index
    %408 = vector.load %arg8[%c0_378, %c0_379] : memref<8x384xf32, #tpu.memory_space<vmem>>, vector<8x256xf32>
    tpu.vector_store %arg8[%c0_378, %c0_379], %407 {strides = array<i32>} : memref<8x384xf32, #tpu.memory_space<vmem>>, vector<8x256xf32>,
    %cst_380 = arith.constant 0.000000e+00 : f32
    %409 = vector.broadcast %cst_380 : f32 to vector<8x1xf32>
    %cst_381 = arith.constant 0.000000e+00 : f32
    %410 = vector.broadcast %cst_381 : f32 to vector<8x1xf32>
    %c0_382 = arith.constant 0 : index
    %c0_383 = arith.constant 0 : index
    %411 = vector.load %arg5[%c0_382, %c0_383] : memref<8x384xf32, #tpu.memory_space<vmem>>, vector<8x384xf32>
    %412 = vector.broadcast %4 : vector<8x1xf32> to vector<8x384xf32>
    %413 = arith.addf %411, %412 : vector<8x384xf32>
    %414 = vector.extract_strided_slice %413 {offsets = [0, 0], sizes = [8, 289], strides = [1, 1]} : vector<8x384xf32> to vector<8x289xf32>
    %cst_384 = arith.constant dense<0.000000e+00> : vector<8xf32>
    %415 = vector.multi_reduction <add>, %414, %cst_384 [1] : vector<8x289xf32> to vector<8xf32>
    %416 = vector.shape_cast %415 : vector<8xf32> to vector<8x1xf32>
    %417 = arith.addf %409, %416 : vector<8x1xf32>
    %418 = arith.mulf %414, %414 : vector<8x289xf32>
    %cst_385 = arith.constant dense<0.000000e+00> : vector<8xf32>
    %419 = vector.multi_reduction <add>, %418, %cst_385 [1] : vector<8x289xf32> to vector<8xf32>
    %420 = vector.shape_cast %419 : vector<8xf32> to vector<8x1xf32>
    %421 = arith.addf %410, %420 : vector<8x1xf32>
    %c0_386 = arith.constant 0 : index
    %c0_387 = arith.constant 0 : index
    %422 = vector.load %arg6[%c0_386, %c0_387] : memref<8x384xf32, #tpu.memory_space<vmem>>, vector<8x384xf32>
    %423 = vector.broadcast %4 : vector<8x1xf32> to vector<8x384xf32>
    %424 = arith.addf %422, %423 : vector<8x384xf32>
    %425 = vector.extract_strided_slice %424 {offsets = [0, 0], sizes = [8, 272], strides = [1, 1]} : vector<8x384xf32> to vector<8x272xf32>
    %cst_388 = arith.constant dense<0.000000e+00> : vector<8xf32>
    %426 = vector.multi_reduction <add>, %425, %cst_388 [1] : vector<8x272xf32> to vector<8xf32>
    %427 = vector.shape_cast %426 : vector<8xf32> to vector<8x1xf32>
    %428 = arith.addf %417, %427 : vector<8x1xf32>
    %429 = arith.mulf %425, %425 : vector<8x272xf32>
    %cst_389 = arith.constant dense<0.000000e+00> : vector<8xf32>
    %430 = vector.multi_reduction <add>, %429, %cst_389 [1] : vector<8x272xf32> to vector<8xf32>
    %431 = vector.shape_cast %430 : vector<8xf32> to vector<8x1xf32>
    %432 = arith.addf %421, %431 : vector<8x1xf32>
    %c0_390 = arith.constant 0 : index
    %c0_391 = arith.constant 0 : index
    %433 = vector.load %arg7[%c0_390, %c0_391] : memref<8x384xf32, #tpu.memory_space<vmem>>, vector<8x384xf32>
    %434 = vector.broadcast %4 : vector<8x1xf32> to vector<8x384xf32>
    %435 = arith.addf %433, %434 : vector<8x384xf32>
    %436 = vector.extract_strided_slice %435 {offsets = [0, 0], sizes = [8, 272], strides = [1, 1]} : vector<8x384xf32> to vector<8x272xf32>
    %cst_392 = arith.constant dense<0.000000e+00> : vector<8xf32>
    %437 = vector.multi_reduction <add>, %436, %cst_392 [1] : vector<8x272xf32> to vector<8xf32>
    %438 = vector.shape_cast %437 : vector<8xf32> to vector<8x1xf32>
    %439 = arith.addf %428, %438 : vector<8x1xf32>
    %440 = arith.mulf %436, %436 : vector<8x272xf32>
    %cst_393 = arith.constant dense<0.000000e+00> : vector<8xf32>
    %441 = vector.multi_reduction <add>, %440, %cst_393 [1] : vector<8x272xf32> to vector<8xf32>
    %442 = vector.shape_cast %441 : vector<8xf32> to vector<8x1xf32>
    %443 = arith.addf %432, %442 : vector<8x1xf32>
    %c0_394 = arith.constant 0 : index
    %c0_395 = arith.constant 0 : index
    %444 = vector.load %arg8[%c0_394, %c0_395] : memref<8x384xf32, #tpu.memory_space<vmem>>, vector<8x384xf32>
    %445 = vector.broadcast %4 : vector<8x1xf32> to vector<8x384xf32>
    %446 = arith.addf %444, %445 : vector<8x384xf32>
    %447 = vector.extract_strided_slice %446 {offsets = [0, 0], sizes = [8, 256], strides = [1, 1]} : vector<8x384xf32> to vector<8x256xf32>
    %cst_396 = arith.constant dense<0.000000e+00> : vector<8xf32>
    %448 = vector.multi_reduction <add>, %447, %cst_396 [1] : vector<8x256xf32> to vector<8xf32>
    %449 = vector.shape_cast %448 : vector<8xf32> to vector<8x1xf32>
    %450 = arith.addf %439, %449 : vector<8x1xf32>
    %451 = arith.mulf %447, %447 : vector<8x256xf32>
    %cst_397 = arith.constant dense<0.000000e+00> : vector<8xf32>
    %452 = vector.multi_reduction <add>, %451, %cst_397 [1] : vector<8x256xf32> to vector<8xf32>
    %453 = vector.shape_cast %452 : vector<8xf32> to vector<8x1xf32>
    %454 = arith.addf %443, %453 : vector<8x1xf32>
    %cst_398 = arith.constant 9.18273639E-4 : f32
    %455 = vector.broadcast %cst_398 : f32 to vector<8x1xf32>
    %456 = arith.mulf %450, %455 : vector<8x1xf32>
    %cst_399 = arith.constant 9.18273639E-4 : f32
    %457 = vector.broadcast %cst_399 : f32 to vector<8x1xf32>
    %458 = arith.mulf %454, %457 : vector<8x1xf32>
    %459 = arith.mulf %456, %456 : vector<8x1xf32>
    %460 = arith.subf %458, %459 : vector<8x1xf32>
    %cst_400 = arith.constant 0.000000e+00 : f32
    %461 = vector.broadcast %cst_400 : f32 to vector<8x1xf32>
    %462 = arith.maximumf %460, %461 : vector<8x1xf32>
    %cst_401 = arith.constant 9.99999974E-6 : f32
    %463 = vector.broadcast %cst_401 : f32 to vector<8x1xf32>
    %464 = arith.addf %462, %463 : vector<8x1xf32>
    %465 = math.rsqrt %464 : vector<8x1xf32>
    %466 = vector.broadcast %456 : vector<8x1xf32> to vector<8x384xf32>
    %467 = arith.subf %413, %466 : vector<8x384xf32>
    %468 = vector.broadcast %465 : vector<8x1xf32> to vector<8x384xf32>
    %469 = arith.mulf %467, %468 : vector<8x384xf32>
    %cst_402 = arith.constant 0.000000e+00 : f32
    %470 = vector.broadcast %cst_402 : f32 to vector<8x384xf32>
    %471 = arith.maximumf %469, %470 : vector<8x384xf32>
    %c0_403 = arith.constant 0 : index
    %c0_404 = arith.constant 0 : index
    %c0_405 = arith.constant 0 : index
    %c0_406 = arith.constant 0 : index
    %472 = vector.load %arg4[%c0_403, %c0_404, %c0_405, %c0_406] : memref<1x4x8x384xf32, #tpu.memory_space<vmem>>, vector<1x1x8x384xf32>
    %473 = vector.shape_cast %472 : vector<1x1x8x384xf32> to vector<8x384xf32>
    %474 = vector.shape_cast %471 : vector<8x384xf32> to vector<1x1x8x384xf32>
    tpu.vector_store %arg4[%c0_403, %c0_404, %c0_405, %c0_406], %474 {strides = array<i32>} : memref<1x4x8x384xf32, #tpu.memory_space<vmem>>, vector<1x1x8x384xf32>,
    %475 = vector.broadcast %456 : vector<8x1xf32> to vector<8x384xf32>
    %476 = arith.subf %424, %475 : vector<8x384xf32>
    %477 = vector.broadcast %465 : vector<8x1xf32> to vector<8x384xf32>
    %478 = arith.mulf %476, %477 : vector<8x384xf32>
    %cst_407 = arith.constant 0.000000e+00 : f32
    %479 = vector.broadcast %cst_407 : f32 to vector<8x384xf32>
    %480 = arith.maximumf %478, %479 : vector<8x384xf32>
    %c0_408 = arith.constant 0 : index
    %c1_409 = arith.constant 1 : index
    %c0_410 = arith.constant 0 : index
    %c0_411 = arith.constant 0 : index
    %481 = vector.load %arg4[%c0_408, %c1_409, %c0_410, %c0_411] : memref<1x4x8x384xf32, #tpu.memory_space<vmem>>, vector<1x1x8x384xf32>
    %482 = vector.shape_cast %481 : vector<1x1x8x384xf32> to vector<8x384xf32>
    %483 = vector.shape_cast %480 : vector<8x384xf32> to vector<1x1x8x384xf32>
    tpu.vector_store %arg4[%c0_408, %c1_409, %c0_410, %c0_411], %483 {strides = array<i32>} : memref<1x4x8x384xf32, #tpu.memory_space<vmem>>, vector<1x1x8x384xf32>,
    %484 = vector.broadcast %456 : vector<8x1xf32> to vector<8x384xf32>
    %485 = arith.subf %435, %484 : vector<8x384xf32>
    %486 = vector.broadcast %465 : vector<8x1xf32> to vector<8x384xf32>
    %487 = arith.mulf %485, %486 : vector<8x384xf32>
    %cst_412 = arith.constant 0.000000e+00 : f32
    %488 = vector.broadcast %cst_412 : f32 to vector<8x384xf32>
    %489 = arith.maximumf %487, %488 : vector<8x384xf32>
    %c0_413 = arith.constant 0 : index
    %c2 = arith.constant 2 : index
    %c0_414 = arith.constant 0 : index
    %c0_415 = arith.constant 0 : index
    %490 = vector.load %arg4[%c0_413, %c2, %c0_414, %c0_415] : memref<1x4x8x384xf32, #tpu.memory_space<vmem>>, vector<1x1x8x384xf32>
    %491 = vector.shape_cast %490 : vector<1x1x8x384xf32> to vector<8x384xf32>
    %492 = vector.shape_cast %489 : vector<8x384xf32> to vector<1x1x8x384xf32>
    tpu.vector_store %arg4[%c0_413, %c2, %c0_414, %c0_415], %492 {strides = array<i32>} : memref<1x4x8x384xf32, #tpu.memory_space<vmem>>, vector<1x1x8x384xf32>,
    %493 = vector.broadcast %456 : vector<8x1xf32> to vector<8x384xf32>
    %494 = arith.subf %446, %493 : vector<8x384xf32>
    %495 = vector.broadcast %465 : vector<8x1xf32> to vector<8x384xf32>
    %496 = arith.mulf %494, %495 : vector<8x384xf32>
    %cst_416 = arith.constant 0.000000e+00 : f32
    %497 = vector.broadcast %cst_416 : f32 to vector<8x384xf32>
    %498 = arith.maximumf %496, %497 : vector<8x384xf32>
    %c0_417 = arith.constant 0 : index
    %c3 = arith.constant 3 : index
    %c0_418 = arith.constant 0 : index
    %c0_419 = arith.constant 0 : index
    %499 = vector.load %arg4[%c0_417, %c3, %c0_418, %c0_419] : memref<1x4x8x384xf32, #tpu.memory_space<vmem>>, vector<1x1x8x384xf32>
    %500 = vector.shape_cast %499 : vector<1x1x8x384xf32> to vector<8x384xf32>
    %501 = vector.shape_cast %498 : vector<8x384xf32> to vector<1x1x8x384xf32>
    tpu.vector_store %arg4[%c0_417, %c3, %c0_418, %c0_419], %501 {strides = array<i32>} : memref<1x4x8x384xf32, #tpu.memory_space<vmem>>, vector<1x1x8x384xf32>,
    return
  }
  func.func @transform_0(%arg0: i32) -> (i32, i32, i32) {
    %c0_i32 = arith.constant 0 : i32
    %c0_i32_0 = arith.constant 0 : i32
    %c0_i32_1 = arith.constant 0 : i32
    return %arg0, %c0_i32, %c0_i32_0 : i32, i32, i32
  }
  func.func @transform_1(%arg0: i32) -> (i32, i32) {
    %c0_i32 = arith.constant 0 : i32
    %c0_i32_0 = arith.constant 0 : i32
    %c0_i32_1 = arith.constant 0 : i32
    return %c0_i32, %c0_i32_0 : i32, i32
  }
  func.func @transform_2(%arg0: i32) -> (i32, i32) {
    %c0_i32 = arith.constant 0 : i32
    %c0_i32_0 = arith.constant 0 : i32
    %c0_i32_1 = arith.constant 0 : i32
    return %c0_i32, %c0_i32_0 : i32, i32
  }
  func.func @transform_3(%arg0: i32) -> (i32, i32, i32, i32) {
    %c0_i32 = arith.constant 0 : i32
    %c0_i32_0 = arith.constant 0 : i32
    %c0_i32_1 = arith.constant 0 : i32
    %c0_i32_2 = arith.constant 0 : i32
    return %arg0, %c0_i32, %c0_i32_0, %c0_i32_1 : i32, i32, i32, i32
  }
}

</mosaic_0001>

<llo_original>
// kernel: squeeze.4
$region0: #{squeeze.4}
  %s0 = inlined_call_operand.vmem [shape: f32[2,1,8,289], index: 0, kind: input, shape index: {}]
  %s1 = inlined_call_operand.vmem [shape: f32[2,8,17,17], index: 1, kind: output, shape index: {}]
  %v2 = vld [vmem:[%s0] sm:$0xff]
  %vm3 = vcmask 138240
  %4 = vst.msk [vmem:[%s1] ss:$24 sm:$0xf] %vm3, %v2
  %5 = vst.msk [vmem:[%s1] ss:$24 sm:$0xf0] %vm3, %v2
  %s6 = scalar_lea.vmem %s0, 24
  %v7 = vld [vmem:[%s6] sm:$0xff]
  %vm8 = vcmask 138240
  %s9 = scalar_lea.vmem %s1, 192
  %10 = vst.msk [vmem:[%s9] ss:$24 sm:$0xf] %vm8, %v7
  %s11 = scalar_lea.vmem %s1, 192
  %12 = vst.msk [vmem:[%s11] ss:$24 sm:$0xf0] %vm8, %v7
  %s13 = scalar_lea.vmem %s0, 8
  %v14 = vld.sshfl [vmem:[%s13] sm:$0xff pattern:$0x67452301]
  %15 = vrot.lane.b32.xlu0 %v14, 120
  %v16 = vpop.permute.xlu0 %15
  %vm17 = vcmask 138240
  %s18 = scalar_lea.vmem %s1, 32
  %19 = vst.msk [vmem:[%s18] ss:$-24 sm:$0x3] %vm17, %v16
  %s20 = scalar_lea.vmem %s1, 128
  %21 = vst.msk [vmem:[%s20] ss:$-24 sm:$0xc] %vm17, %v16
  %s22 = scalar_lea.vmem %s1, 224
  %23 = vst.msk [vmem:[%s22] ss:$-24 sm:$0x30] %vm17, %v16
  %s24 = scalar_lea.vmem %s1, 320
  %25 = vst.msk [vmem:[%s24] ss:$-24 sm:$0xc0] %vm17, %v16
  %s26 = scalar_lea.vmem %s0, 32
  %v27 = vld.sshfl [vmem:[%s26] sm:$0xff pattern:$0x67452301]
  %28 = vrot.lane.b32.xlu0 %v27, 120
  %v29 = vpop.permute.xlu0 %28
  %vm30 = vcmask 138240
  %s31 = scalar_lea.vmem %s1, 224
  %32 = vst.msk [vmem:[%s31] ss:$-24 sm:$0x3] %vm30, %v29
  %s33 = scalar_lea.vmem %s1, 320
  %34 = vst.msk [vmem:[%s33] ss:$-24 sm:$0xc] %vm30, %v29
  %s35 = scalar_lea.vmem %s1, 416
  %36 = vst.msk [vmem:[%s35] ss:$-24 sm:$0x30] %vm30, %v29
  %s37 = scalar_lea.vmem %s1, 512
  %38 = vst.msk [vmem:[%s37] ss:$-24 sm:$0xc0] %vm30, %v29
  %s39 = scalar_lea.vmem %s0, 16
  %v40 = vld.sshfl [vmem:[%s39] sm:$0xff pattern:$0x74563012]
  %41 = vrot.lane.b32.xlu0 %v40, 112
  %v42 = vpop.permute.xlu0 %41
  %vm43 = vcmask 138240
  %s44 = scalar_lea.vmem %s1, 64
  %45 = vst.msk [vmem:[%s44] ss:$-24 sm:$0x7] %vm43, %v42
  %s46 = scalar_lea.vmem %s1, 4294967168
  %47 = vst.msk [vmem:[%s46] ss:$72 sm:$0x18] %vm43, %v42
  %s48 = scalar_lea.vmem %s1, 256
  %49 = vst.msk [vmem:[%s48] ss:$-24 sm:$0x60] %vm43, %v42
  %s50 = scalar_lea.vmem %s1, 177
  %51 = vst.msk [vmem:[%s50] sm:$0x80] %vm43, %v42
  %s52 = scalar_lea.vmem %s0, 40
  %v53 = vld.sshfl [vmem:[%s52] sm:$0xff pattern:$0x74563012]
  %54 = vrot.lane.b32.xlu0 %v53, 112
  %v55 = vpop.permute.xlu0 %54
  %vm56 = vcmask 138240
  %s57 = scalar_lea.vmem %s1, 256
  %58 = vst.msk [vmem:[%s57] ss:$-24 sm:$0x7] %vm56, %v55
  %s59 = scalar_lea.vmem %s1, 64
  %60 = vst.msk [vmem:[%s59] ss:$72 sm:$0x18] %vm56, %v55
  %s61 = scalar_lea.vmem %s1, 448
  %62 = vst.msk [vmem:[%s61] ss:$-24 sm:$0x60] %vm56, %v55
  %s63 = scalar_lea.vmem %s1, 369
  %64 = vst.msk [vmem:[%s63] sm:$0x80] %vm56, %v55
  %v65 = vld.sshfl [vmem:[%s0] sm:$0xff pattern:$0x56741230]
  %66 = vrot.lane.b32.xlu0 %v65, 111
  %v67 = vpop.permute.xlu0 %66
  %vm68 = vcmask 138240
  %s69 = scalar_lea.vmem %s1, 1
  %70 = vst.msk [vmem:[%s69] ss:$72 sm:$0x3] %vm68, %v67
  %s71 = scalar_lea.vmem %s1, 97
  %72 = vst.msk [vmem:[%s71] ss:$-24 sm:$0xc] %vm68, %v67
  %s73 = scalar_lea.vmem %s1, 4294967105
  %74 = vst.msk [vmem:[%s73] ss:$72 sm:$0x30] %vm68, %v67
  %s75 = scalar_lea.vmem %s1, 289
  %76 = vst.msk [vmem:[%s75] ss:$-24 sm:$0xc0] %vm68, %v67
  %s77 = scalar_lea.vmem %s0, 24
  %v78 = vld.sshfl [vmem:[%s77] sm:$0xff pattern:$0x56741230]
  %79 = vrot.lane.b32.xlu0 %v78, 111
  %v80 = vpop.permute.xlu0 %79
  %vm81 = vcmask 138240
  %s82 = scalar_lea.vmem %s1, 193
  %83 = vst.msk [vmem:[%s82] ss:$72 sm:$0x3] %vm81, %v80
  %s84 = scalar_lea.vmem %s1, 289
  %85 = vst.msk [vmem:[%s84] ss:$-24 sm:$0xc] %vm81, %v80
  %s86 = scalar_lea.vmem %s1, 1
  %87 = vst.msk [vmem:[%s86] ss:$72 sm:$0x30] %vm81, %v80
  %s88 = scalar_lea.vmem %s1, 481
  %89 = vst.msk [vmem:[%s88] ss:$-24 sm:$0xc0] %vm81, %v80
  %s90 = scalar_lea.vmem %s0, 8
  %v91 = vld.sshfl [vmem:[%s90] sm:$0xff pattern:$0x67452301]
  %92 = vrot.lane.b32.xlu0 %v91, 103
  %v93 = vpop.permute.xlu0 %92
  %vm94 = vcmask 138240
  %s95 = scalar_lea.vmem %s1, 33
  %96 = vst.msk [vmem:[%s95] ss:$-24 sm:$0x3] %vm94, %v93
  %s97 = scalar_lea.vmem %s1, 129
  %98 = vst.msk [vmem:[%s97] ss:$-24 sm:$0xc] %vm94, %v93
  %s99 = scalar_lea.vmem %s1, 225
  %100 = vst.msk [vmem:[%s99] ss:$-24 sm:$0x30] %vm94, %v93
  %s101 = scalar_lea.vmem %s1, 321
  %102 = vst.msk [vmem:[%s101] ss:$-24 sm:$0xc0] %vm94, %v93
  %s103 = scalar_lea.vmem %s0, 32
  %v104 = vld.sshfl [vmem:[%s103] sm:$0xff pattern:$0x67452301]
  %105 = vrot.lane.b32.xlu0 %v104, 103
  %v106 = vpop.permute.xlu0 %105
  %vm107 = vcmask 138240
  %s108 = scalar_lea.vmem %s1, 225
  %109 = vst.msk [vmem:[%s108] ss:$-24 sm:$0x3] %vm107, %v106
  %s110 = scalar_lea.vmem %s1, 321
  %111 = vst.msk [vmem:[%s110] ss:$-24 sm:$0xc] %vm107, %v106
  %s112 = scalar_lea.vmem %s1, 417
  %113 = vst.msk [vmem:[%s112] ss:$-24 sm:$0x30] %vm107, %v106
  %s114 = scalar_lea.vmem %s1, 513
  %115 = vst.msk [vmem:[%s114] ss:$-24 sm:$0xc0] %vm107, %v106
  %v116 = vld.sshfl [vmem:[%s0] sm:$0xff pattern:$0x56741230]
  %117 = vrot.lane.b32.xlu0 %v116, 94
  %v118 = vpop.permute.xlu0 %117
  %vm119 = vcmask 138240
  %s120 = scalar_lea.vmem %s1, 2
  %121 = vst.msk [vmem:[%s120] ss:$72 sm:$0x3] %vm119, %v118
  %s122 = scalar_lea.vmem %s1, 98
  %123 = vst.msk [vmem:[%s122] ss:$-24 sm:$0xc] %vm119, %v118
  %s124 = scalar_lea.vmem %s1, 4294967106
  %125 = vst.msk [vmem:[%s124] ss:$72 sm:$0x30] %vm119, %v118
  %s126 = scalar_lea.vmem %s1, 290
  %127 = vst.msk [vmem:[%s126] ss:$-24 sm:$0xc0] %vm119, %v118
  %s128 = scalar_lea.vmem %s0, 24
  %v129 = vld.sshfl [vmem:[%s128] sm:$0xff pattern:$0x56741230]
  %130 = vrot.lane.b32.xlu0 %v129, 94
  %v131 = vpop.permute.xlu0 %130
  %vm132 = vcmask 138240
  %s133 = scalar_lea.vmem %s1, 194
  %134 = vst.msk [vmem:[%s133] ss:$72 sm:$0x3] %vm132, %v131
  %s135 = scalar_lea.vmem %s1, 290
  %136 = vst.msk [vmem:[%s135] ss:$-24 sm:$0xc] %vm132, %v131
  %s137 = scalar_lea.vmem %s1, 2
  %138 = vst.msk [vmem:[%s137] ss:$72 sm:$0x30] %vm132, %v131
  %s139 = scalar_lea.vmem %s1, 482
  %140 = vst.msk [vmem:[%s139] ss:$-24 sm:$0xc0] %vm132, %v131
  %s141 = scalar_lea.vmem %s0, 8
  %v142 = vld.sshfl [vmem:[%s141] sm:$0xff pattern:$0x67452301]
  %143 = vrot.lane.b32.xlu0 %v142, 86
  %v144 = vpop.permute.xlu0 %143
  %vm145 = vcmask 138240
  %s146 = scalar_lea.vmem %s1, 34
  %147 = vst.msk [vmem:[%s146] ss:$-24 sm:$0x3] %vm145, %v144
  %s148 = scalar_lea.vmem %s1, 130
  %149 = vst.msk [vmem:[%s148] ss:$-24 sm:$0xc] %vm145, %v144
  %s150 = scalar_lea.vmem %s1, 226
  %151 = vst.msk [vmem:[%s150] ss:$-24 sm:$0x30] %vm145, %v144
  %s152 = scalar_lea.vmem %s1, 322
  %153 = vst.msk [vmem:[%s152] ss:$-24 sm:$0xc0] %vm145, %v144
  %s154 = scalar_lea.vmem %s0, 32
  %v155 = vld.sshfl [vmem:[%s154] sm:$0xff pattern:$0x67452301]
  %156 = vrot.lane.b32.xlu0 %v155, 86
  %v157 = vpop.permute.xlu0 %156
  %vm158 = vcmask 138240
  %s159 = scalar_lea.vmem %s1, 226
  %160 = vst.msk [vmem:[%s159] ss:$-24 sm:$0x3] %vm158, %v157
  %s161 = scalar_lea.vmem %s1, 322
  %162 = vst.msk [vmem:[%s161] ss:$-24 sm:$0xc] %vm158, %v157
  %s163 = scalar_lea.vmem %s1, 418
  %164 = vst.msk [vmem:[%s163] ss:$-24 sm:$0x30] %vm158, %v157
  %s165 = scalar_lea.vmem %s1, 514
  %166 = vst.msk [vmem:[%s165] ss:$-24 sm:$0xc0] %vm158, %v157
  %v167 = vld.sshfl [vmem:[%s0] sm:$0xff pattern:$0x56741230]
  %168 = vrot.lane.b32.xlu0 %v167, 77
  %v169 = vpop.permute.xlu0 %168
  %vm170 = vcmask 138240
  %s171 = scalar_lea.vmem %s1, 3
  %172 = vst.msk [vmem:[%s171] ss:$72 sm:$0x3] %vm170, %v169
  %s173 = scalar_lea.vmem %s1, 99
  %174 = vst.msk [vmem:[%s173] ss:$-24 sm:$0xc] %vm170, %v169
  %s175 = scalar_lea.vmem %s1, 4294967107
  %176 = vst.msk [vmem:[%s175] ss:$72 sm:$0x30] %vm170, %v169
  %s177 = scalar_lea.vmem %s1, 291
  %178 = vst.msk [vmem:[%s177] ss:$-24 sm:$0xc0] %vm170, %v169
  %s179 = scalar_lea.vmem %s0, 24
  %v180 = vld.sshfl [vmem:[%s179] sm:$0xff pattern:$0x56741230]
  %181 = vrot.lane.b32.xlu0 %v180, 77
  %v182 = vpop.permute.xlu0 %181
  %vm183 = vcmask 138240
  %s184 = scalar_lea.vmem %s1, 195
  %185 = vst.msk [vmem:[%s184] ss:$72 sm:$0x3] %vm183, %v182
  %s186 = scalar_lea.vmem %s1, 291
  %187 = vst.msk [vmem:[%s186] ss:$-24 sm:$0xc] %vm183, %v182
  %s188 = scalar_lea.vmem %s1, 3
  %189 = vst.msk [vmem:[%s188] ss:$72 sm:$0x30] %vm183, %v182
  %s190 = scalar_lea.vmem %s1, 483
  %191 = vst.msk [vmem:[%s190] ss:$-24 sm:$0xc0] %vm183, %v182
  %s192 = scalar_lea.vmem %s0, 8
  %v193 = vld.sshfl [vmem:[%s192] sm:$0xff pattern:$0x67452301]
  %194 = vrot.lane.b32.xlu0 %v193, 69
  %v195 = vpop.permute.xlu0 %194
  %vm196 = vcmask 138240
  %s197 = scalar_lea.vmem %s1, 35
  %198 = vst.msk [vmem:[%s197] ss:$-24 sm:$0x3] %vm196, %v195
  %s199 = scalar_lea.vmem %s1, 131
  %200 = vst.msk [vmem:[%s199] ss:$-24 sm:$0xc] %vm196, %v195
  %s201 = scalar_lea.vmem %s1, 227
  %202 = vst.msk [vmem:[%s201] ss:$-24 sm:$0x30] %vm196, %v195
  %s203 = scalar_lea.vmem %s1, 323
  %204 = vst.msk [vmem:[%s203] ss:$-24 sm:$0xc0] %vm196, %v195
  %s205 = scalar_lea.vmem %s0, 32
  %v206 = vld.sshfl [vmem:[%s205] sm:$0xff pattern:$0x67452301]
  %207 = vrot.lane.b32.xlu0 %v206, 69
  %v208 = vpop.permute.xlu0 %207
  %vm209 = vcmask 138240
  %s210 = scalar_lea.vmem %s1, 227
  %211 = vst.msk [vmem:[%s210] ss:$-24 sm:$0x3] %vm209, %v208
  %s212 = scalar_lea.vmem %s1, 323
  %213 = vst.msk [vmem:[%s212] ss:$-24 sm:$0xc] %vm209, %v208
  %s214 = scalar_lea.vmem %s1, 419
  %215 = vst.msk [vmem:[%s214] ss:$-24 sm:$0x30] %vm209, %v208
  %s216 = scalar_lea.vmem %s1, 515
  %217 = vst.msk [vmem:[%s216] ss:$-24 sm:$0xc0] %vm209, %v208
  %v218 = vld.sshfl [vmem:[%s0] sm:$0xff pattern:$0x56741230]
  %219 = vrot.lane.b32.xlu0 %v218, 60
  %v220 = vpop.permute.xlu0 %219
  %vm221 = vcmask 138240
  %s222 = scalar_lea.vmem %s1, 4
  %223 = vst.msk [vmem:[%s222] ss:$72 sm:$0x3] %vm221, %v220
  %s224 = scalar_lea.vmem %s1, 100
  %225 = vst.msk [vmem:[%s224] ss:$-24 sm:$0xc] %vm221, %v220
  %s226 = scalar_lea.vmem %s1, 4294967108
  %227 = vst.msk [vmem:[%s226] ss:$72 sm:$0x30] %vm221, %v220
  %s228 = scalar_lea.vmem %s1, 292
  %229 = vst.msk [vmem:[%s228] ss:$-24 sm:$0xc0] %vm221, %v220
  %s230 = scalar_lea.vmem %s0, 24
  %v231 = vld.sshfl [vmem:[%s230] sm:$0xff pattern:$0x56741230]
  %232 = vrot.lane.b32.xlu0 %v231, 60
  %v233 = vpop.permute.xlu0 %232
  %vm234 = vcmask 138240
  %s235 = scalar_lea.vmem %s1, 196
  %236 = vst.msk [vmem:[%s235] ss:$72 sm:$0x3] %vm234, %v233
  %s237 = scalar_lea.vmem %s1, 292
  %238 = vst.msk [vmem:[%s237] ss:$-24 sm:$0xc] %vm234, %v233
  %s239 = scalar_lea.vmem %s1, 4
  %240 = vst.msk [vmem:[%s239] ss:$72 sm:$0x30] %vm234, %v233
  %s241 = scalar_lea.vmem %s1, 484
  %242 = vst.msk [vmem:[%s241] ss:$-24 sm:$0xc0] %vm234, %v233
  %s243 = scalar_lea.vmem %s0, 8
  %v244 = vld.sshfl [vmem:[%s243] sm:$0xff pattern:$0x67452301]
  %245 = vrot.lane.b32.xlu0 %v244, 52
  %v246 = vpop.permute.xlu0 %245
  %vm247 = vcmask 138240
  %s248 = scalar_lea.vmem %s1, 36
  %249 = vst.msk [vmem:[%s248] ss:$-24 sm:$0x3] %vm247, %v246
  %s250 = scalar_lea.vmem %s1, 132
  %251 = vst.msk [vmem:[%s250] ss:$-24 sm:$0xc] %vm247, %v246
  %s252 = scalar_lea.vmem %s1, 228
  %253 = vst.msk [vmem:[%s252] ss:$-24 sm:$0x30] %vm247, %v246
  %s254 = scalar_lea.vmem %s1, 324
  %255 = vst.msk [vmem:[%s254] ss:$-24 sm:$0xc0] %vm247, %v246
  %s256 = scalar_lea.vmem %s0, 32
  %v257 = vld.sshfl [vmem:[%s256] sm:$0xff pattern:$0x67452301]
  %258 = vrot.lane.b32.xlu0 %v257, 52
  %v259 = vpop.permute.xlu0 %258
  %vm260 = vcmask 138240
  %s261 = scalar_lea.vmem %s1, 228
  %262 = vst.msk [vmem:[%s261] ss:$-24 sm:$0x3] %vm260, %v259
  %s263 = scalar_lea.vmem %s1, 324
  %264 = vst.msk [vmem:[%s263] ss:$-24 sm:$0xc] %vm260, %v259
  %s265 = scalar_lea.vmem %s1, 420
  %266 = vst.msk [vmem:[%s265] ss:$-24 sm:$0x30] %vm260, %v259
  %s267 = scalar_lea.vmem %s1, 516
  %268 = vst.msk [vmem:[%s267] ss:$-24 sm:$0xc0] %vm260, %v259
  %v269 = vld.sshfl [vmem:[%s0] sm:$0xff pattern:$0x56741230]
  %270 = vrot.lane.b32.xlu0 %v269, 43
  %v271 = vpop.permute.xlu0 %270
  %vm272 = vcmask 138240
  %s273 = scalar_lea.vmem %s1, 5
  %274 = vst.msk [vmem:[%s273] ss:$72 sm:$0x3] %vm272, %v271
  %s275 = scalar_lea.vmem %s1, 101
  %276 = vst.msk [vmem:[%s275] ss:$-24 sm:$0xc] %vm272, %v271
  %s277 = scalar_lea.vmem %s1, 4294967109
  %278 = vst.msk [vmem:[%s277] ss:$72 sm:$0x30] %vm272, %v271
  %s279 = scalar_lea.vmem %s1, 293
  %280 = vst.msk [vmem:[%s279] ss:$-24 sm:$0xc0] %vm272, %v271
  %s281 = scalar_lea.vmem %s0, 24
  %v282 = vld.sshfl [vmem:[%s281] sm:$0xff pattern:$0x56741230]
  %283 = vrot.lane.b32.xlu0 %v282, 43
  %v284 = vpop.permute.xlu0 %283
  %vm285 = vcmask 138240
  %s286 = scalar_lea.vmem %s1, 197
  %287 = vst.msk [vmem:[%s286] ss:$72 sm:$0x3] %vm285, %v284
  %s288 = scalar_lea.vmem %s1, 293
  %289 = vst.msk [vmem:[%s288] ss:$-24 sm:$0xc] %vm285, %v284
  %s290 = scalar_lea.vmem %s1, 5
  %291 = vst.msk [vmem:[%s290] ss:$72 sm:$0x30] %vm285, %v284
  %s292 = scalar_lea.vmem %s1, 485
  %293 = vst.msk [vmem:[%s292] ss:$-24 sm:$0xc0] %vm285, %v284
  %s294 = scalar_lea.vmem %s0, 8
  %v295 = vld.sshfl [vmem:[%s294] sm:$0xff pattern:$0x67452301]
  %296 = vrot.lane.b32.xlu0 %v295, 35
  %v297 = vpop.permute.xlu0 %296
  %vm298 = vcmask 138240
  %s299 = scalar_lea.vmem %s1, 37
  %300 = vst.msk [vmem:[%s299] ss:$-24 sm:$0x3] %vm298, %v297
  %s301 = scalar_lea.vmem %s1, 133
  %302 = vst.msk [vmem:[%s301] ss:$-24 sm:$0xc] %vm298, %v297
  %s303 = scalar_lea.vmem %s1, 229
  %304 = vst.msk [vmem:[%s303] ss:$-24 sm:$0x30] %vm298, %v297
  %s305 = scalar_lea.vmem %s1, 325
  %306 = vst.msk [vmem:[%s305] ss:$-24 sm:$0xc0] %vm298, %v297
  %s307 = scalar_lea.vmem %s0, 32
  %v308 = vld.sshfl [vmem:[%s307] sm:$0xff pattern:$0x67452301]
  %309 = vrot.lane.b32.xlu0 %v308, 35
  %v310 = vpop.permute.xlu0 %309
  %vm311 = vcmask 138240
  %s312 = scalar_lea.vmem %s1, 229
  %313 = vst.msk [vmem:[%s312] ss:$-24 sm:$0x3] %vm311, %v310
  %s314 = scalar_lea.vmem %s1, 325
  %315 = vst.msk [vmem:[%s314] ss:$-24 sm:$0xc] %vm311, %v310
  %s316 = scalar_lea.vmem %s1, 421
  %317 = vst.msk [vmem:[%s316] ss:$-24 sm:$0x30] %vm311, %v310
  %s318 = scalar_lea.vmem %s1, 517
  %319 = vst.msk [vmem:[%s318] ss:$-24 sm:$0xc0] %vm311, %v310
  %v320 = vld.sshfl [vmem:[%s0] sm:$0xff pattern:$0x56741230]
  %321 = vrot.lane.b32.xlu0 %v320, 26
  %v322 = vpop.permute.xlu0 %321
  %vm323 = vcmask 138240
  %s324 = scalar_lea.vmem %s1, 6
  %325 = vst.msk [vmem:[%s324] ss:$72 sm:$0x3] %vm323, %v322
  %s326 = scalar_lea.vmem %s1, 102
  %327 = vst.msk [vmem:[%s326] ss:$-24 sm:$0xc] %vm323, %v322
  %s328 = scalar_lea.vmem %s1, 4294967110
  %329 = vst.msk [vmem:[%s328] ss:$72 sm:$0x30] %vm323, %v322
  %s330 = scalar_lea.vmem %s1, 294
  %331 = vst.msk [vmem:[%s330] ss:$-24 sm:$0xc0] %vm323, %v322
  %s332 = scalar_lea.vmem %s0, 24
  %v333 = vld.sshfl [vmem:[%s332] sm:$0xff pattern:$0x56741230]
  %334 = vrot.lane.b32.xlu0 %v333, 26
  %v335 = vpop.permute.xlu0 %334
  %vm336 = vcmask 138240
  %s337 = scalar_lea.vmem %s1, 198
  %338 = vst.msk [vmem:[%s337] ss:$72 sm:$0x3] %vm336, %v335
  %s339 = scalar_lea.vmem %s1, 294
  %340 = vst.msk [vmem:[%s339] ss:$-24 sm:$0xc] %vm336, %v335
  %s341 = scalar_lea.vmem %s1, 6
  %342 = vst.msk [vmem:[%s341] ss:$72 sm:$0x30] %vm336, %v335
  %s343 = scalar_lea.vmem %s1, 486
  %344 = vst.msk [vmem:[%s343] ss:$-24 sm:$0xc0] %vm336, %v335
  %s345 = scalar_lea.vmem %s0, 8
  %v346 = vld.sshfl [vmem:[%s345] sm:$0xff pattern:$0x67452301]
  %347 = vrot.lane.b32.xlu0 %v346, 18
  %v348 = vpop.permute.xlu0 %347
  %vm349 = vcmask 138240
  %s350 = scalar_lea.vmem %s1, 38
  %351 = vst.msk [vmem:[%s350] ss:$-24 sm:$0x3] %vm349, %v348
  %s352 = scalar_lea.vmem %s1, 134
  %353 = vst.msk [vmem:[%s352] ss:$-24 sm:$0xc] %vm349, %v348
  %s354 = scalar_lea.vmem %s1, 230
  %355 = vst.msk [vmem:[%s354] ss:$-24 sm:$0x30] %vm349, %v348
  %s356 = scalar_lea.vmem %s1, 326
  %357 = vst.msk [vmem:[%s356] ss:$-24 sm:$0xc0] %vm349, %v348
  %s358 = scalar_lea.vmem %s0, 32
  %v359 = vld.sshfl [vmem:[%s358] sm:$0xff pattern:$0x67452301]
  %360 = vrot.lane.b32.xlu0 %v359, 18
  %v361 = vpop.permute.xlu0 %360
  %vm362 = vcmask 138240
  %s363 = scalar_lea.vmem %s1, 230
  %364 = vst.msk [vmem:[%s363] ss:$-24 sm:$0x3] %vm362, %v361
  %s365 = scalar_lea.vmem %s1, 326
  %366 = vst.msk [vmem:[%s365] ss:$-24 sm:$0xc] %vm362, %v361
  %s367 = scalar_lea.vmem %s1, 422
  %368 = vst.msk [vmem:[%s367] ss:$-24 sm:$0x30] %vm362, %v361
  %s369 = scalar_lea.vmem %s1, 518
  %370 = vst.msk [vmem:[%s369] ss:$-24 sm:$0xc0] %vm362, %v361
  %v371 = vld.sshfl [vmem:[%s0] sm:$0xff pattern:$0x56741230]
  %s372 = scalar_lea.vmem %s0, 8
  %v373 = vld.sshfl [vmem:[%s372] sm:$0xff pattern:$0x56741230]
  %vm374 = vcmask 973824
  %v375 = vsel %vm374, %v373, %v371
  %376 = vrot.lane.b32.xlu0 %v375, 9
  %v377 = vpop.permute.xlu0 %376
  %vm378 = vcmask 72704
  %s379 = scalar_lea.vmem %s1, 7
  %380 = vst.msk [vmem:[%s379] ss:$72 sm:$0x3] %vm378, %v377
  %s381 = scalar_lea.vmem %s1, 103
  %382 = vst.msk [vmem:[%s381] ss:$-24 sm:$0xc] %vm378, %v377
  %s383 = scalar_lea.vmem %s1, 4294967111
  %384 = vst.msk [vmem:[%s383] ss:$72 sm:$0x30] %vm378, %v377
  %s385 = scalar_lea.vmem %s1, 295
  %386 = vst.msk [vmem:[%s385] ss:$-24 sm:$0xc0] %vm378, %v377
  %vm387 = vcmask 138312
  %s388 = scalar_lea.vmem %s1, 7
  %389 = vst.msk [vmem:[%s388] ss:$72 sm:$0x3] %vm387, %v377
  %s390 = scalar_lea.vmem %s1, 103
  %391 = vst.msk [vmem:[%s390] ss:$-24 sm:$0xc] %vm387, %v377
  %s392 = scalar_lea.vmem %s1, 4294967111
  %393 = vst.msk [vmem:[%s392] ss:$72 sm:$0x30] %vm387, %v377
  %s394 = scalar_lea.vmem %s1, 295
  %395 = vst.msk [vmem:[%s394] ss:$-24 sm:$0xc0] %vm387, %v377
  %s396 = scalar_lea.vmem %s0, 24
  %v397 = vld.sshfl [vmem:[%s396] sm:$0xff pattern:$0x56741230]
  %s398 = scalar_lea.vmem %s0, 32
  %v399 = vld.sshfl [vmem:[%s398] sm:$0xff pattern:$0x56741230]
  %vm400 = vcmask 973824
  %v401 = vsel %vm400, %v399, %v397
  %402 = vrot.lane.b32.xlu0 %v401, 9
  %v403 = vpop.permute.xlu0 %402
  %vm404 = vcmask 72704
  %s405 = scalar_lea.vmem %s1, 199
  %406 = vst.msk [vmem:[%s405] ss:$72 sm:$0x3] %vm404, %v403
  %s407 = scalar_lea.vmem %s1, 295
  %408 = vst.msk [vmem:[%s407] ss:$-24 sm:$0xc] %vm404, %v403
  %s409 = scalar_lea.vmem %s1, 7
  %410 = vst.msk [vmem:[%s409] ss:$72 sm:$0x30] %vm404, %v403
  %s411 = scalar_lea.vmem %s1, 487
  %412 = vst.msk [vmem:[%s411] ss:$-24 sm:$0xc0] %vm404, %v403
  %vm413 = vcmask 138312
  %s414 = scalar_lea.vmem %s1, 199
  %415 = vst.msk [vmem:[%s414] ss:$72 sm:$0x3] %vm413, %v403
  %s416 = scalar_lea.vmem %s1, 295
  %417 = vst.msk [vmem:[%s416] ss:$-24 sm:$0xc] %vm413, %v403
  %s418 = scalar_lea.vmem %s1, 7
  %419 = vst.msk [vmem:[%s418] ss:$72 sm:$0x30] %vm413, %v403
  %s420 = scalar_lea.vmem %s1, 487
  %421 = vst.msk [vmem:[%s420] ss:$-24 sm:$0xc0] %vm413, %v403
  %s422 = scalar_lea.vmem %s0, 8
  %v423 = vld.sshfl [vmem:[%s422] sm:$0xff pattern:$0x67452301]
  %s424 = scalar_lea.vmem %s0, 16
  %v425 = vld.sshfl [vmem:[%s424] sm:$0xff pattern:$0x67452301]
  %vm426 = vcmask 1039360
  %v427 = vsel %vm426, %v425, %v423
  %428 = vrot.lane.b32.xlu0 %v427, 1
  %v429 = vpop.permute.xlu0 %428
  %vm430 = vcmask 7168
  %s431 = scalar_lea.vmem %s1, 39
  %432 = vst.msk [vmem:[%s431] ss:$-24 sm:$0x3] %vm430, %v429
  %s433 = scalar_lea.vmem %s1, 135
  %434 = vst.msk [vmem:[%s433] ss:$-24 sm:$0xc] %vm430, %v429
  %s435 = scalar_lea.vmem %s1, 231
  %436 = vst.msk [vmem:[%s435] ss:$-24 sm:$0x30] %vm430, %v429
  %s437 = scalar_lea.vmem %s1, 327
  %438 = vst.msk [vmem:[%s437] ss:$-24 sm:$0xc0] %vm430, %v429
  %vm439 = vcmask 138248
  %s440 = scalar_lea.vmem %s1, 39
  %441 = vst.msk [vmem:[%s440] ss:$-24 sm:$0x3] %vm439, %v429
  %s442 = scalar_lea.vmem %s1, 135
  %443 = vst.msk [vmem:[%s442] ss:$-24 sm:$0xc] %vm439, %v429
  %s444 = scalar_lea.vmem %s1, 231
  %445 = vst.msk [vmem:[%s444] ss:$-24 sm:$0x30] %vm439, %v429
  %s446 = scalar_lea.vmem %s1, 327
  %447 = vst.msk [vmem:[%s446] ss:$-24 sm:$0xc0] %vm439, %v429
  %s448 = scalar_lea.vmem %s0, 32
  %v449 = vld.sshfl [vmem:[%s448] sm:$0xff pattern:$0x67452301]
  %s450 = scalar_lea.vmem %s0, 40
  %v451 = vld.sshfl [vmem:[%s450] sm:$0xff pattern:$0x67452301]
  %vm452 = vcmask 1039360
  %v453 = vsel %vm452, %v451, %v449
  %454 = vrot.lane.b32.xlu0 %v453, 1
  %v455 = vpop.permute.xlu0 %454
  %vm456 = vcmask 7168
  %s457 = scalar_lea.vmem %s1, 231
  %458 = vst.msk [vmem:[%s457] ss:$-24 sm:$0x3] %vm456, %v455
  %s459 = scalar_lea.vmem %s1, 327
  %460 = vst.msk [vmem:[%s459] ss:$-24 sm:$0xc] %vm456, %v455
  %s461 = scalar_lea.vmem %s1, 423
  %462 = vst.msk [vmem:[%s461] ss:$-24 sm:$0x30] %vm456, %v455
  %s463 = scalar_lea.vmem %s1, 519
  %464 = vst.msk [vmem:[%s463] ss:$-24 sm:$0xc0] %vm456, %v455
  %vm465 = vcmask 138248
  %s466 = scalar_lea.vmem %s1, 231
  %467 = vst.msk [vmem:[%s466] ss:$-24 sm:$0x3] %vm465, %v455
  %s468 = scalar_lea.vmem %s1, 327
  %469 = vst.msk [vmem:[%s468] ss:$-24 sm:$0xc] %vm465, %v455
  %s470 = scalar_lea.vmem %s1, 423
  %471 = vst.msk [vmem:[%s470] ss:$-24 sm:$0x30] %vm465, %v455
  %s472 = scalar_lea.vmem %s1, 519
  %473 = vst.msk [vmem:[%s472] ss:$-24 sm:$0xc0] %vm465, %v455

// kernel: squeeze.5
$region0: #{squeeze.5}
  %s0 = inlined_call_operand.vmem [shape: f32[2,1,8,272], index: 0, kind: input, shape index: {}]
  %s1 = inlined_call_operand.vmem [shape: f32[2,8,17,16], index: 1, kind: output, shape index: {}]
  %v2 = vld [vmem:[%s0] sm:$0xff]
  %vm3 = vcmask 130048
  %4 = vst.msk [vmem:[%s1] ss:$24 sm:$0xf] %vm3, %v2
  %5 = vst.msk [vmem:[%s1] ss:$24 sm:$0xf0] %vm3, %v2
  %s6 = scalar_lea.vmem %s0, 8
  %v7 = vld [vmem:[%s6] sm:$0xff]
  %vm8 = vcmask 130048
  %s9 = scalar_lea.vmem %s1, 8
  %10 = vst.msk [vmem:[%s9] ss:$24 sm:$0xf] %vm8, %v7
  %s11 = scalar_lea.vmem %s1, 8
  %12 = vst.msk [vmem:[%s11] ss:$24 sm:$0xf0] %vm8, %v7
  %s13 = scalar_lea.vmem %s0, 16
  %v14 = vld [vmem:[%s13] sm:$0xff]
  %vm15 = vcmask 130048
  %s16 = scalar_lea.vmem %s1, 16
  %17 = vst.msk [vmem:[%s16] ss:$24 sm:$0xf] %vm15, %v14
  %s18 = scalar_lea.vmem %s1, 16
  %19 = vst.msk [vmem:[%s18] ss:$24 sm:$0xf0] %vm15, %v14
  %s20 = scalar_lea.vmem %s0, 24
  %v21 = vld [vmem:[%s20] sm:$0xff]
  %vm22 = vcmask 130048
  %s23 = scalar_lea.vmem %s1, 192
  %24 = vst.msk [vmem:[%s23] ss:$24 sm:$0xf] %vm22, %v21
  %s25 = scalar_lea.vmem %s1, 192
  %26 = vst.msk [vmem:[%s25] ss:$24 sm:$0xf0] %vm22, %v21
  %s27 = scalar_lea.vmem %s0, 32
  %v28 = vld [vmem:[%s27] sm:$0xff]
  %vm29 = vcmask 130048
  %s30 = scalar_lea.vmem %s1, 200
  %31 = vst.msk [vmem:[%s30] ss:$24 sm:$0xf] %vm29, %v28
  %s32 = scalar_lea.vmem %s1, 200
  %33 = vst.msk [vmem:[%s32] ss:$24 sm:$0xf0] %vm29, %v28
  %s34 = scalar_lea.vmem %s0, 40
  %v35 = vld [vmem:[%s34] sm:$0xff]
  %vm36 = vcmask 130048
  %s37 = scalar_lea.vmem %s1, 208
  %38 = vst.msk [vmem:[%s37] ss:$24 sm:$0xf] %vm36, %v35
  %s39 = scalar_lea.vmem %s1, 208
  %40 = vst.msk [vmem:[%s39] ss:$24 sm:$0xf0] %vm36, %v35
  %v41 = vld.sshfl [vmem:[%s0] sm:$0xff pattern:$0x56741230]
  %42 = vrot.lane.b32.xlu0 %v41, 112
  %v43 = vpop.permute.xlu0 %42
  %vm44 = vcmask 130048
  %s45 = scalar_lea.vmem %s1, 1
  %46 = vst.msk [vmem:[%s45] ss:$72 sm:$0x3] %vm44, %v43
  %s47 = scalar_lea.vmem %s1, 97
  %48 = vst.msk [vmem:[%s47] ss:$-24 sm:$0xc] %vm44, %v43
  %s49 = scalar_lea.vmem %s1, 4294967105
  %50 = vst.msk [vmem:[%s49] ss:$72 sm:$0x30] %vm44, %v43
  %s51 = scalar_lea.vmem %s1, 289
  %52 = vst.msk [vmem:[%s51] ss:$-24 sm:$0xc0] %vm44, %v43
  %s53 = scalar_lea.vmem %s0, 8
  %v54 = vld.sshfl [vmem:[%s53] sm:$0xff pattern:$0x67452301]
  %55 = vrot.lane.b32.xlu0 %v54, 112
  %v56 = vpop.permute.xlu0 %55
  %vm57 = vcmask 130048
  %s58 = scalar_lea.vmem %s1, 33
  %59 = vst.msk [vmem:[%s58] ss:$-24 sm:$0x3] %vm57, %v56
  %s60 = scalar_lea.vmem %s1, 129
  %61 = vst.msk [vmem:[%s60] ss:$-24 sm:$0xc] %vm57, %v56
  %s62 = scalar_lea.vmem %s1, 225
  %63 = vst.msk [vmem:[%s62] ss:$-24 sm:$0x30] %vm57, %v56
  %s64 = scalar_lea.vmem %s1, 321
  %65 = vst.msk [vmem:[%s64] ss:$-24 sm:$0xc0] %vm57, %v56
  %s66 = scalar_lea.vmem %s0, 24
  %v67 = vld.sshfl [vmem:[%s66] sm:$0xff pattern:$0x56741230]
  %68 = vrot.lane.b32.xlu0 %v67, 112
  %v69 = vpop.permute.xlu0 %68
  %vm70 = vcmask 130048
  %s71 = scalar_lea.vmem %s1, 193
  %72 = vst.msk [vmem:[%s71] ss:$72 sm:$0x3] %vm70, %v69
  %s73 = scalar_lea.vmem %s1, 289
  %74 = vst.msk [vmem:[%s73] ss:$-24 sm:$0xc] %vm70, %v69
  %s75 = scalar_lea.vmem %s1, 1
  %76 = vst.msk [vmem:[%s75] ss:$72 sm:$0x30] %vm70, %v69
  %s77 = scalar_lea.vmem %s1, 481
  %78 = vst.msk [vmem:[%s77] ss:$-24 sm:$0xc0] %vm70, %v69
  %s79 = scalar_lea.vmem %s0, 32
  %v80 = vld.sshfl [vmem:[%s79] sm:$0xff pattern:$0x67452301]
  %81 = vrot.lane.b32.xlu0 %v80, 112
  %v82 = vpop.permute.xlu0 %81
  %vm83 = vcmask 130048
  %s84 = scalar_lea.vmem %s1, 225
  %85 = vst.msk [vmem:[%s84] ss:$-24 sm:$0x3] %vm83, %v82
  %s86 = scalar_lea.vmem %s1, 321
  %87 = vst.msk [vmem:[%s86] ss:$-24 sm:$0xc] %vm83, %v82
  %s88 = scalar_lea.vmem %s1, 417
  %89 = vst.msk [vmem:[%s88] ss:$-24 sm:$0x30] %vm83, %v82
  %s90 = scalar_lea.vmem %s1, 513
  %91 = vst.msk [vmem:[%s90] ss:$-24 sm:$0xc0] %vm83, %v82
  %v92 = vld.sshfl [vmem:[%s0] sm:$0xff pattern:$0x56741230]
  %93 = vrot.lane.b32.xlu0 %v92, 96
  %v94 = vpop.permute.xlu0 %93
  %vm95 = vcmask 130048
  %s96 = scalar_lea.vmem %s1, 2
  %97 = vst.msk [vmem:[%s96] ss:$72 sm:$0x3] %vm95, %v94
  %s98 = scalar_lea.vmem %s1, 98
  %99 = vst.msk [vmem:[%s98] ss:$-24 sm:$0xc] %vm95, %v94
  %s100 = scalar_lea.vmem %s1, 4294967106
  %101 = vst.msk [vmem:[%s100] ss:$72 sm:$0x30] %vm95, %v94
  %s102 = scalar_lea.vmem %s1, 290
  %103 = vst.msk [vmem:[%s102] ss:$-24 sm:$0xc0] %vm95, %v94
  %s104 = scalar_lea.vmem %s0, 8
  %v105 = vld.sshfl [vmem:[%s104] sm:$0xff pattern:$0x67452301]
  %106 = vrot.lane.b32.xlu0 %v105, 96
  %v107 = vpop.permute.xlu0 %106
  %vm108 = vcmask 130048
  %s109 = scalar_lea.vmem %s1, 34
  %110 = vst.msk [vmem:[%s109] ss:$-24 sm:$0x3] %vm108, %v107
  %s111 = scalar_lea.vmem %s1, 130
  %112 = vst.msk [vmem:[%s111] ss:$-24 sm:$0xc] %vm108, %v107
  %s113 = scalar_lea.vmem %s1, 226
  %114 = vst.msk [vmem:[%s113] ss:$-24 sm:$0x30] %vm108, %v107
  %s115 = scalar_lea.vmem %s1, 322
  %116 = vst.msk [vmem:[%s115] ss:$-24 sm:$0xc0] %vm108, %v107
  %s117 = scalar_lea.vmem %s0, 24
  %v118 = vld.sshfl [vmem:[%s117] sm:$0xff pattern:$0x56741230]
  %119 = vrot.lane.b32.xlu0 %v118, 96
  %v120 = vpop.permute.xlu0 %119
  %vm121 = vcmask 130048
  %s122 = scalar_lea.vmem %s1, 194
  %123 = vst.msk [vmem:[%s122] ss:$72 sm:$0x3] %vm121, %v120
  %s124 = scalar_lea.vmem %s1, 290
  %125 = vst.msk [vmem:[%s124] ss:$-24 sm:$0xc] %vm121, %v120
  %s126 = scalar_lea.vmem %s1, 2
  %127 = vst.msk [vmem:[%s126] ss:$72 sm:$0x30] %vm121, %v120
  %s128 = scalar_lea.vmem %s1, 482
  %129 = vst.msk [vmem:[%s128] ss:$-24 sm:$0xc0] %vm121, %v120
  %s130 = scalar_lea.vmem %s0, 32
  %v131 = vld.sshfl [vmem:[%s130] sm:$0xff pattern:$0x67452301]
  %132 = vrot.lane.b32.xlu0 %v131, 96
  %v133 = vpop.permute.xlu0 %132
  %vm134 = vcmask 130048
  %s135 = scalar_lea.vmem %s1, 226
  %136 = vst.msk [vmem:[%s135] ss:$-24 sm:$0x3] %vm134, %v133
  %s137 = scalar_lea.vmem %s1, 322
  %138 = vst.msk [vmem:[%s137] ss:$-24 sm:$0xc] %vm134, %v133
  %s139 = scalar_lea.vmem %s1, 418
  %140 = vst.msk [vmem:[%s139] ss:$-24 sm:$0x30] %vm134, %v133
  %s141 = scalar_lea.vmem %s1, 514
  %142 = vst.msk [vmem:[%s141] ss:$-24 sm:$0xc0] %vm134, %v133
  %v143 = vld.sshfl [vmem:[%s0] sm:$0xff pattern:$0x56741230]
  %144 = vrot.lane.b32.xlu0 %v143, 80
  %v145 = vpop.permute.xlu0 %144
  %vm146 = vcmask 130048
  %s147 = scalar_lea.vmem %s1, 3
  %148 = vst.msk [vmem:[%s147] ss:$72 sm:$0x3] %vm146, %v145
  %s149 = scalar_lea.vmem %s1, 99
  %150 = vst.msk [vmem:[%s149] ss:$-24 sm:$0xc] %vm146, %v145
  %s151 = scalar_lea.vmem %s1, 4294967107
  %152 = vst.msk [vmem:[%s151] ss:$72 sm:$0x30] %vm146, %v145
  %s153 = scalar_lea.vmem %s1, 291
  %154 = vst.msk [vmem:[%s153] ss:$-24 sm:$0xc0] %vm146, %v145
  %s155 = scalar_lea.vmem %s0, 8
  %v156 = vld.sshfl [vmem:[%s155] sm:$0xff pattern:$0x67452301]
  %157 = vrot.lane.b32.xlu0 %v156, 80
  %v158 = vpop.permute.xlu0 %157
  %vm159 = vcmask 130048
  %s160 = scalar_lea.vmem %s1, 35
  %161 = vst.msk [vmem:[%s160] ss:$-24 sm:$0x3] %vm159, %v158
  %s162 = scalar_lea.vmem %s1, 131
  %163 = vst.msk [vmem:[%s162] ss:$-24 sm:$0xc] %vm159, %v158
  %s164 = scalar_lea.vmem %s1, 227
  %165 = vst.msk [vmem:[%s164] ss:$-24 sm:$0x30] %vm159, %v158
  %s166 = scalar_lea.vmem %s1, 323
  %167 = vst.msk [vmem:[%s166] ss:$-24 sm:$0xc0] %vm159, %v158
  %s168 = scalar_lea.vmem %s0, 24
  %v169 = vld.sshfl [vmem:[%s168] sm:$0xff pattern:$0x56741230]
  %170 = vrot.lane.b32.xlu0 %v169, 80
  %v171 = vpop.permute.xlu0 %170
  %vm172 = vcmask 130048
  %s173 = scalar_lea.vmem %s1, 195
  %174 = vst.msk [vmem:[%s173] ss:$72 sm:$0x3] %vm172, %v171
  %s175 = scalar_lea.vmem %s1, 291
  %176 = vst.msk [vmem:[%s175] ss:$-24 sm:$0xc] %vm172, %v171
  %s177 = scalar_lea.vmem %s1, 3
  %178 = vst.msk [vmem:[%s177] ss:$72 sm:$0x30] %vm172, %v171
  %s179 = scalar_lea.vmem %s1, 483
  %180 = vst.msk [vmem:[%s179] ss:$-24 sm:$0xc0] %vm172, %v171
  %s181 = scalar_lea.vmem %s0, 32
  %v182 = vld.sshfl [vmem:[%s181] sm:$0xff pattern:$0x67452301]
  %183 = vrot.lane.b32.xlu0 %v182, 80
  %v184 = vpop.permute.xlu0 %183
  %vm185 = vcmask 130048
  %s186 = scalar_lea.vmem %s1, 227
  %187 = vst.msk [vmem:[%s186] ss:$-24 sm:$0x3] %vm185, %v184
  %s188 = scalar_lea.vmem %s1, 323
  %189 = vst.msk [vmem:[%s188] ss:$-24 sm:$0xc] %vm185, %v184
  %s190 = scalar_lea.vmem %s1, 419
  %191 = vst.msk [vmem:[%s190] ss:$-24 sm:$0x30] %vm185, %v184
  %s192 = scalar_lea.vmem %s1, 515
  %193 = vst.msk [vmem:[%s192] ss:$-24 sm:$0xc0] %vm185, %v184
  %v194 = vld.sshfl [vmem:[%s0] sm:$0xff pattern:$0x56741230]
  %195 = vrot.lane.b32.xlu0 %v194, 64
  %v196 = vpop.permute.xlu0 %195
  %vm197 = vcmask 130048
  %s198 = scalar_lea.vmem %s1, 4
  %199 = vst.msk [vmem:[%s198] ss:$72 sm:$0x3] %vm197, %v196
  %s200 = scalar_lea.vmem %s1, 100
  %201 = vst.msk [vmem:[%s200] ss:$-24 sm:$0xc] %vm197, %v196
  %s202 = scalar_lea.vmem %s1, 4294967108
  %203 = vst.msk [vmem:[%s202] ss:$72 sm:$0x30] %vm197, %v196
  %s204 = scalar_lea.vmem %s1, 292
  %205 = vst.msk [vmem:[%s204] ss:$-24 sm:$0xc0] %vm197, %v196
  %s206 = scalar_lea.vmem %s0, 8
  %v207 = vld.sshfl [vmem:[%s206] sm:$0xff pattern:$0x67452301]
  %208 = vrot.lane.b32.xlu0 %v207, 64
  %v209 = vpop.permute.xlu0 %208
  %vm210 = vcmask 130048
  %s211 = scalar_lea.vmem %s1, 36
  %212 = vst.msk [vmem:[%s211] ss:$-24 sm:$0x3] %vm210, %v209
  %s213 = scalar_lea.vmem %s1, 132
  %214 = vst.msk [vmem:[%s213] ss:$-24 sm:$0xc] %vm210, %v209
  %s215 = scalar_lea.vmem %s1, 228
  %216 = vst.msk [vmem:[%s215] ss:$-24 sm:$0x30] %vm210, %v209
  %s217 = scalar_lea.vmem %s1, 324
  %218 = vst.msk [vmem:[%s217] ss:$-24 sm:$0xc0] %vm210, %v209
  %s219 = scalar_lea.vmem %s0, 24
  %v220 = vld.sshfl [vmem:[%s219] sm:$0xff pattern:$0x56741230]
  %221 = vrot.lane.b32.xlu0 %v220, 64
  %v222 = vpop.permute.xlu0 %221
  %vm223 = vcmask 130048
  %s224 = scalar_lea.vmem %s1, 196
  %225 = vst.msk [vmem:[%s224] ss:$72 sm:$0x3] %vm223, %v222
  %s226 = scalar_lea.vmem %s1, 292
  %227 = vst.msk [vmem:[%s226] ss:$-24 sm:$0xc] %vm223, %v222
  %s228 = scalar_lea.vmem %s1, 4
  %229 = vst.msk [vmem:[%s228] ss:$72 sm:$0x30] %vm223, %v222
  %s230 = scalar_lea.vmem %s1, 484
  %231 = vst.msk [vmem:[%s230] ss:$-24 sm:$0xc0] %vm223, %v222
  %s232 = scalar_lea.vmem %s0, 32
  %v233 = vld.sshfl [vmem:[%s232] sm:$0xff pattern:$0x67452301]
  %234 = vrot.lane.b32.xlu0 %v233, 64
  %v235 = vpop.permute.xlu0 %234
  %vm236 = vcmask 130048
  %s237 = scalar_lea.vmem %s1, 228
  %238 = vst.msk [vmem:[%s237] ss:$-24 sm:$0x3] %vm236, %v235
  %s239 = scalar_lea.vmem %s1, 324
  %240 = vst.msk [vmem:[%s239] ss:$-24 sm:$0xc] %vm236, %v235
  %s241 = scalar_lea.vmem %s1, 420
  %242 = vst.msk [vmem:[%s241] ss:$-24 sm:$0x30] %vm236, %v235
  %s243 = scalar_lea.vmem %s1, 516
  %244 = vst.msk [vmem:[%s243] ss:$-24 sm:$0xc0] %vm236, %v235
  %v245 = vld.sshfl [vmem:[%s0] sm:$0xff pattern:$0x56741230]
  %246 = vrot.lane.b32.xlu0 %v245, 48
  %v247 = vpop.permute.xlu0 %246
  %vm248 = vcmask 130048
  %s249 = scalar_lea.vmem %s1, 5
  %250 = vst.msk [vmem:[%s249] ss:$72 sm:$0x3] %vm248, %v247
  %s251 = scalar_lea.vmem %s1, 101
  %252 = vst.msk [vmem:[%s251] ss:$-24 sm:$0xc] %vm248, %v247
  %s253 = scalar_lea.vmem %s1, 4294967109
  %254 = vst.msk [vmem:[%s253] ss:$72 sm:$0x30] %vm248, %v247
  %s255 = scalar_lea.vmem %s1, 293
  %256 = vst.msk [vmem:[%s255] ss:$-24 sm:$0xc0] %vm248, %v247
  %s257 = scalar_lea.vmem %s0, 8
  %v258 = vld.sshfl [vmem:[%s257] sm:$0xff pattern:$0x67452301]
  %259 = vrot.lane.b32.xlu0 %v258, 48
  %v260 = vpop.permute.xlu0 %259
  %vm261 = vcmask 130048
  %s262 = scalar_lea.vmem %s1, 37
  %263 = vst.msk [vmem:[%s262] ss:$-24 sm:$0x3] %vm261, %v260
  %s264 = scalar_lea.vmem %s1, 133
  %265 = vst.msk [vmem:[%s264] ss:$-24 sm:$0xc] %vm261, %v260
  %s266 = scalar_lea.vmem %s1, 229
  %267 = vst.msk [vmem:[%s266] ss:$-24 sm:$0x30] %vm261, %v260
  %s268 = scalar_lea.vmem %s1, 325
  %269 = vst.msk [vmem:[%s268] ss:$-24 sm:$0xc0] %vm261, %v260
  %s270 = scalar_lea.vmem %s0, 24
  %v271 = vld.sshfl [vmem:[%s270] sm:$0xff pattern:$0x56741230]
  %272 = vrot.lane.b32.xlu0 %v271, 48
  %v273 = vpop.permute.xlu0 %272
  %vm274 = vcmask 130048
  %s275 = scalar_lea.vmem %s1, 197
  %276 = vst.msk [vmem:[%s275] ss:$72 sm:$0x3] %vm274, %v273
  %s277 = scalar_lea.vmem %s1, 293
  %278 = vst.msk [vmem:[%s277] ss:$-24 sm:$0xc] %vm274, %v273
  %s279 = scalar_lea.vmem %s1, 5
  %280 = vst.msk [vmem:[%s279] ss:$72 sm:$0x30] %vm274, %v273
  %s281 = scalar_lea.vmem %s1, 485
  %282 = vst.msk [vmem:[%s281] ss:$-24 sm:$0xc0] %vm274, %v273
  %s283 = scalar_lea.vmem %s0, 32
  %v284 = vld.sshfl [vmem:[%s283] sm:$0xff pattern:$0x67452301]
  %285 = vrot.lane.b32.xlu0 %v284, 48
  %v286 = vpop.permute.xlu0 %285
  %vm287 = vcmask 130048
  %s288 = scalar_lea.vmem %s1, 229
  %289 = vst.msk [vmem:[%s288] ss:$-24 sm:$0x3] %vm287, %v286
  %s290 = scalar_lea.vmem %s1, 325
  %291 = vst.msk [vmem:[%s290] ss:$-24 sm:$0xc] %vm287, %v286
  %s292 = scalar_lea.vmem %s1, 421
  %293 = vst.msk [vmem:[%s292] ss:$-24 sm:$0x30] %vm287, %v286
  %s294 = scalar_lea.vmem %s1, 517
  %295 = vst.msk [vmem:[%s294] ss:$-24 sm:$0xc0] %vm287, %v286
  %v296 = vld.sshfl [vmem:[%s0] sm:$0xff pattern:$0x56741230]
  %297 = vrot.lane.b32.xlu0 %v296, 32
  %v298 = vpop.permute.xlu0 %297
  %vm299 = vcmask 130048
  %s300 = scalar_lea.vmem %s1, 6
  %301 = vst.msk [vmem:[%s300] ss:$72 sm:$0x3] %vm299, %v298
  %s302 = scalar_lea.vmem %s1, 102
  %303 = vst.msk [vmem:[%s302] ss:$-24 sm:$0xc] %vm299, %v298
  %s304 = scalar_lea.vmem %s1, 4294967110
  %305 = vst.msk [vmem:[%s304] ss:$72 sm:$0x30] %vm299, %v298
  %s306 = scalar_lea.vmem %s1, 294
  %307 = vst.msk [vmem:[%s306] ss:$-24 sm:$0xc0] %vm299, %v298
  %s308 = scalar_lea.vmem %s0, 8
  %v309 = vld.sshfl [vmem:[%s308] sm:$0xff pattern:$0x67452301]
  %310 = vrot.lane.b32.xlu0 %v309, 32
  %v311 = vpop.permute.xlu0 %310
  %vm312 = vcmask 130048
  %s313 = scalar_lea.vmem %s1, 38
  %314 = vst.msk [vmem:[%s313] ss:$-24 sm:$0x3] %vm312, %v311
  %s315 = scalar_lea.vmem %s1, 134
  %316 = vst.msk [vmem:[%s315] ss:$-24 sm:$0xc] %vm312, %v311
  %s317 = scalar_lea.vmem %s1, 230
  %318 = vst.msk [vmem:[%s317] ss:$-24 sm:$0x30] %vm312, %v311
  %s319 = scalar_lea.vmem %s1, 326
  %320 = vst.msk [vmem:[%s319] ss:$-24 sm:$0xc0] %vm312, %v311
  %s321 = scalar_lea.vmem %s0, 24
  %v322 = vld.sshfl [vmem:[%s321] sm:$0xff pattern:$0x56741230]
  %323 = vrot.lane.b32.xlu0 %v322, 32
  %v324 = vpop.permute.xlu0 %323
  %vm325 = vcmask 130048
  %s326 = scalar_lea.vmem %s1, 198
  %327 = vst.msk [vmem:[%s326] ss:$72 sm:$0x3] %vm325, %v324
  %s328 = scalar_lea.vmem %s1, 294
  %329 = vst.msk [vmem:[%s328] ss:$-24 sm:$0xc] %vm325, %v324
  %s330 = scalar_lea.vmem %s1, 6
  %331 = vst.msk [vmem:[%s330] ss:$72 sm:$0x30] %vm325, %v324
  %s332 = scalar_lea.vmem %s1, 486
  %333 = vst.msk [vmem:[%s332] ss:$-24 sm:$0xc0] %vm325, %v324
  %s334 = scalar_lea.vmem %s0, 32
  %v335 = vld.sshfl [vmem:[%s334] sm:$0xff pattern:$0x67452301]
  %336 = vrot.lane.b32.xlu0 %v335, 32
  %v337 = vpop.permute.xlu0 %336
  %vm338 = vcmask 130048
  %s339 = scalar_lea.vmem %s1, 230
  %340 = vst.msk [vmem:[%s339] ss:$-24 sm:$0x3] %vm338, %v337
  %s341 = scalar_lea.vmem %s1, 326
  %342 = vst.msk [vmem:[%s341] ss:$-24 sm:$0xc] %vm338, %v337
  %s343 = scalar_lea.vmem %s1, 422
  %344 = vst.msk [vmem:[%s343] ss:$-24 sm:$0x30] %vm338, %v337
  %s345 = scalar_lea.vmem %s1, 518
  %346 = vst.msk [vmem:[%s345] ss:$-24 sm:$0xc0] %vm338, %v337
  %v347 = vld.sshfl [vmem:[%s0] sm:$0xff pattern:$0x56741230]
  %348 = vrot.lane.b32.xlu0 %v347, 16
  %v349 = vpop.permute.xlu0 %348
  %vm350 = vcmask 130048
  %s351 = scalar_lea.vmem %s1, 7
  %352 = vst.msk [vmem:[%s351] ss:$72 sm:$0x3] %vm350, %v349
  %s353 = scalar_lea.vmem %s1, 103
  %354 = vst.msk [vmem:[%s353] ss:$-24 sm:$0xc] %vm350, %v349
  %s355 = scalar_lea.vmem %s1, 4294967111
  %356 = vst.msk [vmem:[%s355] ss:$72 sm:$0x30] %vm350, %v349
  %s357 = scalar_lea.vmem %s1, 295
  %358 = vst.msk [vmem:[%s357] ss:$-24 sm:$0xc0] %vm350, %v349
  %s359 = scalar_lea.vmem %s0, 8
  %v360 = vld.sshfl [vmem:[%s359] sm:$0xff pattern:$0x67452301]
  %361 = vrot.lane.b32.xlu0 %v360, 16
  %v362 = vpop.permute.xlu0 %361
  %vm363 = vcmask 130048
  %s364 = scalar_lea.vmem %s1, 39
  %365 = vst.msk [vmem:[%s364] ss:$-24 sm:$0x3] %vm363, %v362
  %s366 = scalar_lea.vmem %s1, 135
  %367 = vst.msk [vmem:[%s366] ss:$-24 sm:$0xc] %vm363, %v362
  %s368 = scalar_lea.vmem %s1, 231
  %369 = vst.msk [vmem:[%s368] ss:$-24 sm:$0x30] %vm363, %v362
  %s370 = scalar_lea.vmem %s1, 327
  %371 = vst.msk [vmem:[%s370] ss:$-24 sm:$0xc0] %vm363, %v362
  %s372 = scalar_lea.vmem %s0, 24
  %v373 = vld.sshfl [vmem:[%s372] sm:$0xff pattern:$0x56741230]
  %374 = vrot.lane.b32.xlu0 %v373, 16
  %v375 = vpop.permute.xlu0 %374
  %vm376 = vcmask 130048
  %s377 = scalar_lea.vmem %s1, 199
  %378 = vst.msk [vmem:[%s377] ss:$72 sm:$0x3] %vm376, %v375
  %s379 = scalar_lea.vmem %s1, 295
  %380 = vst.msk [vmem:[%s379] ss:$-24 sm:$0xc] %vm376, %v375
  %s381 = scalar_lea.vmem %s1, 7
  %382 = vst.msk [vmem:[%s381] ss:$72 sm:$0x30] %vm376, %v375
  %s383 = scalar_lea.vmem %s1, 487
  %384 = vst.msk [vmem:[%s383] ss:$-24 sm:$0xc0] %vm376, %v375
  %s385 = scalar_lea.vmem %s0, 32
  %v386 = vld.sshfl [vmem:[%s385] sm:$0xff pattern:$0x67452301]
  %387 = vrot.lane.b32.xlu0 %v386, 16
  %v388 = vpop.permute.xlu0 %387
  %vm389 = vcmask 130048
  %s390 = scalar_lea.vmem %s1, 231
  %391 = vst.msk [vmem:[%s390] ss:$-24 sm:$0x3] %vm389, %v388
  %s392 = scalar_lea.vmem %s1, 327
  %393 = vst.msk [vmem:[%s392] ss:$-24 sm:$0xc] %vm389, %v388
  %s394 = scalar_lea.vmem %s1, 423
  %395 = vst.msk [vmem:[%s394] ss:$-24 sm:$0x30] %vm389, %v388
  %s396 = scalar_lea.vmem %s1, 519
  %397 = vst.msk [vmem:[%s396] ss:$-24 sm:$0xc0] %vm389, %v388

// kernel: squeeze.6
$region0: #{squeeze.6}
  %s0 = inlined_call_operand.vmem [shape: f32[2,1,8,272], index: 0, kind: input, shape index: {}]
  %s1 = inlined_call_operand.vmem [shape: f32[2,8,16,17], index: 1, kind: output, shape index: {}]
  %v2 = vld [vmem:[%s0] sm:$0xff]
  %vm3 = vcmask 138240
  %4 = vst.msk [vmem:[%s1] ss:$16 sm:$0x3] %vm3, %v2
  %5 = vst.msk [vmem:[%s1] ss:$16 sm:$0xc] %vm3, %v2
  %6 = vst.msk [vmem:[%s1] ss:$16 sm:$0x30] %vm3, %v2
  %7 = vst.msk [vmem:[%s1] ss:$16 sm:$0xc0] %vm3, %v2
  %s8 = scalar_lea.vmem %s0, 24
  %v9 = vld [vmem:[%s8] sm:$0xff]
  %vm10 = vcmask 138240
  %s11 = scalar_lea.vmem %s1, 128
  %12 = vst.msk [vmem:[%s11] ss:$16 sm:$0x3] %vm10, %v9
  %s13 = scalar_lea.vmem %s1, 128
  %14 = vst.msk [vmem:[%s13] ss:$16 sm:$0xc] %vm10, %v9
  %s15 = scalar_lea.vmem %s1, 128
  %16 = vst.msk [vmem:[%s15] ss:$16 sm:$0x30] %vm10, %v9
  %s17 = scalar_lea.vmem %s1, 128
  %18 = vst.msk [vmem:[%s17] ss:$16 sm:$0xc0] %vm10, %v9
  %s19 = scalar_lea.vmem %s0, 8
  %v20 = vld [vmem:[%s19] sm:$0xff]
  %21 = vrot.lane.b32.xlu0 %v20, 120
  %v22 = vpop.permute.xlu0 %21
  %vm23 = vcmask 138240
  %s24 = scalar_lea.vmem %s1, 8
  %25 = vst.msk [vmem:[%s24] ss:$16 sm:$0x3] %vm23, %v22
  %s26 = scalar_lea.vmem %s1, 8
  %27 = vst.msk [vmem:[%s26] ss:$16 sm:$0xc] %vm23, %v22
  %s28 = scalar_lea.vmem %s1, 8
  %29 = vst.msk [vmem:[%s28] ss:$16 sm:$0x30] %vm23, %v22
  %s30 = scalar_lea.vmem %s1, 8
  %31 = vst.msk [vmem:[%s30] ss:$16 sm:$0xc0] %vm23, %v22
  %s32 = scalar_lea.vmem %s0, 32
  %v33 = vld [vmem:[%s32] sm:$0xff]
  %34 = vrot.lane.b32.xlu0 %v33, 120
  %v35 = vpop.permute.xlu0 %34
  %vm36 = vcmask 138240
  %s37 = scalar_lea.vmem %s1, 136
  %38 = vst.msk [vmem:[%s37] ss:$16 sm:$0x3] %vm36, %v35
  %s39 = scalar_lea.vmem %s1, 136
  %40 = vst.msk [vmem:[%s39] ss:$16 sm:$0xc] %vm36, %v35
  %s41 = scalar_lea.vmem %s1, 136
  %42 = vst.msk [vmem:[%s41] ss:$16 sm:$0x30] %vm36, %v35
  %s43 = scalar_lea.vmem %s1, 136
  %44 = vst.msk [vmem:[%s43] ss:$16 sm:$0xc0] %vm36, %v35
  %v45 = vld [vmem:[%s0] sm:$0xff]
  %46 = vrot.lane.b32.xlu0 %v45, 111
  %v47 = vpop.permute.xlu0 %46
  %vm48 = vcmask 138240
  %s49 = scalar_lea.vmem %s1, 1
  %50 = vst.msk [vmem:[%s49] ss:$16 sm:$0x3] %vm48, %v47
  %s51 = scalar_lea.vmem %s1, 1
  %52 = vst.msk [vmem:[%s51] ss:$16 sm:$0xc] %vm48, %v47
  %s53 = scalar_lea.vmem %s1, 1
  %54 = vst.msk [vmem:[%s53] ss:$16 sm:$0x30] %vm48, %v47
  %s55 = scalar_lea.vmem %s1, 1
  %56 = vst.msk [vmem:[%s55] ss:$16 sm:$0xc0] %vm48, %v47
  %s57 = scalar_lea.vmem %s0, 24
  %v58 = vld [vmem:[%s57] sm:$0xff]
  %59 = vrot.lane.b32.xlu0 %v58, 111
  %v60 = vpop.permute.xlu0 %59
  %vm61 = vcmask 138240
  %s62 = scalar_lea.vmem %s1, 129
  %63 = vst.msk [vmem:[%s62] ss:$16 sm:$0x3] %vm61, %v60
  %s64 = scalar_lea.vmem %s1, 129
  %65 = vst.msk [vmem:[%s64] ss:$16 sm:$0xc] %vm61, %v60
  %s66 = scalar_lea.vmem %s1, 129
  %67 = vst.msk [vmem:[%s66] ss:$16 sm:$0x30] %vm61, %v60
  %s68 = scalar_lea.vmem %s1, 129
  %69 = vst.msk [vmem:[%s68] ss:$16 sm:$0xc0] %vm61, %v60
  %s70 = scalar_lea.vmem %s0, 8
  %v71 = vld [vmem:[%s70] sm:$0xff]
  %72 = vrot.lane.b32.xlu0 %v71, 103
  %v73 = vpop.permute.xlu0 %72
  %vm74 = vcmask 138240
  %s75 = scalar_lea.vmem %s1, 9
  %76 = vst.msk [vmem:[%s75] ss:$16 sm:$0x3] %vm74, %v73
  %s77 = scalar_lea.vmem %s1, 9
  %78 = vst.msk [vmem:[%s77] ss:$16 sm:$0xc] %vm74, %v73
  %s79 = scalar_lea.vmem %s1, 9
  %80 = vst.msk [vmem:[%s79] ss:$16 sm:$0x30] %vm74, %v73
  %s81 = scalar_lea.vmem %s1, 9
  %82 = vst.msk [vmem:[%s81] ss:$16 sm:$0xc0] %vm74, %v73
  %s83 = scalar_lea.vmem %s0, 32
  %v84 = vld [vmem:[%s83] sm:$0xff]
  %85 = vrot.lane.b32.xlu0 %v84, 103
  %v86 = vpop.permute.xlu0 %85
  %vm87 = vcmask 138240
  %s88 = scalar_lea.vmem %s1, 137
  %89 = vst.msk [vmem:[%s88] ss:$16 sm:$0x3] %vm87, %v86
  %s90 = scalar_lea.vmem %s1, 137
  %91 = vst.msk [vmem:[%s90] ss:$16 sm:$0xc] %vm87, %v86
  %s92 = scalar_lea.vmem %s1, 137
  %93 = vst.msk [vmem:[%s92] ss:$16 sm:$0x30] %vm87, %v86
  %s94 = scalar_lea.vmem %s1, 137
  %95 = vst.msk [vmem:[%s94] ss:$16 sm:$0xc0] %vm87, %v86
  %v96 = vld [vmem:[%s0] sm:$0xff]
  %97 = vrot.lane.b32.xlu0 %v96, 94
  %v98 = vpop.permute.xlu0 %97
  %vm99 = vcmask 138240
  %s100 = scalar_lea.vmem %s1, 2
  %101 = vst.msk [vmem:[%s100] ss:$16 sm:$0x3] %vm99, %v98
  %s102 = scalar_lea.vmem %s1, 2
  %103 = vst.msk [vmem:[%s102] ss:$16 sm:$0xc] %vm99, %v98
  %s104 = scalar_lea.vmem %s1, 2
  %105 = vst.msk [vmem:[%s104] ss:$16 sm:$0x30] %vm99, %v98
  %s106 = scalar_lea.vmem %s1, 2
  %107 = vst.msk [vmem:[%s106] ss:$16 sm:$0xc0] %vm99, %v98
  %s108 = scalar_lea.vmem %s0, 24
  %v109 = vld [vmem:[%s108] sm:$0xff]
  %110 = vrot.lane.b32.xlu0 %v109, 94
  %v111 = vpop.permute.xlu0 %110
  %vm112 = vcmask 138240
  %s113 = scalar_lea.vmem %s1, 130
  %114 = vst.msk [vmem:[%s113] ss:$16 sm:$0x3] %vm112, %v111
  %s115 = scalar_lea.vmem %s1, 130
  %116 = vst.msk [vmem:[%s115] ss:$16 sm:$0xc] %vm112, %v111
  %s117 = scalar_lea.vmem %s1, 130
  %118 = vst.msk [vmem:[%s117] ss:$16 sm:$0x30] %vm112, %v111
  %s119 = scalar_lea.vmem %s1, 130
  %120 = vst.msk [vmem:[%s119] ss:$16 sm:$0xc0] %vm112, %v111
  %s121 = scalar_lea.vmem %s0, 8
  %v122 = vld [vmem:[%s121] sm:$0xff]
  %123 = vrot.lane.b32.xlu0 %v122, 86
  %v124 = vpop.permute.xlu0 %123
  %vm125 = vcmask 138240
  %s126 = scalar_lea.vmem %s1, 10
  %127 = vst.msk [vmem:[%s126] ss:$16 sm:$0x3] %vm125, %v124
  %s128 = scalar_lea.vmem %s1, 10
  %129 = vst.msk [vmem:[%s128] ss:$16 sm:$0xc] %vm125, %v124
  %s130 = scalar_lea.vmem %s1, 10
  %131 = vst.msk [vmem:[%s130] ss:$16 sm:$0x30] %vm125, %v124
  %s132 = scalar_lea.vmem %s1, 10
  %133 = vst.msk [vmem:[%s132] ss:$16 sm:$0xc0] %vm125, %v124
  %s134 = scalar_lea.vmem %s0, 32
  %v135 = vld [vmem:[%s134] sm:$0xff]
  %136 = vrot.lane.b32.xlu0 %v135, 86
  %v137 = vpop.permute.xlu0 %136
  %vm138 = vcmask 138240
  %s139 = scalar_lea.vmem %s1, 138
  %140 = vst.msk [vmem:[%s139] ss:$16 sm:$0x3] %vm138, %v137
  %s141 = scalar_lea.vmem %s1, 138
  %142 = vst.msk [vmem:[%s141] ss:$16 sm:$0xc] %vm138, %v137
  %s143 = scalar_lea.vmem %s1, 138
  %144 = vst.msk [vmem:[%s143] ss:$16 sm:$0x30] %vm138, %v137
  %s145 = scalar_lea.vmem %s1, 138
  %146 = vst.msk [vmem:[%s145] ss:$16 sm:$0xc0] %vm138, %v137
  %v147 = vld [vmem:[%s0] sm:$0xff]
  %148 = vrot.lane.b32.xlu0 %v147, 77
  %v149 = vpop.permute.xlu0 %148
  %vm150 = vcmask 138240
  %s151 = scalar_lea.vmem %s1, 3
  %152 = vst.msk [vmem:[%s151] ss:$16 sm:$0x3] %vm150, %v149
  %s153 = scalar_lea.vmem %s1, 3
  %154 = vst.msk [vmem:[%s153] ss:$16 sm:$0xc] %vm150, %v149
  %s155 = scalar_lea.vmem %s1, 3
  %156 = vst.msk [vmem:[%s155] ss:$16 sm:$0x30] %vm150, %v149
  %s157 = scalar_lea.vmem %s1, 3
  %158 = vst.msk [vmem:[%s157] ss:$16 sm:$0xc0] %vm150, %v149
  %s159 = scalar_lea.vmem %s0, 24
  %v160 = vld [vmem:[%s159] sm:$0xff]
  %161 = vrot.lane.b32.xlu0 %v160, 77
  %v162 = vpop.permute.xlu0 %161
  %vm163 = vcmask 138240
  %s164 = scalar_lea.vmem %s1, 131
  %165 = vst.msk [vmem:[%s164] ss:$16 sm:$0x3] %vm163, %v162
  %s166 = scalar_lea.vmem %s1, 131
  %167 = vst.msk [vmem:[%s166] ss:$16 sm:$0xc] %vm163, %v162
  %s168 = scalar_lea.vmem %s1, 131
  %169 = vst.msk [vmem:[%s168] ss:$16 sm:$0x30] %vm163, %v162
  %s170 = scalar_lea.vmem %s1, 131
  %171 = vst.msk [vmem:[%s170] ss:$16 sm:$0xc0] %vm163, %v162
  %s172 = scalar_lea.vmem %s0, 8
  %v173 = vld [vmem:[%s172] sm:$0xff]
  %174 = vrot.lane.b32.xlu0 %v173, 69
  %v175 = vpop.permute.xlu0 %174
  %vm176 = vcmask 138240
  %s177 = scalar_lea.vmem %s1, 11
  %178 = vst.msk [vmem:[%s177] ss:$16 sm:$0x3] %vm176, %v175
  %s179 = scalar_lea.vmem %s1, 11
  %180 = vst.msk [vmem:[%s179] ss:$16 sm:$0xc] %vm176, %v175
  %s181 = scalar_lea.vmem %s1, 11
  %182 = vst.msk [vmem:[%s181] ss:$16 sm:$0x30] %vm176, %v175
  %s183 = scalar_lea.vmem %s1, 11
  %184 = vst.msk [vmem:[%s183] ss:$16 sm:$0xc0] %vm176, %v175
  %s185 = scalar_lea.vmem %s0, 32
  %v186 = vld [vmem:[%s185] sm:$0xff]
  %187 = vrot.lane.b32.xlu0 %v186, 69
  %v188 = vpop.permute.xlu0 %187
  %vm189 = vcmask 138240
  %s190 = scalar_lea.vmem %s1, 139
  %191 = vst.msk [vmem:[%s190] ss:$16 sm:$0x3] %vm189, %v188
  %s192 = scalar_lea.vmem %s1, 139
  %193 = vst.msk [vmem:[%s192] ss:$16 sm:$0xc] %vm189, %v188
  %s194 = scalar_lea.vmem %s1, 139
  %195 = vst.msk [vmem:[%s194] ss:$16 sm:$0x30] %vm189, %v188
  %s196 = scalar_lea.vmem %s1, 139
  %197 = vst.msk [vmem:[%s196] ss:$16 sm:$0xc0] %vm189, %v188
  %v198 = vld [vmem:[%s0] sm:$0xff]
  %199 = vrot.lane.b32.xlu0 %v198, 60
  %v200 = vpop.permute.xlu0 %199
  %vm201 = vcmask 138240
  %s202 = scalar_lea.vmem %s1, 4
  %203 = vst.msk [vmem:[%s202] ss:$16 sm:$0x3] %vm201, %v200
  %s204 = scalar_lea.vmem %s1, 4
  %205 = vst.msk [vmem:[%s204] ss:$16 sm:$0xc] %vm201, %v200
  %s206 = scalar_lea.vmem %s1, 4
  %207 = vst.msk [vmem:[%s206] ss:$16 sm:$0x30] %vm201, %v200
  %s208 = scalar_lea.vmem %s1, 4
  %209 = vst.msk [vmem:[%s208] ss:$16 sm:$0xc0] %vm201, %v200
  %s210 = scalar_lea.vmem %s0, 24
  %v211 = vld [vmem:[%s210] sm:$0xff]
  %212 = vrot.lane.b32.xlu0 %v211, 60
  %v213 = vpop.permute.xlu0 %212
  %vm214 = vcmask 138240
  %s215 = scalar_lea.vmem %s1, 132
  %216 = vst.msk [vmem:[%s215] ss:$16 sm:$0x3] %vm214, %v213
  %s217 = scalar_lea.vmem %s1, 132
  %218 = vst.msk [vmem:[%s217] ss:$16 sm:$0xc] %vm214, %v213
  %s219 = scalar_lea.vmem %s1, 132
  %220 = vst.msk [vmem:[%s219] ss:$16 sm:$0x30] %vm214, %v213
  %s221 = scalar_lea.vmem %s1, 132
  %222 = vst.msk [vmem:[%s221] ss:$16 sm:$0xc0] %vm214, %v213
  %s223 = scalar_lea.vmem %s0, 8
  %v224 = vld [vmem:[%s223] sm:$0xff]
  %225 = vrot.lane.b32.xlu0 %v224, 52
  %v226 = vpop.permute.xlu0 %225
  %vm227 = vcmask 138240
  %s228 = scalar_lea.vmem %s1, 12
  %229 = vst.msk [vmem:[%s228] ss:$16 sm:$0x3] %vm227, %v226
  %s230 = scalar_lea.vmem %s1, 12
  %231 = vst.msk [vmem:[%s230] ss:$16 sm:$0xc] %vm227, %v226
  %s232 = scalar_lea.vmem %s1, 12
  %233 = vst.msk [vmem:[%s232] ss:$16 sm:$0x30] %vm227, %v226
  %s234 = scalar_lea.vmem %s1, 12
  %235 = vst.msk [vmem:[%s234] ss:$16 sm:$0xc0] %vm227, %v226
  %s236 = scalar_lea.vmem %s0, 32
  %v237 = vld [vmem:[%s236] sm:$0xff]
  %238 = vrot.lane.b32.xlu0 %v237, 52
  %v239 = vpop.permute.xlu0 %238
  %vm240 = vcmask 138240
  %s241 = scalar_lea.vmem %s1, 140
  %242 = vst.msk [vmem:[%s241] ss:$16 sm:$0x3] %vm240, %v239
  %s243 = scalar_lea.vmem %s1, 140
  %244 = vst.msk [vmem:[%s243] ss:$16 sm:$0xc] %vm240, %v239
  %s245 = scalar_lea.vmem %s1, 140
  %246 = vst.msk [vmem:[%s245] ss:$16 sm:$0x30] %vm240, %v239
  %s247 = scalar_lea.vmem %s1, 140
  %248 = vst.msk [vmem:[%s247] ss:$16 sm:$0xc0] %vm240, %v239
  %v249 = vld [vmem:[%s0] sm:$0xff]
  %250 = vrot.lane.b32.xlu0 %v249, 43
  %v251 = vpop.permute.xlu0 %250
  %vm252 = vcmask 138240
  %s253 = scalar_lea.vmem %s1, 5
  %254 = vst.msk [vmem:[%s253] ss:$16 sm:$0x3] %vm252, %v251
  %s255 = scalar_lea.vmem %s1, 5
  %256 = vst.msk [vmem:[%s255] ss:$16 sm:$0xc] %vm252, %v251
  %s257 = scalar_lea.vmem %s1, 5
  %258 = vst.msk [vmem:[%s257] ss:$16 sm:$0x30] %vm252, %v251
  %s259 = scalar_lea.vmem %s1, 5
  %260 = vst.msk [vmem:[%s259] ss:$16 sm:$0xc0] %vm252, %v251
  %s261 = scalar_lea.vmem %s0, 24
  %v262 = vld [vmem:[%s261] sm:$0xff]
  %263 = vrot.lane.b32.xlu0 %v262, 43
  %v264 = vpop.permute.xlu0 %263
  %vm265 = vcmask 138240
  %s266 = scalar_lea.vmem %s1, 133
  %267 = vst.msk [vmem:[%s266] ss:$16 sm:$0x3] %vm265, %v264
  %s268 = scalar_lea.vmem %s1, 133
  %269 = vst.msk [vmem:[%s268] ss:$16 sm:$0xc] %vm265, %v264
  %s270 = scalar_lea.vmem %s1, 133
  %271 = vst.msk [vmem:[%s270] ss:$16 sm:$0x30] %vm265, %v264
  %s272 = scalar_lea.vmem %s1, 133
  %273 = vst.msk [vmem:[%s272] ss:$16 sm:$0xc0] %vm265, %v264
  %s274 = scalar_lea.vmem %s0, 8
  %v275 = vld [vmem:[%s274] sm:$0xff]
  %276 = vrot.lane.b32.xlu0 %v275, 35
  %v277 = vpop.permute.xlu0 %276
  %vm278 = vcmask 138240
  %s279 = scalar_lea.vmem %s1, 13
  %280 = vst.msk [vmem:[%s279] ss:$16 sm:$0x3] %vm278, %v277
  %s281 = scalar_lea.vmem %s1, 13
  %282 = vst.msk [vmem:[%s281] ss:$16 sm:$0xc] %vm278, %v277
  %s283 = scalar_lea.vmem %s1, 13
  %284 = vst.msk [vmem:[%s283] ss:$16 sm:$0x30] %vm278, %v277
  %s285 = scalar_lea.vmem %s1, 13
  %286 = vst.msk [vmem:[%s285] ss:$16 sm:$0xc0] %vm278, %v277
  %s287 = scalar_lea.vmem %s0, 32
  %v288 = vld [vmem:[%s287] sm:$0xff]
  %289 = vrot.lane.b32.xlu0 %v288, 35
  %v290 = vpop.permute.xlu0 %289
  %vm291 = vcmask 138240
  %s292 = scalar_lea.vmem %s1, 141
  %293 = vst.msk [vmem:[%s292] ss:$16 sm:$0x3] %vm291, %v290
  %s294 = scalar_lea.vmem %s1, 141
  %295 = vst.msk [vmem:[%s294] ss:$16 sm:$0xc] %vm291, %v290
  %s296 = scalar_lea.vmem %s1, 141
  %297 = vst.msk [vmem:[%s296] ss:$16 sm:$0x30] %vm291, %v290
  %s298 = scalar_lea.vmem %s1, 141
  %299 = vst.msk [vmem:[%s298] ss:$16 sm:$0xc0] %vm291, %v290
  %v300 = vld [vmem:[%s0] sm:$0xff]
  %301 = vrot.lane.b32.xlu0 %v300, 26
  %v302 = vpop.permute.xlu0 %301
  %vm303 = vcmask 138240
  %s304 = scalar_lea.vmem %s1, 6
  %305 = vst.msk [vmem:[%s304] ss:$16 sm:$0x3] %vm303, %v302
  %s306 = scalar_lea.vmem %s1, 6
  %307 = vst.msk [vmem:[%s306] ss:$16 sm:$0xc] %vm303, %v302
  %s308 = scalar_lea.vmem %s1, 6
  %309 = vst.msk [vmem:[%s308] ss:$16 sm:$0x30] %vm303, %v302
  %s310 = scalar_lea.vmem %s1, 6
  %311 = vst.msk [vmem:[%s310] ss:$16 sm:$0xc0] %vm303, %v302
  %s312 = scalar_lea.vmem %s0, 24
  %v313 = vld [vmem:[%s312] sm:$0xff]
  %314 = vrot.lane.b32.xlu0 %v313, 26
  %v315 = vpop.permute.xlu0 %314
  %vm316 = vcmask 138240
  %s317 = scalar_lea.vmem %s1, 134
  %318 = vst.msk [vmem:[%s317] ss:$16 sm:$0x3] %vm316, %v315
  %s319 = scalar_lea.vmem %s1, 134
  %320 = vst.msk [vmem:[%s319] ss:$16 sm:$0xc] %vm316, %v315
  %s321 = scalar_lea.vmem %s1, 134
  %322 = vst.msk [vmem:[%s321] ss:$16 sm:$0x30] %vm316, %v315
  %s323 = scalar_lea.vmem %s1, 134
  %324 = vst.msk [vmem:[%s323] ss:$16 sm:$0xc0] %vm316, %v315
  %s325 = scalar_lea.vmem %s0, 8
  %v326 = vld [vmem:[%s325] sm:$0xff]
  %327 = vrot.lane.b32.xlu0 %v326, 18
  %v328 = vpop.permute.xlu0 %327
  %vm329 = vcmask 138240
  %s330 = scalar_lea.vmem %s1, 14
  %331 = vst.msk [vmem:[%s330] ss:$16 sm:$0x3] %vm329, %v328
  %s332 = scalar_lea.vmem %s1, 14
  %333 = vst.msk [vmem:[%s332] ss:$16 sm:$0xc] %vm329, %v328
  %s334 = scalar_lea.vmem %s1, 14
  %335 = vst.msk [vmem:[%s334] ss:$16 sm:$0x30] %vm329, %v328
  %s336 = scalar_lea.vmem %s1, 14
  %337 = vst.msk [vmem:[%s336] ss:$16 sm:$0xc0] %vm329, %v328
  %s338 = scalar_lea.vmem %s0, 32
  %v339 = vld [vmem:[%s338] sm:$0xff]
  %340 = vrot.lane.b32.xlu0 %v339, 18
  %v341 = vpop.permute.xlu0 %340
  %vm342 = vcmask 138240
  %s343 = scalar_lea.vmem %s1, 142
  %344 = vst.msk [vmem:[%s343] ss:$16 sm:$0x3] %vm342, %v341
  %s345 = scalar_lea.vmem %s1, 142
  %346 = vst.msk [vmem:[%s345] ss:$16 sm:$0xc] %vm342, %v341
  %s347 = scalar_lea.vmem %s1, 142
  %348 = vst.msk [vmem:[%s347] ss:$16 sm:$0x30] %vm342, %v341
  %s349 = scalar_lea.vmem %s1, 142
  %350 = vst.msk [vmem:[%s349] ss:$16 sm:$0xc0] %vm342, %v341
  %v351 = vld [vmem:[%s0] sm:$0xff]
  %s352 = scalar_lea.vmem %s0, 8
  %v353 = vld [vmem:[%s352] sm:$0xff]
  %vm354 = vcmask 973824
  %v355 = vsel %vm354, %v353, %v351
  %356 = vrot.lane.b32.xlu0 %v355, 9
  %v357 = vpop.permute.xlu0 %356
  %vm358 = vcmask 72704
  %s359 = scalar_lea.vmem %s1, 7
  %360 = vst.msk [vmem:[%s359] ss:$16 sm:$0x3] %vm358, %v357
  %s361 = scalar_lea.vmem %s1, 7
  %362 = vst.msk [vmem:[%s361] ss:$16 sm:$0xc] %vm358, %v357
  %s363 = scalar_lea.vmem %s1, 7
  %364 = vst.msk [vmem:[%s363] ss:$16 sm:$0x30] %vm358, %v357
  %s365 = scalar_lea.vmem %s1, 7
  %366 = vst.msk [vmem:[%s365] ss:$16 sm:$0xc0] %vm358, %v357
  %vm367 = vcmask 138312
  %s368 = scalar_lea.vmem %s1, 7
  %369 = vst.msk [vmem:[%s368] ss:$16 sm:$0x3] %vm367, %v357
  %s370 = scalar_lea.vmem %s1, 7
  %371 = vst.msk [vmem:[%s370] ss:$16 sm:$0xc] %vm367, %v357
  %s372 = scalar_lea.vmem %s1, 7
  %373 = vst.msk [vmem:[%s372] ss:$16 sm:$0x30] %vm367, %v357
  %s374 = scalar_lea.vmem %s1, 7
  %375 = vst.msk [vmem:[%s374] ss:$16 sm:$0xc0] %vm367, %v357
  %s376 = scalar_lea.vmem %s0, 24
  %v377 = vld [vmem:[%s376] sm:$0xff]
  %s378 = scalar_lea.vmem %s0, 32
  %v379 = vld [vmem:[%s378] sm:$0xff]
  %vm380 = vcmask 973824
  %v381 = vsel %vm380, %v379, %v377
  %382 = vrot.lane.b32.xlu0 %v381, 9
  %v383 = vpop.permute.xlu0 %382
  %vm384 = vcmask 72704
  %s385 = scalar_lea.vmem %s1, 135
  %386 = vst.msk [vmem:[%s385] ss:$16 sm:$0x3] %vm384, %v383
  %s387 = scalar_lea.vmem %s1, 135
  %388 = vst.msk [vmem:[%s387] ss:$16 sm:$0xc] %vm384, %v383
  %s389 = scalar_lea.vmem %s1, 135
  %390 = vst.msk [vmem:[%s389] ss:$16 sm:$0x30] %vm384, %v383
  %s391 = scalar_lea.vmem %s1, 135
  %392 = vst.msk [vmem:[%s391] ss:$16 sm:$0xc0] %vm384, %v383
  %vm393 = vcmask 138312
  %s394 = scalar_lea.vmem %s1, 135
  %395 = vst.msk [vmem:[%s394] ss:$16 sm:$0x3] %vm393, %v383
  %s396 = scalar_lea.vmem %s1, 135
  %397 = vst.msk [vmem:[%s396] ss:$16 sm:$0xc] %vm393, %v383
  %s398 = scalar_lea.vmem %s1, 135
  %399 = vst.msk [vmem:[%s398] ss:$16 sm:$0x30] %vm393, %v383
  %s400 = scalar_lea.vmem %s1, 135
  %401 = vst.msk [vmem:[%s400] ss:$16 sm:$0xc0] %vm393, %v383
  %s402 = scalar_lea.vmem %s0, 8
  %v403 = vld [vmem:[%s402] sm:$0xff]
  %s404 = scalar_lea.vmem %s0, 16
  %v405 = vld [vmem:[%s404] sm:$0xff]
  %vm406 = vcmask 1039360
  %v407 = vsel %vm406, %v405, %v403
  %408 = vrot.lane.b32.xlu0 %v407, 1
  %v409 = vpop.permute.xlu0 %408
  %vm410 = vcmask 7168
  %s411 = scalar_lea.vmem %s1, 15
  %412 = vst.msk [vmem:[%s411] ss:$16 sm:$0x3] %vm410, %v409
  %s413 = scalar_lea.vmem %s1, 15
  %414 = vst.msk [vmem:[%s413] ss:$16 sm:$0xc] %vm410, %v409
  %s415 = scalar_lea.vmem %s1, 15
  %416 = vst.msk [vmem:[%s415] ss:$16 sm:$0x30] %vm410, %v409
  %s417 = scalar_lea.vmem %s1, 15
  %418 = vst.msk [vmem:[%s417] ss:$16 sm:$0xc0] %vm410, %v409
  %vm419 = vcmask 138248
  %s420 = scalar_lea.vmem %s1, 15
  %421 = vst.msk [vmem:[%s420] ss:$16 sm:$0x3] %vm419, %v409
  %s422 = scalar_lea.vmem %s1, 15
  %423 = vst.msk [vmem:[%s422] ss:$16 sm:$0xc] %vm419, %v409
  %s424 = scalar_lea.vmem %s1, 15
  %425 = vst.msk [vmem:[%s424] ss:$16 sm:$0x30] %vm419, %v409
  %s426 = scalar_lea.vmem %s1, 15
  %427 = vst.msk [vmem:[%s426] ss:$16 sm:$0xc0] %vm419, %v409
  %s428 = scalar_lea.vmem %s0, 32
  %v429 = vld [vmem:[%s428] sm:$0xff]
  %s430 = scalar_lea.vmem %s0, 40
  %v431 = vld [vmem:[%s430] sm:$0xff]
  %vm432 = vcmask 1039360
  %v433 = vsel %vm432, %v431, %v429
  %434 = vrot.lane.b32.xlu0 %v433, 1
  %v435 = vpop.permute.xlu0 %434
  %vm436 = vcmask 7168
  %s437 = scalar_lea.vmem %s1, 143
  %438 = vst.msk [vmem:[%s437] ss:$16 sm:$0x3] %vm436, %v435
  %s439 = scalar_lea.vmem %s1, 143
  %440 = vst.msk [vmem:[%s439] ss:$16 sm:$0xc] %vm436, %v435
  %s441 = scalar_lea.vmem %s1, 143
  %442 = vst.msk [vmem:[%s441] ss:$16 sm:$0x30] %vm436, %v435
  %s443 = scalar_lea.vmem %s1, 143
  %444 = vst.msk [vmem:[%s443] ss:$16 sm:$0xc0] %vm436, %v435
  %vm445 = vcmask 138248
  %s446 = scalar_lea.vmem %s1, 143
  %447 = vst.msk [vmem:[%s446] ss:$16 sm:$0x3] %vm445, %v435
  %s448 = scalar_lea.vmem %s1, 143
  %449 = vst.msk [vmem:[%s448] ss:$16 sm:$0xc] %vm445, %v435
  %s450 = scalar_lea.vmem %s1, 143
  %451 = vst.msk [vmem:[%s450] ss:$16 sm:$0x30] %vm445, %v435
  %s452 = scalar_lea.vmem %s1, 143
  %453 = vst.msk [vmem:[%s452] ss:$16 sm:$0xc0] %vm445, %v435

// kernel: conv_transpose_layer.1
$region0: #{conv_transpose_layer.1}
  #allocation0 [shape = 'u32[]', space=smem, size = 0x4, offset = 0x4, fixed_abs, tag = 'smem constant byte address 0x4 - core index']
  #allocation1 [shape = 'u32[144,128]{1,0:T(1,128)}', space=vmem, size = 0x12000, scoped, tag = 'internal scratch']
  #allocation2 [shape = 'f32[8,384]{1,0:T(8,128)}', space=vmem, size = 0x3000, scoped, tag = 'scratch operand']
  #allocation3 [shape = 'f32[8,384]{1,0:T(8,128)}', space=vmem, size = 0x3000, scoped, tag = 'scratch operand']
  #allocation4 [shape = 'f32[8,384]{1,0:T(8,128)}', space=vmem, size = 0x3000, scoped, tag = 'scratch operand']
  #allocation5 [shape = 'f32[8,384]{1,0:T(8,128)}', space=vmem, size = 0x3000, scoped, tag = 'scratch operand']
  %s0 = inlined_call_operand.vmem [shape: bf16[2,8,256], index: 0, kind: input, shape index: {}]
  %s1 = inlined_call_operand.vmem [shape: bf16[72,8], index: 1, kind: input, shape index: {}]
  %s2 = inlined_call_operand.vmem [shape: f32[8,1], index: 2, kind: input, shape index: {}]
  %s3 = inlined_call_operand.vmem [shape: f32[2,4,8,384], index: 3, kind: output, shape index: {}]
  %s4 = sld [smem:[#allocation0]]
  $region45: #{conv_transpose_layer.1} parent=0
    _
  %s6 = ssub.s32 1, %s4
  %s7 = scalar_select 0, %s6, %s4
  loop: start=0, step=1, limit=4
  $region2: #{conv_transpose_layer.1} parent=0 // loop_pre_header
    _
  $region3: #{conv_transpose_layer.1} parent=0 // loop_header
    %s9 = sphi 0, %s13
    %p10 = scmp.ge.s32.totalorder %s9, 4
    %s19 = sphi 0, %s21
    %s22 = sphi 0, %s19
    %s23 = sphi 0, %s22
    %s39 = sphi 0, %s23
    %s43 = sphi 0, %s43
    %s45 = sphi 0, %s43
    %s46 = sphi 0, %s45
    %s60 = sphi 0, %s46
    %s64 = sphi 0, %s64
    %s66 = sphi 0, %s64
    %s67 = sphi 0, %s66
    %s81 = sphi 0, %s67
    %s87 = sphi 0, %s89
    %s90 = sphi 0, %s87
    %s91 = sphi 0, %s90
    %s107 = sphi 0, %s91
  $region4: #{conv_transpose_layer.1} parent=0 // loop_header_branch
    %12 = sbr.rel (%p10) target = $region8
  $region5: #{conv_transpose_layer.1} parent=0 // loop_body
    %s14 = ssub.s32 %s9, 1
    %s15 = ssub.s32 %s9, 2
    %s16 = sadd.s32 %s9, 1
    %s17 = ssub.s32 %s9, %s16
    %p18 = scmp.eq.s32.totalorder %s17, 0
    %s20 = sadd.s32 %s19, 1
    %s21 = scalar_select %p18, %s19, %s20
    %p24 = pneg %p18
    %p25 = scmp.eq.s32.totalorder %s9, 1
    %p26 = por %p24, %p25
    %p27 = scmp.ne.s32.totalorder %s19, %s22
    %p28 = scmp.eq.s32.totalorder %s9, 0
    %p29 = por %p27, %p28
    %p30 = scmp.ne.s32.totalorder %s19, %s22
    %p31 = scmp.eq.s32.totalorder %s14, 1
    %p32 = por %p30, %p31
    %p33 = scmp.ne.s32.totalorder %s22, %s23
    %p34 = scmp.eq.s32.totalorder %s14, 0
    %p35 = por %p33, %p34
    %p36 = scmp.ne.s32.totalorder %s22, %s23
    %p37 = scmp.eq.s32.totalorder %s15, 1
    %p38 = por %p36, %p37
    %p40 = scmp.ne.s32.totalorder %s23, %s39
    %p41 = scmp.eq.s32.totalorder %s15, 0
    %p42 = por %p40, %p41
    %s44 = sadd.s32 %s43, 1
    %p47 = scmp.eq.s32.totalorder %s9, 1
    %p48 = scmp.ne.s32.totalorder %s43, %s45
    %p49 = scmp.eq.s32.totalorder %s9, 0
    %p50 = por %p48, %p49
    %p51 = scmp.ne.s32.totalorder %s43, %s45
    %p52 = scmp.eq.s32.totalorder %s14, 1
    %p53 = por %p51, %p52
    %p54 = scmp.ne.s32.totalorder %s45, %s46
    %p55 = scmp.eq.s32.totalorder %s14, 0
    %p56 = por %p54, %p55
    %p57 = scmp.ne.s32.totalorder %s45, %s46
    %p58 = scmp.eq.s32.totalorder %s15, 1
    %p59 = por %p57, %p58
    %p61 = scmp.ne.s32.totalorder %s46, %s60
    %p62 = scmp.eq.s32.totalorder %s15, 0
    %p63 = por %p61, %p62
    %s65 = sadd.s32 %s64, 1
    %p68 = scmp.eq.s32.totalorder %s9, 1
    %p69 = scmp.ne.s32.totalorder %s64, %s66
    %p70 = scmp.eq.s32.totalorder %s9, 0
    %p71 = por %p69, %p70
    %p72 = scmp.ne.s32.totalorder %s64, %s66
    %p73 = scmp.eq.s32.totalorder %s14, 1
    %p74 = por %p72, %p73
    %p75 = scmp.ne.s32.totalorder %s66, %s67
    %p76 = scmp.eq.s32.totalorder %s14, 0
    %p77 = por %p75, %p76
    %p78 = scmp.ne.s32.totalorder %s66, %s67
    %p79 = scmp.eq.s32.totalorder %s15, 1
    %p80 = por %p78, %p79
    %p82 = scmp.ne.s32.totalorder %s67, %s81
    %p83 = scmp.eq.s32.totalorder %s15, 0
    %p84 = por %p82, %p83
    %s85 = ssub.s32 %s9, %s16
    %p86 = scmp.eq.s32.totalorder %s85, 0
    %s88 = sadd.s32 %s87, 1
    %s89 = scalar_select %p86, %s87, %s88
    %p92 = pneg %p86
    %p93 = scmp.eq.s32.totalorder %s9, 1
    %p94 = por %p92, %p93
    %p95 = scmp.ne.s32.totalorder %s87, %s90
    %p96 = scmp.eq.s32.totalorder %s9, 0
    %p97 = por %p95, %p96
    %p98 = scmp.ne.s32.totalorder %s87, %s90
    %p99 = scmp.eq.s32.totalorder %s14, 1
    %p100 = por %p98, %p99
    %p101 = scmp.ne.s32.totalorder %s90, %s91
    %p102 = scmp.eq.s32.totalorder %s14, 0
    %p103 = por %p101, %p102
    %p104 = scmp.ne.s32.totalorder %s90, %s91
    %p105 = scmp.eq.s32.totalorder %s15, 1
    %p106 = por %p104, %p105
    %p108 = scmp.ne.s32.totalorder %s91, %s107
    %p109 = scmp.eq.s32.totalorder %s15, 0
    %p110 = por %p108, %p109
    %p111 = scmp.le.s32.totalorder 1, %s9
    %p112 = scmp.lt.s32.totalorder %s9, 3
    %p113 = pnand %p111, %p112
    %p114 = pneg %p113
    // Predicated region
    $region9: #{conv_transpose_layer.1} parent=5 // pred_check
      _
    $region10: #{conv_transpose_layer.1} parent=5 // pred_check_branch
      %116 = sbr.rel (%p113) target = $region12
    $region11: #{conv_transpose_layer.1} parent=5 // pred_region
      %s117 = ssub.s32 %s9, 1
      // Predicated region
      $region13: #{conv_transpose_layer.1} parent=11 // pred_check
        %p118 = pneg %p56
      $region14: #{conv_transpose_layer.1} parent=11 // pred_check_branch
        %120 = sbr.rel (%p118) target = $region16
      $region15: #{conv_transpose_layer.1} parent=11 // pred_region
        _
      $region16: #{conv_transpose_layer.1} parent=11 // pred_fallthru
        _
      // Predicated region
      $region17: #{conv_transpose_layer.1} parent=11 // pred_check
        %p121 = pneg %p77
      $region18: #{conv_transpose_layer.1} parent=11 // pred_check_branch
        %123 = sbr.rel (%p121) target = $region20
      $region19: #{conv_transpose_layer.1} parent=11 // pred_region
        _
      $region20: #{conv_transpose_layer.1} parent=11 // pred_fallthru
        _
    $region12: #{conv_transpose_layer.1} parent=5 // pred_fallthru
      _
    %p124 = scmp.lt.s32.totalorder %s9, 2
    // Predicated region
    $region21: #{conv_transpose_layer.1} parent=5 // pred_check
      %p125 = pneg %p124
    $region22: #{conv_transpose_layer.1} parent=5 // pred_check_branch
      %127 = sbr.rel (%p125) target = $region24
    $region23: #{conv_transpose_layer.1} parent=5 // pred_region
      // Predicated region
      $region25: #{conv_transpose_layer.1} parent=23 // pred_check
        %p128 = pneg %p29
      $region26: #{conv_transpose_layer.1} parent=23 // pred_check_branch
        %130 = sbr.rel (%p128) target = $region28
      $region27: #{conv_transpose_layer.1} parent=23 // pred_region
        %p131 = scmp.lt.s32.totalorder %s9, 1
        %s132 = scalar_select %p131, %s9, 1
        %s133 = smul.addr %s132, 2
        %s134 = smul.addr %s133, 4
        %s135 = scalar_lea.vmem %s0, %s134
      $region28: #{conv_transpose_layer.1} parent=23 // pred_fallthru
        _
    $region24: #{conv_transpose_layer.1} parent=5 // pred_fallthru
      _
    %p136 = scmp.le.s32.totalorder 1, %s9
    %p137 = scmp.lt.s32.totalorder %s9, 3
    %p138 = pnand %p136, %p137
    %p139 = pneg %p138
    // Predicated region
    $region29: #{conv_transpose_layer.1} parent=5 // pred_check
      _
    $region30: #{conv_transpose_layer.1} parent=5 // pred_check_branch
      %141 = sbr.rel (%p138) target = $region32
    $region31: #{conv_transpose_layer.1} parent=5 // pred_region
      %s142 = ssub.s32 %s9, 1
      %p143 = scmp.lt.s32.totalorder %s14, 1
      %s144 = scalar_select %p143, %s14, 1
      %s145 = smul.addr %s144, 2
      %s146 = smul.addr %s145, 4
      %s147 = scalar_lea.vmem %s0, %s146
      %p148 = pneg %p35
      %p149 = pneg %p32
      %p150 = pneg %p56
      %p151 = pneg %p53
      %p152 = pneg %p77
      %p153 = pneg %p74
      %p154 = pneg %p103
      %p155 = pneg %p100
      %p156 = scmp.lt.s32.totalorder %s14, 1
      %s157 = scalar_select %p156, %s14, 1
      %s158 = smul.addr %s157, 12
      %s159 = smul.addr %s158, 8
      %s160 = scalar_lea.vmem %s3, %s159
      %p161 = scmp.lt.s32.totalorder %s14, 1
      %s162 = scalar_select %p161, %s14, 1
      %s163 = smul.addr %s162, 2
      %s164 = smul.addr %s163, 4
      %s165 = scalar_lea.vmem %s0, %s164
      %p166 = scmp.lt.s32.totalorder %s14, 1
      %s167 = scalar_select %p166, %s14, 1
      %s168 = smul.addr %s167, 12
      %s169 = smul.addr %s168, 8
      %s170 = scalar_lea.vmem %s3, %s169
      %v172 = vld [vmem:[%s1] sm:$0xf]
      %v173 = vld [vmem:[%s1 + $0x4] sm:$0xf]
      %v174 = vld [vmem:[%s1 + $0x8] sm:$0xf]
      %v175 = vld [vmem:[%s1 + $0xc] sm:$0xf]
      %v176 = vld [vmem:[%s1 + $0x10] sm:$0xf]
      %v177 = vld [vmem:[%s1 + $0x14] sm:$0xf]
      %v178 = vld [vmem:[%s1 + $0x18] sm:$0xf]
      %v179 = vld [vmem:[%s1 + $0x1c] sm:$0xf]
      %v180 = vld [vmem:[%s1 + $0x20] sm:$0xf]
      %v181 = vld [vmem:[%s165] sm:$0xff]
      %v191 = vunpack.c.l.b16 %v172
      %v192 = vunpack.c.l.b16 %v173
      %v193 = vunpack.c.l.b16 %v174
      %v194 = vunpack.c.l.b16 %v175
      %v195 = vunpack.c.l.b16 %v176
      %v196 = vunpack.c.l.b16 %v177
      %v197 = vunpack.c.l.b16 %v178
      %v198 = vunpack.c.l.b16 %v179
      %v199 = vunpack.c.l.b16 %v180
      %v200 = vpack.c.b16 %v192, %v191
      %v201 = vpack.c.b16 %v194, %v193
      %v202 = vpack.c.b16 %v196, %v195
      %v203 = vpack.c.b16 %v198, %v197
      %v204 = vpack.c.b16 %v199, %v199
      %v206 = vunpack.c.l.b16 %v181
      %v207 = vunpack.c.h.b16 %v181
      %v208 = vpack.c.b16 %v206, %v206
      %v209 = vpack.c.b16 %v207, %v207
      %vm210 = vcmask 64512
      %v212 = vsel %vm210, %v200, 0
      %v215 = vsel %vm210, %v201, 0
      %v218 = vsel %vm210, %v202, 0
      %v221 = vsel %vm210, %v203, 0
      %v224 = vsel %vm210, %v204, 0
      %vm226 = vcmask 1043456
      %v228 = vsel %vm226, %v208, 0
      %v231 = vsel %vm226, %v209, 0
      %233 = vmatprep.subr.bf16.mxu0 0
      %234 = vmatpush1.bf16.msra.mxu0 0
      %235 = vmatprep.subr.bf16.mxu0 0
      %236 = vmatpush1.bf16.msra.mxu0 0
      %237 = vmatprep.subr.bf16.mxu0 0
      %238 = vmatpush1.bf16.msra.mxu0 0
      %239 = vmatprep.subr.bf16.mxu0 0
      %240 = vmatpush1.bf16.msra.mxu0 0
      %241 = vmatprep.subr.bf16.mxu0 0
      %242 = vmatpush1.bf16.msra.mxu0 0
      %243 = vmatprep.subr.bf16.mxu0 0
      %244 = vmatpush1.bf16.msra.mxu0 0
      %245 = vmatprep.subr.bf16.mxu0 0
      %246 = vmatpush1.bf16.msra.mxu0 0
      %247 = vmatprep.subr.bf16.mxu0 %v231
      %248 = vmatpush1.bf16.msra.mxu0 %v228
      %249 = vmatprep.subr.bf16.mxu0 0
      %250 = vmatpush2.bf16.msra.mxu0 0
      %251 = vmatprep.subr.bf16.mxu0 0
      %252 = vmatpush2.bf16.msra.mxu0 0
      %253 = vmatprep.subr.bf16.mxu0 0
      %254 = vmatpush2.bf16.msra.mxu0 0
      %255 = vmatprep.subr.bf16.mxu0 0
      %256 = vmatpush2.bf16.msra.mxu0 0
      %257 = vmatprep.subr.bf16.mxu0 0
      %258 = vmatpush2.bf16.msra.mxu0 0
      %259 = vmatprep.subr.bf16.mxu0 0
      %260 = vmatpush2.bf16.msra.mxu0 0
      %261 = vmatprep.subr.bf16.mxu0 0
      %262 = vmatpush2.bf16.msra.mxu0 0
      %263 = vmatprep.subr.bf16.mxu0 0
      %264 = vmatpush2.bf16.msra.mxu0 0
      %265 = vmatprep.mubr.bf16.mxu0 0
      %266 = vmatmul.mubr.bf16.gmra.mxu0 %v212
      %v267 = vpop.f32.mrf.mxu0
      %v268 = vadd.f32 0.0, %v267
      %v269 = vpop.f32.mrf.mxu0
      %v270 = vadd.f32 0.0, %v269
      %v271 = vpop.f32.mrf.mxu0
      %v272 = vadd.f32 0.0, %v271
      %v273 = vpop.f32.mrf.mxu0
      %v274 = vadd.f32 0.0, %v273
      %275 = vmatprep.mubr.bf16.mxu0 0
      %276 = vmatmul.mubr.bf16.gmra.mxu0 %v215
      %v277 = vpop.f32.mrf.mxu0
      %v278 = vadd.f32 0.0, %v277
      %v279 = vpop.f32.mrf.mxu0
      %v280 = vadd.f32 0.0, %v279
      %v281 = vpop.f32.mrf.mxu0
      %v282 = vadd.f32 0.0, %v281
      %v283 = vpop.f32.mrf.mxu0
      %v284 = vadd.f32 0.0, %v283
      %285 = vmatprep.mubr.bf16.mxu0 0
      %286 = vmatmul.mubr.bf16.gmra.mxu0 %v218
      %v287 = vpop.f32.mrf.mxu0
      %v288 = vadd.f32 0.0, %v287
      %v289 = vpop.f32.mrf.mxu0
      %v290 = vadd.f32 0.0, %v289
      %v291 = vpop.f32.mrf.mxu0
      %v292 = vadd.f32 0.0, %v291
      %v293 = vpop.f32.mrf.mxu0
      %v294 = vadd.f32 0.0, %v293
      %295 = vmatprep.mubr.bf16.mxu0 0
      %296 = vmatmul.mubr.bf16.gmra.mxu0 %v221
      %v297 = vpop.f32.mrf.mxu0
      %v298 = vadd.f32 0.0, %v297
      %v299 = vpop.f32.mrf.mxu0
      %v300 = vadd.f32 0.0, %v299
      %v301 = vpop.f32.mrf.mxu0
      %v302 = vadd.f32 0.0, %v301
      %v303 = vpop.f32.mrf.mxu0
      %v304 = vadd.f32 0.0, %v303
      %305 = vmatprep.mubr.bf16.mxu0 0
      %306 = vmatmul.mubr.bf16.gmra.mxu0 %v224
      %v307 = vpop.f32.mrf.mxu0
      %v308 = vadd.f32 0.0, %v307
      %v309 = vpop.f32.mrf.mxu0
      %v310 = vadd.f32 0.0, %v309
      %v311 = vpop.f32.mrf.mxu0
      %v312 = vpop.f32.mrf.mxu0
      %313 = vdwg.mxu0
      %v314 = vld [vmem:[%s2] sm:$0xff]
      %315 = vst [vmem:[#allocation2] sm:$0xff] 0.0
      %316 = vst [vmem:[#allocation2 + $0x8] sm:$0xff] 0.0
      %317 = vst [vmem:[#allocation2 + $0x10] sm:$0xff] 0.0
      %v318 = vld [vmem:[#allocation2] sm:$0xff]
      %v319 = vadd.f32 %v318, %v268
      %vm320 = vcmask 130048
      %321 = vst.msk [vmem:[#allocation2] sm:$0xff] %vm320, %v319
      %v322 = vld [vmem:[#allocation2] sm:$0xff]
      %324 = vrot.lane.b32.xlu0 %v268, 1
      %v325 = vpop.permute.xlu0 %324
      %v327 = vadd.f32 %v322, %v325
      %vm328 = vcmask 269448
      %329 = vst.msk [vmem:[#allocation2] sm:$0xff] %vm328, %v327
      %v330 = vld [vmem:[#allocation2] sm:$0xff]
      %331 = vrot.lane.b32.xlu0 %v268, 2
      %v332 = vpop.permute.xlu0 %331
      %v334 = vadd.f32 %v330, %v332
      %vm335 = vcmask 408848
      %336 = vst.msk [vmem:[#allocation2] sm:$0xff] %vm335, %v334
      %v337 = vld [vmem:[#allocation2] sm:$0xff]
      %338 = vrot.lane.b32.xlu0 %v268, 3
      %v339 = vpop.permute.xlu0 %338
      %v341 = vadd.f32 %v337, %v339
      %vm342 = vcmask 548248
      %343 = vst.msk [vmem:[#allocation2] sm:$0xff] %vm342, %v341
      %v344 = vld [vmem:[#allocation2] sm:$0xff]
      %345 = vrot.lane.b32.xlu0 %v268, 4
      %v346 = vpop.permute.xlu0 %345
      %v348 = vadd.f32 %v344, %v346
      %vm349 = vcmask 687648
      %350 = vst.msk [vmem:[#allocation2] sm:$0xff] %vm349, %v348
      %v351 = vld [vmem:[#allocation2] sm:$0xff]
      %352 = vrot.lane.b32.xlu0 %v268, 5
      %v353 = vpop.permute.xlu0 %352
      %v355 = vadd.f32 %v351, %v353
      %vm356 = vcmask 827048
      %357 = vst.msk [vmem:[#allocation2] sm:$0xff] %vm356, %v355
      %v358 = vld [vmem:[#allocation2] sm:$0xff]
      %359 = vrot.lane.b32.xlu0 %v268, 6
      %v360 = vpop.permute.xlu0 %359
      %v362 = vadd.f32 %v358, %v360
      %vm363 = vcmask 966448
      %364 = vst.msk [vmem:[#allocation2] sm:$0xff] %vm363, %v362
      %v365 = vld [vmem:[#allocation2] sm:$0xff]
      %v366 = vld [vmem:[#allocation2 + $0x8] sm:$0xff]
      %367 = vrot.lane.b32.xlu0 %v268, 7
      %v368 = vpop.permute.xlu0 %367
      %v370 = vadd.f32 %v365, %v368
      %v371 = vadd.f32 %v366, %v368
      %vm372 = vcmask 1048504
      %373 = vst.msk [vmem:[#allocation2] sm:$0xff] %vm372, %v370
      %vm374 = vcmask 56320
      %375 = vst.msk [vmem:[#allocation2 + $0x8] sm:$0xff] %vm374, %v371
      %v376 = vld [vmem:[#allocation2 + $0x8] sm:$0xff]
      %378 = vrot.lane.b32.xlu0 %v270, 8
      %v379 = vpop.permute.xlu0 %378
      %v381 = vadd.f32 %v376, %v379
      %vm382 = vcmask 195648
      %383 = vst.msk [vmem:[#allocation2 + $0x8] sm:$0xff] %vm382, %v381
      %v384 = vld [vmem:[#allocation2 + $0x8] sm:$0xff]
      %385 = vrot.lane.b32.xlu0 %v270, 9
      %v386 = vpop.permute.xlu0 %385
      %v388 = vadd.f32 %v384, %v386
      %vm389 = vcmask 335048
      %390 = vst.msk [vmem:[#allocation2 + $0x8] sm:$0xff] %vm389, %v388
      %v391 = vld [vmem:[#allocation2 + $0x8] sm:$0xff]
      %392 = vrot.lane.b32.xlu0 %v270, 10
      %v393 = vpop.permute.xlu0 %392
      %v395 = vadd.f32 %v391, %v393
      %vm396 = vcmask 474448
      %397 = vst.msk [vmem:[#allocation2 + $0x8] sm:$0xff] %vm396, %v395
      %v398 = vld [vmem:[#allocation2 + $0x8] sm:$0xff]
      %399 = vrot.lane.b32.xlu0 %v270, 11
      %v400 = vpop.permute.xlu0 %399
      %v402 = vadd.f32 %v398, %v400
      %vm403 = vcmask 613848
      %404 = vst.msk [vmem:[#allocation2 + $0x8] sm:$0xff] %vm403, %v402
      %v405 = vld [vmem:[#allocation2 + $0x8] sm:$0xff]
      %406 = vrot.lane.b32.xlu0 %v270, 12
      %v407 = vpop.permute.xlu0 %406
      %v409 = vadd.f32 %v405, %v407
      %vm410 = vcmask 753248
      %411 = vst.msk [vmem:[#allocation2 + $0x8] sm:$0xff] %vm410, %v409
      %v412 = vld [vmem:[#allocation2 + $0x8] sm:$0xff]
      %413 = vrot.lane.b32.xlu0 %v270, 13
      %v414 = vpop.permute.xlu0 %413
      %v416 = vadd.f32 %v412, %v414
      %vm417 = vcmask 892648
      %418 = vst.msk [vmem:[#allocation2 + $0x8] sm:$0xff] %vm417, %v416
      %v419 = vld [vmem:[#allocation2 + $0x8] sm:$0xff]
      %420 = vrot.lane.b32.xlu0 %v270, 14
      %v421 = vpop.permute.xlu0 %420
      %v423 = vadd.f32 %v419, %v421
      %vm424 = vcmask 1032048
      %425 = vst.msk [vmem:[#allocation2 + $0x8] sm:$0xff] %vm424, %v423
      %v426 = vld [vmem:[#allocation2 + $0x8] sm:$0xff]
      %v427 = vld [vmem:[#allocation2 + $0x10] sm:$0xff]
      %428 = vrot.lane.b32.xlu0 %v270, 15
      %v429 = vpop.permute.xlu0 %428
      %v431 = vadd.f32 %v426, %v429
      %v432 = vadd.f32 %v427, %v429
      %vm433 = vcmask 1048568
      %434 = vst.msk [vmem:[#allocation2 + $0x8] sm:$0xff] %vm433, %v431
      %vm435 = vcmask 121856
      %436 = vst.msk [vmem:[#allocation2 + $0x10] sm:$0xff] %vm435, %v432
      %v437 = vld [vmem:[#allocation2] sm:$0xff]
      %439 = vrot.lane.b32.xlu0 %v278, 1
      %v440 = vpop.permute.xlu0 %439
      %v442 = vadd.f32 %v437, %v440
      %vm443 = vcmask 138248
      %444 = vst.msk [vmem:[#allocation2] sm:$0xff] %vm443, %v442
      %v445 = vld [vmem:[#allocation2] sm:$0xff]
      %446 = vrot.lane.b32.xlu0 %v278, 2
      %v447 = vpop.permute.xlu0 %446
      %v449 = vadd.f32 %v445, %v447
      %vm450 = vcmask 277648
      %451 = vst.msk [vmem:[#allocation2] sm:$0xff] %vm450, %v449
      %v452 = vld [vmem:[#allocation2] sm:$0xff]
      %453 = vrot.lane.b32.xlu0 %v278, 3
      %v454 = vpop.permute.xlu0 %453
      %v456 = vadd.f32 %v452, %v454
      %vm457 = vcmask 417048
      %458 = vst.msk [vmem:[#allocation2] sm:$0xff] %vm457, %v456
      %v459 = vld [vmem:[#allocation2] sm:$0xff]
      %460 = vrot.lane.b32.xlu0 %v278, 4
      %v461 = vpop.permute.xlu0 %460
      %v463 = vadd.f32 %v459, %v461
      %vm464 = vcmask 556448
      %465 = vst.msk [vmem:[#allocation2] sm:$0xff] %vm464, %v463
      %v466 = vld [vmem:[#allocation2] sm:$0xff]
      %467 = vrot.lane.b32.xlu0 %v278, 5
      %v468 = vpop.permute.xlu0 %467
      %v470 = vadd.f32 %v466, %v468
      %vm471 = vcmask 695848
      %472 = vst.msk [vmem:[#allocation2] sm:$0xff] %vm471, %v470
      %v473 = vld [vmem:[#allocation2] sm:$0xff]
      %474 = vrot.lane.b32.xlu0 %v278, 6
      %v475 = vpop.permute.xlu0 %474
      %v477 = vadd.f32 %v473, %v475
      %vm478 = vcmask 835248
      %479 = vst.msk [vmem:[#allocation2] sm:$0xff] %vm478, %v477
      %v480 = vld [vmem:[#allocation2] sm:$0xff]
      %481 = vrot.lane.b32.xlu0 %v278, 7
      %v482 = vpop.permute.xlu0 %481
      %v484 = vadd.f32 %v480, %v482
      %vm485 = vcmask 974648
      %486 = vst.msk [vmem:[#allocation2] sm:$0xff] %vm485, %v484
      %v487 = vld [vmem:[#allocation2] sm:$0xff]
      %v488 = vld [vmem:[#allocation2 + $0x8] sm:$0xff]
      %489 = vrot.lane.b32.xlu0 %v278, 8
      %v490 = vpop.permute.xlu0 %489
      %v492 = vadd.f32 %v487, %v490
      %v493 = vadd.f32 %v488, %v490
      %vm494 = vcmask 1048512
      %495 = vst.msk [vmem:[#allocation2] sm:$0xff] %vm494, %v492
      %496 = vst.msk [vmem:[#allocation2 + $0x8] sm:$0xff] %vm210, %v493
      %v497 = vld [vmem:[#allocation2 + $0x8] sm:$0xff]
      %499 = vrot.lane.b32.xlu0 %v280, 9
      %v500 = vpop.permute.xlu0 %499
      %v502 = vadd.f32 %v497, %v500
      %vm503 = vcmask 203848
      %504 = vst.msk [vmem:[#allocation2 + $0x8] sm:$0xff] %vm503, %v502
      %v505 = vld [vmem:[#allocation2 + $0x8] sm:$0xff]
      %506 = vrot.lane.b32.xlu0 %v280, 10
      %v507 = vpop.permute.xlu0 %506
      %v509 = vadd.f32 %v505, %v507
      %vm510 = vcmask 343248
      %511 = vst.msk [vmem:[#allocation2 + $0x8] sm:$0xff] %vm510, %v509
      %v512 = vld [vmem:[#allocation2 + $0x8] sm:$0xff]
      %513 = vrot.lane.b32.xlu0 %v280, 11
      %v514 = vpop.permute.xlu0 %513
      %v516 = vadd.f32 %v512, %v514
      %vm517 = vcmask 482648
      %518 = vst.msk [vmem:[#allocation2 + $0x8] sm:$0xff] %vm517, %v516
      %v519 = vld [vmem:[#allocation2 + $0x8] sm:$0xff]
      %520 = vrot.lane.b32.xlu0 %v280, 12
      %v521 = vpop.permute.xlu0 %520
      %v523 = vadd.f32 %v519, %v521
      %vm524 = vcmask 622048
      %525 = vst.msk [vmem:[#allocation2 + $0x8] sm:$0xff] %vm524, %v523
      %v526 = vld [vmem:[#allocation2 + $0x8] sm:$0xff]
      %527 = vrot.lane.b32.xlu0 %v280, 13
      %v528 = vpop.permute.xlu0 %527
      %v530 = vadd.f32 %v526, %v528
      %vm531 = vcmask 761448
      %532 = vst.msk [vmem:[#allocation2 + $0x8] sm:$0xff] %vm531, %v530
      %v533 = vld [vmem:[#allocation2 + $0x8] sm:$0xff]
      %534 = vrot.lane.b32.xlu0 %v280, 14
      %v535 = vpop.permute.xlu0 %534
      %v537 = vadd.f32 %v533, %v535
      %vm538 = vcmask 900848
      %539 = vst.msk [vmem:[#allocation2 + $0x8] sm:$0xff] %vm538, %v537
      %v540 = vld [vmem:[#allocation2 + $0x8] sm:$0xff]
      %541 = vrot.lane.b32.xlu0 %v280, 15
      %v542 = vpop.permute.xlu0 %541
      %v544 = vadd.f32 %v540, %v542
      %vm545 = vcmask 1040248
      %546 = vst.msk [vmem:[#allocation2 + $0x8] sm:$0xff] %vm545, %v544
      %v547 = vld [vmem:[#allocation2 + $0x10] sm:$0xff]
      %548 = vrot.lane.b32.xlu0 %v280, 16
      %v549 = vpop.permute.xlu0 %548
      %v551 = vadd.f32 %v547, %v549
      %552 = vst.msk [vmem:[#allocation2 + $0x10] sm:$0xff] %vm320, %v551
      %v553 = vld [vmem:[#allocation2] sm:$0xff]
      %555 = vrot.lane.b32.xlu0 %v298, 17
      %v556 = vpop.permute.xlu0 %555
      %v558 = vadd.f32 %v553, %v556
      %559 = vst.msk [vmem:[#allocation2] sm:$0xff] %vm328, %v558
      %v560 = vld [vmem:[#allocation2] sm:$0xff]
      %561 = vrot.lane.b32.xlu0 %v298, 18
      %v562 = vpop.permute.xlu0 %561
      %v564 = vadd.f32 %v560, %v562
      %565 = vst.msk [vmem:[#allocation2] sm:$0xff] %vm335, %v564
      %v566 = vld [vmem:[#allocation2] sm:$0xff]
      %567 = vrot.lane.b32.xlu0 %v298, 19
      %v568 = vpop.permute.xlu0 %567
      %v570 = vadd.f32 %v566, %v568
      %571 = vst.msk [vmem:[#allocation2] sm:$0xff] %vm342, %v570
      %v572 = vld [vmem:[#allocation2] sm:$0xff]
      %573 = vrot.lane.b32.xlu0 %v298, 20
      %v574 = vpop.permute.xlu0 %573
      %v576 = vadd.f32 %v572, %v574
      %577 = vst.msk [vmem:[#allocation2] sm:$0xff] %vm349, %v576
      %v578 = vld [vmem:[#allocation2] sm:$0xff]
      %579 = vrot.lane.b32.xlu0 %v298, 21
      %v580 = vpop.permute.xlu0 %579
      %v582 = vadd.f32 %v578, %v580
      %583 = vst.msk [vmem:[#allocation2] sm:$0xff] %vm356, %v582
      %v584 = vld [vmem:[#allocation2] sm:$0xff]
      %585 = vrot.lane.b32.xlu0 %v298, 22
      %v586 = vpop.permute.xlu0 %585
      %v588 = vadd.f32 %v584, %v586
      %589 = vst.msk [vmem:[#allocation2] sm:$0xff] %vm363, %v588
      %v590 = vld [vmem:[#allocation2] sm:$0xff]
      %v591 = vld [vmem:[#allocation2 + $0x8] sm:$0xff]
      %592 = vrot.lane.b32.xlu0 %v298, 23
      %v593 = vpop.permute.xlu0 %592
      %v595 = vadd.f32 %v590, %v593
      %v596 = vadd.f32 %v591, %v593
      %597 = vst.msk [vmem:[#allocation2] sm:$0xff] %vm372, %v595
      %598 = vst.msk [vmem:[#allocation2 + $0x8] sm:$0xff] %vm374, %v596
      %v599 = vld [vmem:[#allocation2 + $0x8] sm:$0xff]
      %600 = vrot.lane.b32.xlu0 %v298, 24
      %v601 = vpop.permute.xlu0 %600
      %v603 = vadd.f32 %v599, %v601
      %604 = vst.msk [vmem:[#allocation2 + $0x8] sm:$0xff] %vm382, %v603
      %v605 = vld [vmem:[#allocation2 + $0x8] sm:$0xff]
      %607 = vrot.lane.b32.xlu0 %v300, 25
      %v608 = vpop.permute.xlu0 %607
      %v610 = vadd.f32 %v605, %v608
      %611 = vst.msk [vmem:[#allocation2 + $0x8] sm:$0xff] %vm389, %v610
      %v612 = vld [vmem:[#allocation2 + $0x8] sm:$0xff]
      %613 = vrot.lane.b32.xlu0 %v300, 26
      %v614 = vpop.permute.xlu0 %613
      %v616 = vadd.f32 %v612, %v614
      %617 = vst.msk [vmem:[#allocation2 + $0x8] sm:$0xff] %vm396, %v616
      %v618 = vld [vmem:[#allocation2 + $0x8] sm:$0xff]
      %619 = vrot.lane.b32.xlu0 %v300, 27
      %v620 = vpop.permute.xlu0 %619
      %v622 = vadd.f32 %v618, %v620
      %623 = vst.msk [vmem:[#allocation2 + $0x8] sm:$0xff] %vm403, %v622
      %v624 = vld [vmem:[#allocation2 + $0x8] sm:$0xff]
      %625 = vrot.lane.b32.xlu0 %v300, 28
      %v626 = vpop.permute.xlu0 %625
      %v628 = vadd.f32 %v624, %v626
      %629 = vst.msk [vmem:[#allocation2 + $0x8] sm:$0xff] %vm410, %v628
      %v630 = vld [vmem:[#allocation2 + $0x8] sm:$0xff]
      %631 = vrot.lane.b32.xlu0 %v300, 29
      %v632 = vpop.permute.xlu0 %631
      %v634 = vadd.f32 %v630, %v632
      %635 = vst.msk [vmem:[#allocation2 + $0x8] sm:$0xff] %vm417, %v634
      %v636 = vld [vmem:[#allocation2 + $0x8] sm:$0xff]
      %637 = vrot.lane.b32.xlu0 %v300, 30
      %v638 = vpop.permute.xlu0 %637
      %v640 = vadd.f32 %v636, %v638
      %641 = vst.msk [vmem:[#allocation2 + $0x8] sm:$0xff] %vm424, %v640
      %v642 = vld [vmem:[#allocation2 + $0x8] sm:$0xff]
      %v643 = vld [vmem:[#allocation2 + $0x10] sm:$0xff]
      %644 = vrot.lane.b32.xlu0 %v300, 31
      %v645 = vpop.permute.xlu0 %644
      %v647 = vadd.f32 %v642, %v645
      %v648 = vadd.f32 %v643, %v645
      %649 = vst.msk [vmem:[#allocation2 + $0x8] sm:$0xff] %vm433, %v647
      %650 = vst.msk [vmem:[#allocation2 + $0x10] sm:$0xff] %vm435, %v648
      %v651 = vld [vmem:[#allocation2 + $0x10] sm:$0xff]
      %652 = vrot.lane.b32.xlu0 %v300, 32
      %v653 = vpop.permute.xlu0 %652
      %v655 = vadd.f32 %v651, %v653
      %vm656 = vcmask 261248
      %657 = vst.msk [vmem:[#allocation2 + $0x10] sm:$0xff] %vm656, %v655
      %v658 = vld [vmem:[#allocation2] sm:$0xff]
      %660 = vrot.lane.b32.xlu0 %v308, 18
      %v661 = vpop.permute.xlu0 %660
      %v663 = vadd.f32 %v658, %v661
      %664 = vst.msk [vmem:[#allocation2] sm:$0xff] %vm450, %v663
      %v665 = vld [vmem:[#allocation2] sm:$0xff]
      %666 = vrot.lane.b32.xlu0 %v308, 19
      %v667 = vpop.permute.xlu0 %666
      %v669 = vadd.f32 %v665, %v667
      %670 = vst.msk [vmem:[#allocation2] sm:$0xff] %vm457, %v669
      %v671 = vld [vmem:[#allocation2] sm:$0xff]
      %672 = vrot.lane.b32.xlu0 %v308, 20
      %v673 = vpop.permute.xlu0 %672
      %v675 = vadd.f32 %v671, %v673
      %676 = vst.msk [vmem:[#allocation2] sm:$0xff] %vm464, %v675
      %v677 = vld [vmem:[#allocation2] sm:$0xff]
      %678 = vrot.lane.b32.xlu0 %v308, 21
      %v679 = vpop.permute.xlu0 %678
      %v681 = vadd.f32 %v677, %v679
      %682 = vst.msk [vmem:[#allocation2] sm:$0xff] %vm471, %v681
      %v683 = vld [vmem:[#allocation2] sm:$0xff]
      %684 = vrot.lane.b32.xlu0 %v308, 22
      %v685 = vpop.permute.xlu0 %684
      %v687 = vadd.f32 %v683, %v685
      %688 = vst.msk [vmem:[#allocation2] sm:$0xff] %vm478, %v687
      %v689 = vld [vmem:[#allocation2] sm:$0xff]
      %690 = vrot.lane.b32.xlu0 %v308, 23
      %v691 = vpop.permute.xlu0 %690
      %v693 = vadd.f32 %v689, %v691
      %694 = vst.msk [vmem:[#allocation2] sm:$0xff] %vm485, %v693
      %v695 = vld [vmem:[#allocation2] sm:$0xff]
      %v696 = vld [vmem:[#allocation2 + $0x8] sm:$0xff]
      %697 = vrot.lane.b32.xlu0 %v308, 24
      %v698 = vpop.permute.xlu0 %697
      %v700 = vadd.f32 %v695, %v698
      %v701 = vadd.f32 %v696, %v698
      %702 = vst.msk [vmem:[#allocation2] sm:$0xff] %vm494, %v700
      %703 = vst.msk [vmem:[#allocation2 + $0x8] sm:$0xff] %vm210, %v701
      %v704 = vld [vmem:[#allocation2 + $0x8] sm:$0xff]
      %705 = vrot.lane.b32.xlu0 %v308, 25
      %v706 = vpop.permute.xlu0 %705
      %v708 = vadd.f32 %v704, %v706
      %709 = vst.msk [vmem:[#allocation2 + $0x8] sm:$0xff] %vm503, %v708
      %v710 = vld [vmem:[#allocation2 + $0x8] sm:$0xff]
      %712 = vrot.lane.b32.xlu0 %v310, 26
      %v713 = vpop.permute.xlu0 %712
      %v715 = vadd.f32 %v710, %v713
      %716 = vst.msk [vmem:[#allocation2 + $0x8] sm:$0xff] %vm510, %v715
      %v717 = vld [vmem:[#allocation2 + $0x8] sm:$0xff]
      %718 = vrot.lane.b32.xlu0 %v310, 27
      %v719 = vpop.permute.xlu0 %718
      %v721 = vadd.f32 %v717, %v719
      %722 = vst.msk [vmem:[#allocation2 + $0x8] sm:$0xff] %vm517, %v721
      %v723 = vld [vmem:[#allocation2 + $0x8] sm:$0xff]
      %724 = vrot.lane.b32.xlu0 %v310, 28
      %v725 = vpop.permute.xlu0 %724
      %v727 = vadd.f32 %v723, %v725
      %728 = vst.msk [vmem:[#allocation2 + $0x8] sm:$0xff] %vm524, %v727
      %v729 = vld [vmem:[#allocation2 + $0x8] sm:$0xff]
      %730 = vrot.lane.b32.xlu0 %v310, 29
      %v731 = vpop.permute.xlu0 %730
      %v733 = vadd.f32 %v729, %v731
      %734 = vst.msk [vmem:[#allocation2 + $0x8] sm:$0xff] %vm531, %v733
      %v735 = vld [vmem:[#allocation2 + $0x8] sm:$0xff]
      %736 = vrot.lane.b32.xlu0 %v310, 30
      %v737 = vpop.permute.xlu0 %736
      %v739 = vadd.f32 %v735, %v737
      %740 = vst.msk [vmem:[#allocation2 + $0x8] sm:$0xff] %vm538, %v739
      %v741 = vld [vmem:[#allocation2 + $0x8] sm:$0xff]
      %742 = vrot.lane.b32.xlu0 %v310, 31
      %v743 = vpop.permute.xlu0 %742
      %v745 = vadd.f32 %v741, %v743
      %746 = vst.msk [vmem:[#allocation2 + $0x8] sm:$0xff] %vm545, %v745
      %v747 = vld [vmem:[#allocation2 + $0x10] sm:$0xff]
      %748 = vrot.lane.b32.xlu0 %v310, 32
      %v749 = vpop.permute.xlu0 %748
      %v751 = vadd.f32 %v747, %v749
      %752 = vst.msk [vmem:[#allocation2 + $0x10] sm:$0xff] %vm320, %v751
      %v753 = vld [vmem:[#allocation2 + $0x10] sm:$0xff]
      %754 = vrot.lane.b32.xlu0 %v310, 33
      %v755 = vpop.permute.xlu0 %754
      %v757 = vadd.f32 %v753, %v755
      %758 = vst.msk [vmem:[#allocation2 + $0x10] sm:$0xff] %vm328, %v757
      %759 = vst [vmem:[#allocation3] sm:$0xff] 0.0
      %760 = vst [vmem:[#allocation3 + $0x8] sm:$0xff] 0.0
      %761 = vst [vmem:[#allocation3 + $0x10] sm:$0xff] 0.0
      %v762 = vld [vmem:[#allocation3] sm:$0xff]
      %v763 = vld [vmem:[#allocation3 + $0x8] sm:$0xff]
      %v764 = vadd.f32 %v762, %v272
      %v765 = vadd.f32 %v763, %v274
      %766 = vst [vmem:[#allocation3] sm:$0xff] %v764
      %767 = vst [vmem:[#allocation3 + $0x8] sm:$0xff] %v765
      %v768 = vld [vmem:[#allocation3] sm:$0xff]
      %v769 = vld [vmem:[#allocation3 + $0x8] sm:$0xff]
      %v770 = vld [vmem:[#allocation3 + $0x10] sm:$0xff]
      %773 = vrot.lane.b32.xlu0 %v302, 16
      %v774 = vpop.permute.xlu0 %773
      %775 = vrot.lane.b32.xlu0 %v304, 16
      %v776 = vpop.permute.xlu0 %775
      %v777 = vsel %vm320, %v774, %v776
      %v781 = vadd.f32 %v768, %v774
      %v782 = vadd.f32 %v769, %v777
      %v783 = vadd.f32 %v770, %v776
      %vm784 = vcmask 1047680
      %785 = vst.msk [vmem:[#allocation3] sm:$0xff] %vm784, %v781
      %786 = vst [vmem:[#allocation3 + $0x8] sm:$0xff] %v782
      %787 = vst.msk [vmem:[#allocation3 + $0x10] sm:$0xff] %vm320, %v783
      %788 = vst [vmem:[#allocation4] sm:$0xff] 0.0
      %789 = vst [vmem:[#allocation4 + $0x8] sm:$0xff] 0.0
      %790 = vst [vmem:[#allocation4 + $0x10] sm:$0xff] 0.0
      %v791 = vld [vmem:[#allocation4] sm:$0xff]
      %v792 = vadd.f32 %v791, %v282
      %793 = vst.msk [vmem:[#allocation4] sm:$0xff] %vm320, %v792
      %v794 = vld [vmem:[#allocation4] sm:$0xff]
      %796 = vrot.lane.b32.xlu0 %v282, 1
      %v797 = vpop.permute.xlu0 %796
      %v799 = vadd.f32 %v794, %v797
      %800 = vst.msk [vmem:[#allocation4] sm:$0xff] %vm328, %v799
      %v801 = vld [vmem:[#allocation4] sm:$0xff]
      %802 = vrot.lane.b32.xlu0 %v282, 2
      %v803 = vpop.permute.xlu0 %802
      %v805 = vadd.f32 %v801, %v803
      %806 = vst.msk [vmem:[#allocation4] sm:$0xff] %vm335, %v805
      %v807 = vld [vmem:[#allocation4] sm:$0xff]
      %808 = vrot.lane.b32.xlu0 %v282, 3
      %v809 = vpop.permute.xlu0 %808
      %v811 = vadd.f32 %v807, %v809
      %812 = vst.msk [vmem:[#allocation4] sm:$0xff] %vm342, %v811
      %v813 = vld [vmem:[#allocation4] sm:$0xff]
      %814 = vrot.lane.b32.xlu0 %v282, 4
      %v815 = vpop.permute.xlu0 %814
      %v817 = vadd.f32 %v813, %v815
      %818 = vst.msk [vmem:[#allocation4] sm:$0xff] %vm349, %v817
      %v819 = vld [vmem:[#allocation4] sm:$0xff]
      %820 = vrot.lane.b32.xlu0 %v282, 5
      %v821 = vpop.permute.xlu0 %820
      %v823 = vadd.f32 %v819, %v821
      %824 = vst.msk [vmem:[#allocation4] sm:$0xff] %vm356, %v823
      %v825 = vld [vmem:[#allocation4] sm:$0xff]
      %826 = vrot.lane.b32.xlu0 %v282, 6
      %v827 = vpop.permute.xlu0 %826
      %v829 = vadd.f32 %v825, %v827
      %830 = vst.msk [vmem:[#allocation4] sm:$0xff] %vm363, %v829
      %v831 = vld [vmem:[#allocation4] sm:$0xff]
      %v832 = vld [vmem:[#allocation4 + $0x8] sm:$0xff]
      %833 = vrot.lane.b32.xlu0 %v282, 7
      %v834 = vpop.permute.xlu0 %833
      %v836 = vadd.f32 %v831, %v834
      %v837 = vadd.f32 %v832, %v834
      %838 = vst.msk [vmem:[#allocation4] sm:$0xff] %vm372, %v836
      %839 = vst.msk [vmem:[#allocation4 + $0x8] sm:$0xff] %vm374, %v837
      %v840 = vld [vmem:[#allocation4 + $0x8] sm:$0xff]
      %842 = vrot.lane.b32.xlu0 %v284, 8
      %v843 = vpop.permute.xlu0 %842
      %v845 = vadd.f32 %v840, %v843
      %846 = vst.msk [vmem:[#allocation4 + $0x8] sm:$0xff] %vm382, %v845
      %v847 = vld [vmem:[#allocation4 + $0x8] sm:$0xff]
      %848 = vrot.lane.b32.xlu0 %v284, 9
      %v849 = vpop.permute.xlu0 %848
      %v851 = vadd.f32 %v847, %v849
      %852 = vst.msk [vmem:[#allocation4 + $0x8] sm:$0xff] %vm389, %v851
      %v853 = vld [vmem:[#allocation4 + $0x8] sm:$0xff]
      %854 = vrot.lane.b32.xlu0 %v284, 10
      %v855 = vpop.permute.xlu0 %854
      %v857 = vadd.f32 %v853, %v855
      %858 = vst.msk [vmem:[#allocation4 + $0x8] sm:$0xff] %vm396, %v857
      %v859 = vld [vmem:[#allocation4 + $0x8] sm:$0xff]
      %860 = vrot.lane.b32.xlu0 %v284, 11
      %v861 = vpop.permute.xlu0 %860
      %v863 = vadd.f32 %v859, %v861
      %864 = vst.msk [vmem:[#allocation4 + $0x8] sm:$0xff] %vm403, %v863
      %v865 = vld [vmem:[#allocation4 + $0x8] sm:$0xff]
      %866 = vrot.lane.b32.xlu0 %v284, 12
      %v867 = vpop.permute.xlu0 %866
      %v869 = vadd.f32 %v865, %v867
      %870 = vst.msk [vmem:[#allocation4 + $0x8] sm:$0xff] %vm410, %v869
      %v871 = vld [vmem:[#allocation4 + $0x8] sm:$0xff]
      %872 = vrot.lane.b32.xlu0 %v284, 13
      %v873 = vpop.permute.xlu0 %872
      %v875 = vadd.f32 %v871, %v873
      %876 = vst.msk [vmem:[#allocation4 + $0x8] sm:$0xff] %vm417, %v875
      %v877 = vld [vmem:[#allocation4 + $0x8] sm:$0xff]
      %878 = vrot.lane.b32.xlu0 %v284, 14
      %v879 = vpop.permute.xlu0 %878
      %v881 = vadd.f32 %v877, %v879
      %882 = vst.msk [vmem:[#allocation4 + $0x8] sm:$0xff] %vm424, %v881
      %v883 = vld [vmem:[#allocation4 + $0x8] sm:$0xff]
      %v884 = vld [vmem:[#allocation4 + $0x10] sm:$0xff]
      %885 = vrot.lane.b32.xlu0 %v284, 15
      %v886 = vpop.permute.xlu0 %885
      %v888 = vadd.f32 %v883, %v886
      %v889 = vadd.f32 %v884, %v886
      %890 = vst.msk [vmem:[#allocation4 + $0x8] sm:$0xff] %vm433, %v888
      %891 = vst.msk [vmem:[#allocation4 + $0x10] sm:$0xff] %vm435, %v889
      %v892 = vld [vmem:[#allocation4] sm:$0xff]
      %894 = vrot.lane.b32.xlu0 %v292, 1
      %v895 = vpop.permute.xlu0 %894
      %v897 = vadd.f32 %v892, %v895
      %898 = vst.msk [vmem:[#allocation4] sm:$0xff] %vm443, %v897
      %v899 = vld [vmem:[#allocation4] sm:$0xff]
      %900 = vrot.lane.b32.xlu0 %v292, 2
      %v901 = vpop.permute.xlu0 %900
      %v903 = vadd.f32 %v899, %v901
      %904 = vst.msk [vmem:[#allocation4] sm:$0xff] %vm450, %v903
      %v905 = vld [vmem:[#allocation4] sm:$0xff]
      %906 = vrot.lane.b32.xlu0 %v292, 3
      %v907 = vpop.permute.xlu0 %906
      %v909 = vadd.f32 %v905, %v907
      %910 = vst.msk [vmem:[#allocation4] sm:$0xff] %vm457, %v909
      %v911 = vld [vmem:[#allocation4] sm:$0xff]
      %912 = vrot.lane.b32.xlu0 %v292, 4
      %v913 = vpop.permute.xlu0 %912
      %v915 = vadd.f32 %v911, %v913
      %916 = vst.msk [vmem:[#allocation4] sm:$0xff] %vm464, %v915
      %v917 = vld [vmem:[#allocation4] sm:$0xff]
      %918 = vrot.lane.b32.xlu0 %v292, 5
      %v919 = vpop.permute.xlu0 %918
      %v921 = vadd.f32 %v917, %v919
      %922 = vst.msk [vmem:[#allocation4] sm:$0xff] %vm471, %v921
      %v923 = vld [vmem:[#allocation4] sm:$0xff]
      %924 = vrot.lane.b32.xlu0 %v292, 6
      %v925 = vpop.permute.xlu0 %924
      %v927 = vadd.f32 %v923, %v925
      %928 = vst.msk [vmem:[#allocation4] sm:$0xff] %vm478, %v927
      %v929 = vld [vmem:[#allocation4] sm:$0xff]
      %930 = vrot.lane.b32.xlu0 %v292, 7
      %v931 = vpop.permute.xlu0 %930
      %v933 = vadd.f32 %v929, %v931
      %934 = vst.msk [vmem:[#allocation4] sm:$0xff] %vm485, %v933
      %v935 = vld [vmem:[#allocation4] sm:$0xff]
      %v936 = vld [vmem:[#allocation4 + $0x8] sm:$0xff]
      %937 = vrot.lane.b32.xlu0 %v292, 8
      %v938 = vpop.permute.xlu0 %937
      %v940 = vadd.f32 %v935, %v938
      %v941 = vadd.f32 %v936, %v938
      %942 = vst.msk [vmem:[#allocation4] sm:$0xff] %vm494, %v940
      %943 = vst.msk [vmem:[#allocation4 + $0x8] sm:$0xff] %vm210, %v941
      %v944 = vld [vmem:[#allocation4 + $0x8] sm:$0xff]
      %946 = vrot.lane.b32.xlu0 %v294, 9
      %v947 = vpop.permute.xlu0 %946
      %v949 = vadd.f32 %v944, %v947
      %950 = vst.msk [vmem:[#allocation4 + $0x8] sm:$0xff] %vm503, %v949
      %v951 = vld [vmem:[#allocation4 + $0x8] sm:$0xff]
      %952 = vrot.lane.b32.xlu0 %v294, 10
      %v953 = vpop.permute.xlu0 %952
      %v955 = vadd.f32 %v951, %v953
      %956 = vst.msk [vmem:[#allocation4 + $0x8] sm:$0xff] %vm510, %v955
      %v957 = vld [vmem:[#allocation4 + $0x8] sm:$0xff]
      %958 = vrot.lane.b32.xlu0 %v294, 11
      %v959 = vpop.permute.xlu0 %958
      %v961 = vadd.f32 %v957, %v959
      %962 = vst.msk [vmem:[#allocation4 + $0x8] sm:$0xff] %vm517, %v961
      %v963 = vld [vmem:[#allocation4 + $0x8] sm:$0xff]
      %964 = vrot.lane.b32.xlu0 %v294, 12
      %v965 = vpop.permute.xlu0 %964
      %v967 = vadd.f32 %v963, %v965
      %968 = vst.msk [vmem:[#allocation4 + $0x8] sm:$0xff] %vm524, %v967
      %v969 = vld [vmem:[#allocation4 + $0x8] sm:$0xff]
      %970 = vrot.lane.b32.xlu0 %v294, 13
      %v971 = vpop.permute.xlu0 %970
      %v973 = vadd.f32 %v969, %v971
      %974 = vst.msk [vmem:[#allocation4 + $0x8] sm:$0xff] %vm531, %v973
      %v975 = vld [vmem:[#allocation4 + $0x8] sm:$0xff]
      %976 = vrot.lane.b32.xlu0 %v294, 14
      %v977 = vpop.permute.xlu0 %976
      %v979 = vadd.f32 %v975, %v977
      %980 = vst.msk [vmem:[#allocation4 + $0x8] sm:$0xff] %vm538, %v979
      %v981 = vld [vmem:[#allocation4 + $0x8] sm:$0xff]
      %982 = vrot.lane.b32.xlu0 %v294, 15
      %v983 = vpop.permute.xlu0 %982
      %v985 = vadd.f32 %v981, %v983
      %986 = vst.msk [vmem:[#allocation4 + $0x8] sm:$0xff] %vm545, %v985
      %v987 = vld [vmem:[#allocation4 + $0x10] sm:$0xff]
      %988 = vrot.lane.b32.xlu0 %v294, 16
      %v989 = vpop.permute.xlu0 %988
      %v991 = vadd.f32 %v987, %v989
      %992 = vst.msk [vmem:[#allocation4 + $0x10] sm:$0xff] %vm320, %v991
      %993 = vst [vmem:[#allocation5] sm:$0xff] 0.0
      %994 = vst [vmem:[#allocation5 + $0x8] sm:$0xff] 0.0
      %995 = vst [vmem:[#allocation5 + $0x10] sm:$0xff] 0.0
      %v996 = vld [vmem:[#allocation5] sm:$0xff]
      %v997 = vld [vmem:[#allocation5 + $0x8] sm:$0xff]
      %v998 = vadd.f32 %v996, %v288
      %v999 = vadd.f32 %v997, %v290
      %1000 = vst [vmem:[#allocation5] sm:$0xff] %v998
      %1001 = vst [vmem:[#allocation5 + $0x8] sm:$0xff] %v999
      %v1002 = vld [vmem:[#allocation2] sm:$0xff]
      %v1003 = vld [vmem:[#allocation2 + $0x8] sm:$0xff]
      %v1004 = vld [vmem:[#allocation2 + $0x10] sm:$0xff]
      %1006 = vset.pattern.permute.xlu0 0
      %1007 = vperm.xlu0 %1006, %v314
      %v1008 = vpop.permute.xlu0 %1007
      %v1010 = vadd.f32 %v1002, %v1008
      %v1011 = vadd.f32 %v1003, %v1008
      %v1012 = vadd.f32 %v1004, %v1008
      %v1013 = vadd.f32 %v1010, %v1011
      %vm1014 = vcmask 269312
      %v1015 = vsel %vm1014, %v1012, 0.0
      %v1016 = vadd.f32 %v1013, %v1015
      %1017 = vadd.xlane.f32.xlu0 %v1016
      %v1018 = vpop.xlane.xlu0 %1017
      %v1019 = vadd.f32 %v1018, 0.0
      %v1020 = vmul.f32 %v1010, %v1010
      %v1021 = vmul.f32 %v1011, %v1011
      %v1022 = vmul.f32 %v1012, %v1012
      %v1023 = vadd.f32 %v1020, %v1021
      %v1024 = vsel %vm1014, %v1022, 0.0
      %v1025 = vadd.f32 %v1023, %v1024
      %1026 = vadd.xlane.f32.xlu0 %v1025
      %v1027 = vpop.xlane.xlu0 %1026
      %v1028 = vadd.f32 %v1027, 0.0
      %v1029 = vld [vmem:[#allocation3] sm:$0xff]
      %v1030 = vld [vmem:[#allocation3 + $0x8] sm:$0xff]
      %v1031 = vld [vmem:[#allocation3 + $0x10] sm:$0xff]
      %v1032 = vadd.f32 %v1029, %v1008
      %v1033 = vadd.f32 %v1030, %v1008
      %v1034 = vadd.f32 %v1031, %v1008
      %v1035 = vadd.f32 %v1032, %v1033
      %v1036 = vsel %vm320, %v1034, 0.0
      %v1037 = vadd.f32 %v1035, %v1036
      %1038 = vadd.xlane.f32.xlu0 %v1037
      %v1039 = vpop.xlane.xlu0 %1038
      %v1040 = vadd.f32 %v1019, %v1039
      %v1041 = vmul.f32 %v1032, %v1032
      %v1042 = vmul.f32 %v1033, %v1033
      %v1043 = vmul.f32 %v1034, %v1034
      %v1044 = vadd.f32 %v1041, %v1042
      %v1045 = vsel %vm320, %v1043, 0.0
      %v1046 = vadd.f32 %v1044, %v1045
      %1047 = vadd.xlane.f32.xlu0 %v1046
      %v1048 = vpop.xlane.xlu0 %1047
      %v1049 = vadd.f32 %v1028, %v1048
      %v1050 = vld [vmem:[#allocation4] sm:$0xff]
      %v1051 = vld [vmem:[#allocation4 + $0x8] sm:$0xff]
      %v1052 = vld [vmem:[#allocation4 + $0x10] sm:$0xff]
      %v1053 = vadd.f32 %v1050, %v1008
      %v1054 = vadd.f32 %v1051, %v1008
      %v1055 = vadd.f32 %v1052, %v1008
      %v1056 = vadd.f32 %v1053, %v1054
      %v1057 = vsel %vm320, %v1055, 0.0
      %v1058 = vadd.f32 %v1056, %v1057
      %1059 = vadd.xlane.f32.xlu0 %v1058
      %v1060 = vpop.xlane.xlu0 %1059
      %v1061 = vadd.f32 %v1040, %v1060
      %v1062 = vmul.f32 %v1053, %v1053
      %v1063 = vmul.f32 %v1054, %v1054
      %v1064 = vmul.f32 %v1055, %v1055
      %v1065 = vadd.f32 %v1062, %v1063
      %v1066 = vsel %vm320, %v1064, 0.0
      %v1067 = vadd.f32 %v1065, %v1066
      %1068 = vadd.xlane.f32.xlu0 %v1067
      %v1069 = vpop.xlane.xlu0 %1068
      %v1070 = vadd.f32 %v1049, %v1069
      %v1071 = vld [vmem:[#allocation5] sm:$0xff]
      %v1072 = vld [vmem:[#allocation5 + $0x8] sm:$0xff]
      %v1073 = vld [vmem:[#allocation5 + $0x10] sm:$0xff]
      %v1074 = vadd.f32 %v1071, %v1008
      %v1075 = vadd.f32 %v1072, %v1008
      %v1076 = vadd.f32 %v1073, %v1008
      %v1077 = vadd.f32 %v1074, %v1075
      %1078 = vadd.xlane.f32.xlu0 %v1077
      %v1079 = vpop.xlane.xlu0 %1078
      %v1080 = vadd.f32 %v1061, %v1079
      %v1081 = vmul.f32 %v1074, %v1074
      %v1082 = vmul.f32 %v1075, %v1075
      %v1083 = vadd.f32 %v1081, %v1082
      %1084 = vadd.xlane.f32.xlu0 %v1083
      %v1085 = vpop.xlane.xlu0 %1084
      %v1086 = vadd.f32 %v1070, %v1085
      %v1087 = vmul.f32 %v1080, 0.00091827364
      %v1088 = vmul.f32 %v1086, 0.00091827364
      %v1089 = vmul.f32 %v1087, %v1087
      %v1090 = vsub.f32 %v1088, %v1089
      %v1091 = vmax.f32 %v1090, 0.0
      %v1092 = vadd.f32 %v1091, 1e-05
      %v1093 = vrsqrt.pop %v1092
      %v1094 = vsub.f32 %v1010, %v1087
      %v1095 = vsub.f32 %v1011, %v1087
      %v1096 = vsub.f32 %v1012, %v1087
      %v1097 = vmul.f32 %v1094, %v1093
      %v1098 = vmul.f32 %v1095, %v1093
      %v1099 = vmul.f32 %v1096, %v1093
      %v1100 = vmax.f32 %v1097, 0.0
      %v1101 = vmax.f32 %v1098, 0.0
      %v1102 = vmax.f32 %v1099, 0.0
      %1103 = vst [vmem:[%s170] sm:$0xff] %v1100
      %1104 = vst [vmem:[%s170 + $0x8] sm:$0xff] %v1101
      %1105 = vst [vmem:[%s170 + $0x10] sm:$0xff] %v1102
      %v1106 = vsub.f32 %v1032, %v1087
      %v1107 = vsub.f32 %v1033, %v1087
      %v1108 = vsub.f32 %v1034, %v1087
      %v1109 = vmul.f32 %v1106, %v1093
      %v1110 = vmul.f32 %v1107, %v1093
      %v1111 = vmul.f32 %v1108, %v1093
      %v1112 = vmax.f32 %v1109, 0.0
      %v1113 = vmax.f32 %v1110, 0.0
      %v1114 = vmax.f32 %v1111, 0.0
      %s1115 = scalar_lea.vmem %s170, 24
      %1116 = vst [vmem:[%s1115] sm:$0xff] %v1112
      %1117 = vst [vmem:[%s1115 + $0x8] sm:$0xff] %v1113
      %1118 = vst [vmem:[%s1115 + $0x10] sm:$0xff] %v1114
      %v1119 = vsub.f32 %v1053, %v1087
      %v1120 = vsub.f32 %v1054, %v1087
      %v1121 = vsub.f32 %v1055, %v1087
      %v1122 = vmul.f32 %v1119, %v1093
      %v1123 = vmul.f32 %v1120, %v1093
      %v1124 = vmul.f32 %v1121, %v1093
      %v1125 = vmax.f32 %v1122, 0.0
      %v1126 = vmax.f32 %v1123, 0.0
      %v1127 = vmax.f32 %v1124, 0.0
      %s1128 = scalar_lea.vmem %s170, 48
      %1129 = vst [vmem:[%s1128] sm:$0xff] %v1125
      %1130 = vst [vmem:[%s1128 + $0x8] sm:$0xff] %v1126
      %1131 = vst [vmem:[%s1128 + $0x10] sm:$0xff] %v1127
      %v1132 = vsub.f32 %v1074, %v1087
      %v1133 = vsub.f32 %v1075, %v1087
      %v1134 = vsub.f32 %v1076, %v1087
      %v1135 = vmul.f32 %v1132, %v1093
      %v1136 = vmul.f32 %v1133, %v1093
      %v1137 = vmul.f32 %v1134, %v1093
      %v1138 = vmax.f32 %v1135, 0.0
      %v1139 = vmax.f32 %v1136, 0.0
      %v1140 = vmax.f32 %v1137, 0.0
      %s1141 = scalar_lea.vmem %s170, 72
      %1142 = vst [vmem:[%s1141] sm:$0xff] %v1138
      %1143 = vst [vmem:[%s1141 + $0x8] sm:$0xff] %v1139
      %1144 = vst [vmem:[%s1141 + $0x10] sm:$0xff] %v1140
      %p1145 = scmp.lt.s32.totalorder %s14, 1
      %s1146 = scalar_select %p1145, %s14, 1
      %s1147 = smul.addr %s1146, 12
      %s1148 = smul.addr %s1147, 8
      %s1149 = scalar_lea.vmem %s3, %s1148
      // Predicated region
      $region33: #{conv_transpose_layer.1} parent=31 // pred_check
        %p1150 = pneg %p100
      $region34: #{conv_transpose_layer.1} parent=31 // pred_check_branch
        %1152 = sbr.rel (%p1150) target = $region36
      $region35: #{conv_transpose_layer.1} parent=31 // pred_region
        _
      $region36: #{conv_transpose_layer.1} parent=31 // pred_fallthru
        _
    $region32: #{conv_transpose_layer.1} parent=5 // pred_fallthru
      _
    %p1153 = scmp.le.s32.totalorder 2, %s9
    // Predicated region
    $region37: #{conv_transpose_layer.1} parent=5 // pred_check
      %p1154 = pneg %p1153
    $region38: #{conv_transpose_layer.1} parent=5 // pred_check_branch
      %1156 = sbr.rel (%p1154) target = $region40
    $region39: #{conv_transpose_layer.1} parent=5 // pred_region
      %s1157 = ssub.s32 %s9, 2
      // Predicated region
      $region41: #{conv_transpose_layer.1} parent=39 // pred_check
        %p1158 = pneg %p106
      $region42: #{conv_transpose_layer.1} parent=39 // pred_check_branch
        %1160 = sbr.rel (%p1158) target = $region44
      $region43: #{conv_transpose_layer.1} parent=39 // pred_region
        %p1161 = scmp.lt.s32.totalorder %s15, 1
        %s1162 = scalar_select %p1161, %s15, 1
        %s1163 = smul.addr %s1162, 12
        %s1164 = smul.addr %s1163, 8
        %s1165 = scalar_lea.vmem %s3, %s1164
      $region44: #{conv_transpose_layer.1} parent=39 // pred_fallthru
        _
    $region40: #{conv_transpose_layer.1} parent=5 // pred_fallthru
      _
  $region6: #{conv_transpose_layer.1} parent=0 // loop_footer
    %s13 = sadd.s32 1, %s9
  $region7: #{conv_transpose_layer.1} parent=0 // loop_footer_branch
    %8 = sbr.rel target = $region3
  $region8: #{conv_transpose_layer.1} parent=0 // loop_exit
    _

// kernel: squeeze.7
$region0: #{squeeze.7}
  %s0 = inlined_call_operand.vmem [shape: f32[2,1,8,256], index: 0, kind: input, shape index: {}]
  %s1 = inlined_call_operand.vmem [shape: f32[2,8,16,16], index: 1, kind: output, shape index: {}]
  %v2 = vld [vmem:[%s0] sm:$0xff]
  %vm3 = vcmask 130048
  %4 = vst.msk [vmem:[%s1] ss:$16 sm:$0x3] %vm3, %v2
  %5 = vst.msk [vmem:[%s1] ss:$16 sm:$0xc] %vm3, %v2
  %6 = vst.msk [vmem:[%s1] ss:$16 sm:$0x30] %vm3, %v2
  %7 = vst.msk [vmem:[%s1] ss:$16 sm:$0xc0] %vm3, %v2
  %s8 = scalar_lea.vmem %s0, 8
  %v9 = vld [vmem:[%s8] sm:$0xff]
  %vm10 = vcmask 130048
  %s11 = scalar_lea.vmem %s1, 8
  %12 = vst.msk [vmem:[%s11] ss:$16 sm:$0x3] %vm10, %v9
  %s13 = scalar_lea.vmem %s1, 8
  %14 = vst.msk [vmem:[%s13] ss:$16 sm:$0xc] %vm10, %v9
  %s15 = scalar_lea.vmem %s1, 8
  %16 = vst.msk [vmem:[%s15] ss:$16 sm:$0x30] %vm10, %v9
  %s17 = scalar_lea.vmem %s1, 8
  %18 = vst.msk [vmem:[%s17] ss:$16 sm:$0xc0] %vm10, %v9
  %s19 = scalar_lea.vmem %s0, 16
  %v20 = vld [vmem:[%s19] sm:$0xff]
  %vm21 = vcmask 130048
  %s22 = scalar_lea.vmem %s1, 128
  %23 = vst.msk [vmem:[%s22] ss:$16 sm:$0x3] %vm21, %v20
  %s24 = scalar_lea.vmem %s1, 128
  %25 = vst.msk [vmem:[%s24] ss:$16 sm:$0xc] %vm21, %v20
  %s26 = scalar_lea.vmem %s1, 128
  %27 = vst.msk [vmem:[%s26] ss:$16 sm:$0x30] %vm21, %v20
  %s28 = scalar_lea.vmem %s1, 128
  %29 = vst.msk [vmem:[%s28] ss:$16 sm:$0xc0] %vm21, %v20
  %s30 = scalar_lea.vmem %s0, 24
  %v31 = vld [vmem:[%s30] sm:$0xff]
  %vm32 = vcmask 130048
  %s33 = scalar_lea.vmem %s1, 136
  %34 = vst.msk [vmem:[%s33] ss:$16 sm:$0x3] %vm32, %v31
  %s35 = scalar_lea.vmem %s1, 136
  %36 = vst.msk [vmem:[%s35] ss:$16 sm:$0xc] %vm32, %v31
  %s37 = scalar_lea.vmem %s1, 136
  %38 = vst.msk [vmem:[%s37] ss:$16 sm:$0x30] %vm32, %v31
  %s39 = scalar_lea.vmem %s1, 136
  %40 = vst.msk [vmem:[%s39] ss:$16 sm:$0xc0] %vm32, %v31
  %v41 = vld.sshfl [vmem:[%s0] sm:$0xff pattern:$0xb3a29180]
  %42 = vrot.lane.b32.xlu0 %v41, 112
  %v43 = vpop.permute.xlu0 %42
  %vm44 = vcmask 130048
  %s45 = scalar_lea.vmem %s1, 1
  %46 = vst.msk [vmem:[%s45] ss:$8 sm:$0xf] %vm44, %v43
  %s47 = scalar_lea.vmem %s1, 1
  %48 = vst.msk [vmem:[%s47] ss:$8 sm:$0xf0] %vm44, %v43
  %s49 = scalar_lea.vmem %s0, 4
  %v50 = vld.sshfl [vmem:[%s49] sm:$0xff pattern:$0xb3a29180]
  %51 = vrot.lane.b32.xlu0 %v50, 112
  %v52 = vpop.permute.xlu0 %51
  %vm53 = vcmask 130048
  %s54 = scalar_lea.vmem %s1, 65
  %55 = vst.msk [vmem:[%s54] ss:$8 sm:$0xf] %vm53, %v52
  %s56 = scalar_lea.vmem %s1, 65
  %57 = vst.msk [vmem:[%s56] ss:$8 sm:$0xf0] %vm53, %v52
  %s58 = scalar_lea.vmem %s0, 16
  %v59 = vld.sshfl [vmem:[%s58] sm:$0xff pattern:$0xb3a29180]
  %60 = vrot.lane.b32.xlu0 %v59, 112
  %v61 = vpop.permute.xlu0 %60
  %vm62 = vcmask 130048
  %s63 = scalar_lea.vmem %s1, 129
  %64 = vst.msk [vmem:[%s63] ss:$8 sm:$0xf] %vm62, %v61
  %s65 = scalar_lea.vmem %s1, 129
  %66 = vst.msk [vmem:[%s65] ss:$8 sm:$0xf0] %vm62, %v61
  %s67 = scalar_lea.vmem %s0, 20
  %v68 = vld.sshfl [vmem:[%s67] sm:$0xff pattern:$0xb3a29180]
  %69 = vrot.lane.b32.xlu0 %v68, 112
  %v70 = vpop.permute.xlu0 %69
  %vm71 = vcmask 130048
  %s72 = scalar_lea.vmem %s1, 193
  %73 = vst.msk [vmem:[%s72] ss:$8 sm:$0xf] %vm71, %v70
  %s74 = scalar_lea.vmem %s1, 193
  %75 = vst.msk [vmem:[%s74] ss:$8 sm:$0xf0] %vm71, %v70
  %v76 = vld.sshfl [vmem:[%s0] sm:$0xff pattern:$0xb3a29180]
  %77 = vrot.lane.b32.xlu0 %v76, 96
  %v78 = vpop.permute.xlu0 %77
  %vm79 = vcmask 130048
  %s80 = scalar_lea.vmem %s1, 2
  %81 = vst.msk [vmem:[%s80] ss:$8 sm:$0xf] %vm79, %v78
  %s82 = scalar_lea.vmem %s1, 2
  %83 = vst.msk [vmem:[%s82] ss:$8 sm:$0xf0] %vm79, %v78
  %s84 = scalar_lea.vmem %s0, 4
  %v85 = vld.sshfl [vmem:[%s84] sm:$0xff pattern:$0xb3a29180]
  %86 = vrot.lane.b32.xlu0 %v85, 96
  %v87 = vpop.permute.xlu0 %86
  %vm88 = vcmask 130048
  %s89 = scalar_lea.vmem %s1, 66
  %90 = vst.msk [vmem:[%s89] ss:$8 sm:$0xf] %vm88, %v87
  %s91 = scalar_lea.vmem %s1, 66
  %92 = vst.msk [vmem:[%s91] ss:$8 sm:$0xf0] %vm88, %v87
  %s93 = scalar_lea.vmem %s0, 16
  %v94 = vld.sshfl [vmem:[%s93] sm:$0xff pattern:$0xb3a29180]
  %95 = vrot.lane.b32.xlu0 %v94, 96
  %v96 = vpop.permute.xlu0 %95
  %vm97 = vcmask 130048
  %s98 = scalar_lea.vmem %s1, 130
  %99 = vst.msk [vmem:[%s98] ss:$8 sm:$0xf] %vm97, %v96
  %s100 = scalar_lea.vmem %s1, 130
  %101 = vst.msk [vmem:[%s100] ss:$8 sm:$0xf0] %vm97, %v96
  %s102 = scalar_lea.vmem %s0, 20
  %v103 = vld.sshfl [vmem:[%s102] sm:$0xff pattern:$0xb3a29180]
  %104 = vrot.lane.b32.xlu0 %v103, 96
  %v105 = vpop.permute.xlu0 %104
  %vm106 = vcmask 130048
  %s107 = scalar_lea.vmem %s1, 194
  %108 = vst.msk [vmem:[%s107] ss:$8 sm:$0xf] %vm106, %v105
  %s109 = scalar_lea.vmem %s1, 194
  %110 = vst.msk [vmem:[%s109] ss:$8 sm:$0xf0] %vm106, %v105
  %v111 = vld.sshfl [vmem:[%s0] sm:$0xff pattern:$0xb3a29180]
  %112 = vrot.lane.b32.xlu0 %v111, 80
  %v113 = vpop.permute.xlu0 %112
  %vm114 = vcmask 130048
  %s115 = scalar_lea.vmem %s1, 3
  %116 = vst.msk [vmem:[%s115] ss:$8 sm:$0xf] %vm114, %v113
  %s117 = scalar_lea.vmem %s1, 3
  %118 = vst.msk [vmem:[%s117] ss:$8 sm:$0xf0] %vm114, %v113
  %s119 = scalar_lea.vmem %s0, 4
  %v120 = vld.sshfl [vmem:[%s119] sm:$0xff pattern:$0xb3a29180]
  %121 = vrot.lane.b32.xlu0 %v120, 80
  %v122 = vpop.permute.xlu0 %121
  %vm123 = vcmask 130048
  %s124 = scalar_lea.vmem %s1, 67
  %125 = vst.msk [vmem:[%s124] ss:$8 sm:$0xf] %vm123, %v122
  %s126 = scalar_lea.vmem %s1, 67
  %127 = vst.msk [vmem:[%s126] ss:$8 sm:$0xf0] %vm123, %v122
  %s128 = scalar_lea.vmem %s0, 16
  %v129 = vld.sshfl [vmem:[%s128] sm:$0xff pattern:$0xb3a29180]
  %130 = vrot.lane.b32.xlu0 %v129, 80
  %v131 = vpop.permute.xlu0 %130
  %vm132 = vcmask 130048
  %s133 = scalar_lea.vmem %s1, 131
  %134 = vst.msk [vmem:[%s133] ss:$8 sm:$0xf] %vm132, %v131
  %s135 = scalar_lea.vmem %s1, 131
  %136 = vst.msk [vmem:[%s135] ss:$8 sm:$0xf0] %vm132, %v131
  %s137 = scalar_lea.vmem %s0, 20
  %v138 = vld.sshfl [vmem:[%s137] sm:$0xff pattern:$0xb3a29180]
  %139 = vrot.lane.b32.xlu0 %v138, 80
  %v140 = vpop.permute.xlu0 %139
  %vm141 = vcmask 130048
  %s142 = scalar_lea.vmem %s1, 195
  %143 = vst.msk [vmem:[%s142] ss:$8 sm:$0xf] %vm141, %v140
  %s144 = scalar_lea.vmem %s1, 195
  %145 = vst.msk [vmem:[%s144] ss:$8 sm:$0xf0] %vm141, %v140
  %v146 = vld.sshfl [vmem:[%s0] sm:$0xff pattern:$0xb3a29180]
  %147 = vrot.lane.b32.xlu0 %v146, 64
  %v148 = vpop.permute.xlu0 %147
  %vm149 = vcmask 130048
  %s150 = scalar_lea.vmem %s1, 4
  %151 = vst.msk [vmem:[%s150] ss:$8 sm:$0xf] %vm149, %v148
  %s152 = scalar_lea.vmem %s1, 4
  %153 = vst.msk [vmem:[%s152] ss:$8 sm:$0xf0] %vm149, %v148
  %s154 = scalar_lea.vmem %s0, 4
  %v155 = vld.sshfl [vmem:[%s154] sm:$0xff pattern:$0xb3a29180]
  %156 = vrot.lane.b32.xlu0 %v155, 64
  %v157 = vpop.permute.xlu0 %156
  %vm158 = vcmask 130048
  %s159 = scalar_lea.vmem %s1, 68
  %160 = vst.msk [vmem:[%s159] ss:$8 sm:$0xf] %vm158, %v157
  %s161 = scalar_lea.vmem %s1, 68
  %162 = vst.msk [vmem:[%s161] ss:$8 sm:$0xf0] %vm158, %v157
  %s163 = scalar_lea.vmem %s0, 16
  %v164 = vld.sshfl [vmem:[%s163] sm:$0xff pattern:$0xb3a29180]
  %165 = vrot.lane.b32.xlu0 %v164, 64
  %v166 = vpop.permute.xlu0 %165
  %vm167 = vcmask 130048
  %s168 = scalar_lea.vmem %s1, 132
  %169 = vst.msk [vmem:[%s168] ss:$8 sm:$0xf] %vm167, %v166
  %s170 = scalar_lea.vmem %s1, 132
  %171 = vst.msk [vmem:[%s170] ss:$8 sm:$0xf0] %vm167, %v166
  %s172 = scalar_lea.vmem %s0, 20
  %v173 = vld.sshfl [vmem:[%s172] sm:$0xff pattern:$0xb3a29180]
  %174 = vrot.lane.b32.xlu0 %v173, 64
  %v175 = vpop.permute.xlu0 %174
  %vm176 = vcmask 130048
  %s177 = scalar_lea.vmem %s1, 196
  %178 = vst.msk [vmem:[%s177] ss:$8 sm:$0xf] %vm176, %v175
  %s179 = scalar_lea.vmem %s1, 196
  %180 = vst.msk [vmem:[%s179] ss:$8 sm:$0xf0] %vm176, %v175
  %v181 = vld.sshfl [vmem:[%s0] sm:$0xff pattern:$0xb3a29180]
  %182 = vrot.lane.b32.xlu0 %v181, 48
  %v183 = vpop.permute.xlu0 %182
  %vm184 = vcmask 130048
  %s185 = scalar_lea.vmem %s1, 5
  %186 = vst.msk [vmem:[%s185] ss:$8 sm:$0xf] %vm184, %v183
  %s187 = scalar_lea.vmem %s1, 5
  %188 = vst.msk [vmem:[%s187] ss:$8 sm:$0xf0] %vm184, %v183
  %s189 = scalar_lea.vmem %s0, 4
  %v190 = vld.sshfl [vmem:[%s189] sm:$0xff pattern:$0xb3a29180]
  %191 = vrot.lane.b32.xlu0 %v190, 48
  %v192 = vpop.permute.xlu0 %191
  %vm193 = vcmask 130048
  %s194 = scalar_lea.vmem %s1, 69
  %195 = vst.msk [vmem:[%s194] ss:$8 sm:$0xf] %vm193, %v192
  %s196 = scalar_lea.vmem %s1, 69
  %197 = vst.msk [vmem:[%s196] ss:$8 sm:$0xf0] %vm193, %v192
  %s198 = scalar_lea.vmem %s0, 16
  %v199 = vld.sshfl [vmem:[%s198] sm:$0xff pattern:$0xb3a29180]
  %200 = vrot.lane.b32.xlu0 %v199, 48
  %v201 = vpop.permute.xlu0 %200
  %vm202 = vcmask 130048
  %s203 = scalar_lea.vmem %s1, 133
  %204 = vst.msk [vmem:[%s203] ss:$8 sm:$0xf] %vm202, %v201
  %s205 = scalar_lea.vmem %s1, 133
  %206 = vst.msk [vmem:[%s205] ss:$8 sm:$0xf0] %vm202, %v201
  %s207 = scalar_lea.vmem %s0, 20
  %v208 = vld.sshfl [vmem:[%s207] sm:$0xff pattern:$0xb3a29180]
  %209 = vrot.lane.b32.xlu0 %v208, 48
  %v210 = vpop.permute.xlu0 %209
  %vm211 = vcmask 130048
  %s212 = scalar_lea.vmem %s1, 197
  %213 = vst.msk [vmem:[%s212] ss:$8 sm:$0xf] %vm211, %v210
  %s214 = scalar_lea.vmem %s1, 197
  %215 = vst.msk [vmem:[%s214] ss:$8 sm:$0xf0] %vm211, %v210
  %v216 = vld.sshfl [vmem:[%s0] sm:$0xff pattern:$0xb3a29180]
  %217 = vrot.lane.b32.xlu0 %v216, 32
  %v218 = vpop.permute.xlu0 %217
  %vm219 = vcmask 130048
  %s220 = scalar_lea.vmem %s1, 6
  %221 = vst.msk [vmem:[%s220] ss:$8 sm:$0xf] %vm219, %v218
  %s222 = scalar_lea.vmem %s1, 6
  %223 = vst.msk [vmem:[%s222] ss:$8 sm:$0xf0] %vm219, %v218
  %s224 = scalar_lea.vmem %s0, 4
  %v225 = vld.sshfl [vmem:[%s224] sm:$0xff pattern:$0xb3a29180]
  %226 = vrot.lane.b32.xlu0 %v225, 32
  %v227 = vpop.permute.xlu0 %226
  %vm228 = vcmask 130048
  %s229 = scalar_lea.vmem %s1, 70
  %230 = vst.msk [vmem:[%s229] ss:$8 sm:$0xf] %vm228, %v227
  %s231 = scalar_lea.vmem %s1, 70
  %232 = vst.msk [vmem:[%s231] ss:$8 sm:$0xf0] %vm228, %v227
  %s233 = scalar_lea.vmem %s0, 16
  %v234 = vld.sshfl [vmem:[%s233] sm:$0xff pattern:$0xb3a29180]
  %235 = vrot.lane.b32.xlu0 %v234, 32
  %v236 = vpop.permute.xlu0 %235
  %vm237 = vcmask 130048
  %s238 = scalar_lea.vmem %s1, 134
  %239 = vst.msk [vmem:[%s238] ss:$8 sm:$0xf] %vm237, %v236
  %s240 = scalar_lea.vmem %s1, 134
  %241 = vst.msk [vmem:[%s240] ss:$8 sm:$0xf0] %vm237, %v236
  %s242 = scalar_lea.vmem %s0, 20
  %v243 = vld.sshfl [vmem:[%s242] sm:$0xff pattern:$0xb3a29180]
  %244 = vrot.lane.b32.xlu0 %v243, 32
  %v245 = vpop.permute.xlu0 %244
  %vm246 = vcmask 130048
  %s247 = scalar_lea.vmem %s1, 198
  %248 = vst.msk [vmem:[%s247] ss:$8 sm:$0xf] %vm246, %v245
  %s249 = scalar_lea.vmem %s1, 198
  %250 = vst.msk [vmem:[%s249] ss:$8 sm:$0xf0] %vm246, %v245
  %v251 = vld.sshfl [vmem:[%s0] sm:$0xff pattern:$0xb3a29180]
  %252 = vrot.lane.b32.xlu0 %v251, 16
  %v253 = vpop.permute.xlu0 %252
  %vm254 = vcmask 130048
  %s255 = scalar_lea.vmem %s1, 7
  %256 = vst.msk [vmem:[%s255] ss:$8 sm:$0xf] %vm254, %v253
  %s257 = scalar_lea.vmem %s1, 7
  %258 = vst.msk [vmem:[%s257] ss:$8 sm:$0xf0] %vm254, %v253
  %s259 = scalar_lea.vmem %s0, 4
  %v260 = vld.sshfl [vmem:[%s259] sm:$0xff pattern:$0xb3a29180]
  %261 = vrot.lane.b32.xlu0 %v260, 16
  %v262 = vpop.permute.xlu0 %261
  %vm263 = vcmask 130048
  %s264 = scalar_lea.vmem %s1, 71
  %265 = vst.msk [vmem:[%s264] ss:$8 sm:$0xf] %vm263, %v262
  %s266 = scalar_lea.vmem %s1, 71
  %267 = vst.msk [vmem:[%s266] ss:$8 sm:$0xf0] %vm263, %v262
  %s268 = scalar_lea.vmem %s0, 16
  %v269 = vld.sshfl [vmem:[%s268] sm:$0xff pattern:$0xb3a29180]
  %270 = vrot.lane.b32.xlu0 %v269, 16
  %v271 = vpop.permute.xlu0 %270
  %vm272 = vcmask 130048
  %s273 = scalar_lea.vmem %s1, 135
  %274 = vst.msk [vmem:[%s273] ss:$8 sm:$0xf] %vm272, %v271
  %s275 = scalar_lea.vmem %s1, 135
  %276 = vst.msk [vmem:[%s275] ss:$8 sm:$0xf0] %vm272, %v271
  %s277 = scalar_lea.vmem %s0, 20
  %v278 = vld.sshfl [vmem:[%s277] sm:$0xff pattern:$0xb3a29180]
  %279 = vrot.lane.b32.xlu0 %v278, 16
  %v280 = vpop.permute.xlu0 %279
  %vm281 = vcmask 130048
  %s282 = scalar_lea.vmem %s1, 199
  %283 = vst.msk [vmem:[%s282] ss:$8 sm:$0xf] %vm281, %v280
  %s284 = scalar_lea.vmem %s1, 199
  %285 = vst.msk [vmem:[%s284] ss:$8 sm:$0xf0] %vm281, %v280

</llo_original>
